<compile_context>
chip_gen: v5e
topology: v5e:2x2
jax: 0.10.0
libtpu: 0.0.40
codegen_flags: <defaults>
</compile_context>

<pallas_src>
import functools

import jax
import jax.numpy as jnp
from jax.experimental import pallas as pl
from jax.experimental.pallas import tpu as pltpu

COMPUTE_DTYPE = jnp.bfloat16   # activations / matmul operands
WEIGHT_DTYPE = jnp.bfloat16    # large weight matrices


# ------------------------------- small utils -------------------------------

def _round_up(x, m):
    return ((x + m - 1) // m) * m


def _tpu_budget():
    """Generation-aware tiling targets (v7x has 64 MiB VMEM / TC, 2 cores)."""
    vmem = 128 * 1024 * 1024
    try:
        info = pltpu.get_tpu_info()
        v = getattr(info, "vmem_capacity_bytes", None)
        if v:
            vmem = int(v)
    except Exception:
        pass
    if vmem <= 96 * 1024 * 1024:    # v7x-class (64 MiB per TensorCore)
        return {"row_target": 256, "th_target": 256,
                "vmem_limit": 24 * 1024 * 1024}
    return {"row_target": 512, "th_target": 512,
            "vmem_limit": 32 * 1024 * 1024}


_BUDGET = _tpu_budget()
VMEM_LIMIT = _BUDGET["vmem_limit"]


def _compiler_params(dimension_semantics):
    return pltpu.CompilerParams(
        dimension_semantics=dimension_semantics,
        vmem_limit_bytes=VMEM_LIMIT,
    )


# ------------------------------ Pallas kernels ------------------------------

def _linear_kernel(x_ref, w_ref, b_ref, o_ref, *, relu):
    y = jnp.dot(x_ref[...], w_ref[...],
                preferred_element_type=jnp.float32) + b_ref[...]
    if relu:
        y = jnp.maximum(y, 0.0)
    o_ref[...] = y.astype(o_ref.dtype)


def pallas_linear(x, w, b2, *, tm, relu=False, out_dtype=COMPUTE_DTYPE):
    """(M, K) @ (K, N) + (1, N) -> (M, N); full-K / full-N blocks, row-tiled."""
    M, K = x.shape
    N = w.shape[1]
    tm = min(tm, _round_up(M, 8))
    Mp = _round_up(M, tm)
    if Mp != M:
        x = jnp.pad(x, ((0, Mp - M), (0, 0)))   # only the one-time patch GEMM
    out = pl.pallas_call(
        functools.partial(_linear_kernel, relu=relu),
        out_shape=jax.ShapeDtypeStruct((Mp, N), out_dtype),
        grid_spec=pltpu.PrefetchScalarGridSpec(
            num_scalar_prefetch=0,
            grid=(Mp // tm,),
            in_specs=[
                pl.BlockSpec((tm, K), lambda i: (i, 0)),
                pl.BlockSpec((K, N), lambda i: (0, 0)),
                pl.BlockSpec((1, N), lambda i: (0, 0)),
            ],
            out_specs=pl.BlockSpec((tm, N), lambda i: (i, 0)),
        ),
        compiler_params=_compiler_params(("parallel",)),
    )(x, w, b2)
    return out[:M] if Mp != M else out


def _attention_kernel(qkv_ref, o_ref, *, nH, hd):
    # qkv block: (tl, B, 3E) in (token, image-batch, feature) layout.  The
    # attended axis is the image batch (PyTorch batch_first=False semantics);
    # the 1/sqrt(hd) scale is already folded into the Q projection weights.
    qkv = qkv_ref[...]
    E = nH * hd
    outs = []
    for h in range(nH):
        q = qkv[:, :, h * hd:(h + 1) * hd]                   # (tl, B, hd) bf16
        k = qkv[:, :, E + h * hd:E + (h + 1) * hd]
        v = qkv[:, :, 2 * E + h * hd:2 * E + (h + 1) * hd]
        s = jnp.einsum("tbd,tcd->tbc", q, k,
                       preferred_element_type=jnp.float32)   # (tl, B, B)
        s = s - jnp.max(s, axis=-1, keepdims=True)
        p = jnp.exp(s)
        p = p * pl.reciprocal(jnp.sum(p, axis=-1, keepdims=True), approx=True)
        o = jnp.einsum("tbc,tcd->tbd", p.astype(qkv.dtype), v,
                       preferred_element_type=jnp.float32)   # (tl, B, hd)
        outs.append(o.astype(o_ref.dtype))                   # cast early
    o_ref[...] = jnp.concatenate(outs, axis=-1)               # one dense store


def pallas_attention(qkv, num_heads, head_dim, *, tl, out_dtype=COMPUTE_DTYPE):
    """qkv: (Lp, B, 3E) -> (Lp, B, E); gridded over token tiles (Lp % tl == 0)."""
    L, B, threeE = qkv.shape
    E = num_heads * head_dim
    return pl.pallas_call(
        functools.partial(_attention_kernel, nH=num_heads, hd=head_dim),
        out_shape=jax.ShapeDtypeStruct((L, B, E), out_dtype),
        grid_spec=pltpu.PrefetchScalarGridSpec(
            num_scalar_prefetch=0,
            grid=(L // tl,),
            in_specs=[pl.BlockSpec((tl, B, threeE), lambda i: (i, 0, 0))],
            out_specs=pl.BlockSpec((tl, B, E), lambda i: (i, 0, 0)),
        ),
        compiler_params=_compiler_params(("parallel",)),
    )(qkv)


def _linear_res_ln_kernel(x_ref, w_ref, b_ref, r_ref, g_ref, be_ref, o_ref, *, eps):
    y = jnp.dot(x_ref[...], w_ref[...], preferred_element_type=jnp.float32)
    y = y + b_ref[...] + r_ref[...].astype(jnp.float32)
    mu = jnp.mean(y, axis=-1, keepdims=True)
    var = jnp.mean(jnp.square(y - mu), axis=-1, keepdims=True)
    yn = (y - mu) * jax.lax.rsqrt(var + eps)
    o_ref[...] = (yn * g_ref[...] + be_ref[...]).astype(o_ref.dtype)


def pallas_linear_res_ln(x, w, b2, residual, g2, be2, *, tm, eps=1e-5,
                         out_dtype=COMPUTE_DTYPE):
    """LayerNorm(residual + x @ w + b) fused; full-K (= E) blocks."""
    M, K = x.shape
    E = w.shape[1]
    return pl.pallas_call(
        functools.partial(_linear_res_ln_kernel, eps=eps),
        out_shape=jax.ShapeDtypeStruct((M, E), out_dtype),
        grid_spec=pltpu.PrefetchScalarGridSpec(
            num_scalar_prefetch=0,
            grid=(M // tm,),
            in_specs=[
                pl.BlockSpec((tm, K), lambda i: (i, 0)),
                pl.BlockSpec((K, E), lambda i: (0, 0)),
                pl.BlockSpec((1, E), lambda i: (0, 0)),
                pl.BlockSpec((tm, E), lambda i: (i, 0)),
                pl.BlockSpec((1, E), lambda i: (0, 0)),
                pl.BlockSpec((1, E), lambda i: (0, 0)),
            ],
            out_specs=pl.BlockSpec((tm, E), lambda i: (i, 0)),
        ),
        compiler_params=_compiler_params(("parallel",)),
    )(x, w, b2, residual, g2, be2)


def _mlp_res_ln_kernel(h_ref, w1_ref, b1_ref, w2_ref, b2_ref, g_ref, be_ref,
                       o_ref, acc_ref, *, eps):
    k = pl.program_id(1)

    @pl.when(k == 0)
    def _():
        acc_ref[...] = jnp.zeros_like(acc_ref)

    h = h_ref[...]
    a = jnp.dot(h, w1_ref[...], preferred_element_type=jnp.float32) + b1_ref[...]
    a = jnp.maximum(a, 0.0)                                   # fused ReLU
    acc_ref[...] += jnp.dot(a.astype(h.dtype), w2_ref[...],
                            preferred_element_type=jnp.float32)

    @pl.when(k == pl.num_programs(1) - 1)
    def _():
        y = acc_ref[...] + b2_ref[...] + h_ref[...].astype(jnp.float32)
        mu = jnp.mean(y, axis=-1, keepdims=True)
        var = jnp.mean(jnp.square(y - mu), axis=-1, keepdims=True)
        yn = (y - mu) * jax.lax.rsqrt(var + eps)
        o_ref[...] = (yn * g_ref[...] + be_ref[...]).astype(o_ref.dtype)


def pallas_mlp_res_ln(h, w1, b1, w2, b2, g2, be2, *, tm, th, eps=1e-5,
                      out_dtype=COMPUTE_DTYPE):
    """LayerNorm(h + relu(h@w1+b1)@w2+b2); the (tm, mlp) activation stays in VMEM."""
    M, E = h.shape
    Hp = w1.shape[1]
    return pl.pallas_call(
        functools.partial(_mlp_res_ln_kernel, eps=eps),
        out_shape=jax.ShapeDtypeStruct((M, E), out_dtype),
        grid_spec=pltpu.PrefetchScalarGridSpec(
            num_scalar_prefetch=0,
            grid=(M // tm, Hp // th),
            in_specs=[
                pl.BlockSpec((tm, E), lambda i, k: (i, 0)),   # h (also residual)
                pl.BlockSpec((E, th), lambda i, k: (0, k)),   # w1
                pl.BlockSpec((1, th), lambda i, k: (0, k)),   # b1
                pl.BlockSpec((th, E), lambda i, k: (k, 0)),   # w2
                pl.BlockSpec((1, E), lambda i, k: (0, 0)),    # b2
                pl.BlockSpec((1, E), lambda i, k: (0, 0)),    # gamma
                pl.BlockSpec((1, E), lambda i, k: (0, 0)),    # beta
            ],
            out_specs=pl.BlockSpec((tm, E), lambda i, k: (i, 0)),
            scratch_shapes=[pltpu.VMEM((tm, E), jnp.float32)],
        ),
        compiler_params=_compiler_params(("parallel", "arbitrary")),
    )(h, w1, b1, w2, b2, g2, be2)


def _ln_linear_kernel(x_ref, g_ref, be_ref, w_ref, b_ref, o_ref, *, eps):
    x = x_ref[...].astype(jnp.float32)
    mu = jnp.mean(x, axis=-1, keepdims=True)
    var = jnp.mean(jnp.square(x - mu), axis=-1, keepdims=True)
    xn = (x - mu) * jax.lax.rsqrt(var + eps) * g_ref[...] + be_ref[...]
    y = jnp.dot(xn.astype(w_ref.dtype), w_ref[...],
                preferred_element_type=jnp.float32)
    o_ref[...] = (y + b_ref[...]).astype(o_ref.dtype)


def pallas_ln_linear(x, g2, be2, w, b2, *, eps=1e-5, out_dtype=jnp.float32):
    """Classifier head: Linear(LayerNorm(x)); single block (B is small)."""
    M, E = x.shape
    N = w.shape[1]
    Mp = _round_up(M, 8)
    if Mp != M:
        x = jnp.pad(x, ((0, Mp - M), (0, 0)))
    out = pl.pallas_call(
        functools.partial(_ln_linear_kernel, eps=eps),
        out_shape=jax.ShapeDtypeStruct((Mp, N), out_dtype),
        grid_spec=pltpu.PrefetchScalarGridSpec(
            num_scalar_prefetch=0,
            grid=(1,),
            in_specs=[
                pl.BlockSpec((Mp, E), lambda i: (0, 0)),
                pl.BlockSpec((1, E), lambda i: (0, 0)),
                pl.BlockSpec((1, E), lambda i: (0, 0)),
                pl.BlockSpec((E, N), lambda i: (0, 0)),
                pl.BlockSpec((1, N), lambda i: (0, 0)),
            ],
            out_specs=pl.BlockSpec((Mp, N), lambda i: (0, 0)),
        ),
        compiler_params=_compiler_params(("arbitrary",)),
    )(x, g2, be2, w, b2)
    return out[:M]


# -------------------------------- model glue --------------------------------

def vit_forward(x, params, *, cfg):
    """x: (B, C, H, W) NCHW -> logits (B, num_classes)."""
    B, C, H, W = x.shape
    P = cfg["patch_size"]
    E = cfg["embedding_dim"]
    nH = cfg["num_heads"]
    hd = E // nH
    nph, npw = H // P, W // P
    NP = nph * npw
    L = NP + 1

    # Token tiling derived at trace time from static shapes (generation-aware).
    tl = max(8, cfg["row_target"] // max(B, 1))
    tl = _round_up(min(tl, _round_up(L, 8)), 8)
    Lp = _round_up(L, tl)
    tm = tl * B                       # GEMM row tile == one attention token tile
    while tm > 1024 and tm % 2 == 0:
        tm //= 2

    xc = x.astype(COMPUTE_DTYPE)
    # Patch embedding: Conv2d(kernel=P, stride=P) == per-patch GEMM.  Patches
    # extracted token-major so tokens land directly in (L, B, E) layout.
    # TODO(synk): the patch-extraction transpose stays in XLA (one-time shuffle).
    patches = xc.reshape(B, C, nph, P, npw, P)
    patches = patches.transpose(2, 4, 0, 1, 3, 5).reshape(NP * B, C * P * P)
    tokens = pallas_linear(patches, params["patch_w"], params["patch_b"], tm=tm)
    tokens = tokens.reshape(NP, B, E)

    cls = jnp.broadcast_to(params["class_embedding"], (1, B, E))
    h = jnp.concatenate([cls, tokens], axis=0) + params["position_embedding"]
    # TODO(synk): embedding / MLP / attention dropouts are identity (eval).

    # Pad the token axis ONCE; padded rows flow through every layer and are
    # dropped at the very end (token 0 is the only row the head reads).
    if Lp != L:
        h = jnp.pad(h, ((0, Lp - L), (0, 0), (0, 0)))
    h2 = h.reshape(Lp * B, E)         # free leading-dim reshape

    for lp in params["layers"]:
        # Self-attention block: QKV GEMM -> attention -> out-proj + add + LN.
        qkv = pallas_linear(h2, lp["in_w"], lp["in_b"], tm=tm)      # (Lp*B, 3E)
        attn = pallas_attention(qkv.reshape(Lp, B, 3 * E), nH, hd, tl=tl)
        h2 = pallas_linear_res_ln(attn.reshape(Lp * B, E), lp["out_w"],
                                  lp["out_b"], h2, lp["ln1_g"], lp["ln1_b"],
                                  tm=tm)
        # Feed-forward block fused: ff1 + ReLU + ff2 + residual + LN.
        h2 = pallas_mlp_res_ln(h2, lp["ff1_w"], lp["ff1_b"], lp["ff2_w"],
                               lp["ff2_b"], lp["ln2_g"], lp["ln2_b"],
                               tm=tm, th=cfg["th"])

    cls_out = h2[:B]                                                 # token 0
    logits = pallas_ln_linear(cls_out, params["cls_ln_g"], params["cls_ln_b"],
                              params["head_w"], params["head_b"])
    return logits


# ------------------------- parameter construction ---------------------------

def make_config(*, img_size, in_channels, patch_size, num_layers, embedding_dim,
                num_heads, mlp_size, num_classes):
    assert img_size % patch_size == 0
    assert embedding_dim % num_heads == 0
    th = mlp_size if mlp_size <= _BUDGET["th_target"] else _BUDGET["th_target"]
    hidden_pad = _round_up(mlp_size, th)
    return {
        "patch_size": patch_size,
        "in_channels": in_channels,
        "embedding_dim": embedding_dim,
        "num_heads": num_heads,
        "mlp_size": mlp_size,
        "num_layers": num_layers,
        "num_classes": num_classes,
        "num_patches": (img_size // patch_size) ** 2,
        "th": th,
        "hidden_pad": hidden_pad,
        "row_target": _BUDGET["row_target"],
    }


def make_params(key, cfg):
    """Raw f32 parameters (mirrors the PyTorch module's parameter set)."""
    P, C, E = cfg["patch_size"], cfg["in_channels"], cfg["embedding_dim"]
    mlp, L = cfg["mlp_size"], cfg["num_patches"] + 1
    keys = jax.random.split(key, 4 + cfg["num_layers"])

    def normal(k, shape, scale=0.02):
        return scale * jax.random.normal(k, shape, dtype=jnp.float32)

    conv_w = normal(keys[0], (E, C, P, P))                  # PyTorch conv layout
    raw = {
        "patch_w": conv_w.reshape(E, C * P * P).T,          # (C*P*P, E)
        "patch_b": jnp.zeros((E,), jnp.float32),
        "class_embedding": normal(keys[1], (1, 1, E)),
        "position_embedding": normal(keys[2], (1, L, E)),
        "cls_ln_g": jnp.ones((E,), jnp.float32),
        "cls_ln_b": jnp.zeros((E,), jnp.float32),
        "head_w": normal(keys[3], (E, cfg["num_classes"])),
        "head_b": jnp.zeros((cfg["num_classes"],), jnp.float32),
        "layers": [],
    }
    for i in range(cfg["num_layers"]):
        k1, k2, k3, k4 = jax.random.split(keys[4 + i], 4)
        raw["layers"].append({
            "in_w": normal(k1, (E, 3 * E)),                 # [Wq | Wk | Wv]
            "in_b": jnp.zeros((3 * E,), jnp.float32),
            "out_w": normal(k2, (E, E)),
            "out_b": jnp.zeros((E,), jnp.float32),
            "ln1_g": jnp.ones((E,), jnp.float32),
            "ln1_b": jnp.zeros((E,), jnp.float32),
            "ff1_w": normal(k3, (E, mlp)),
            "ff1_b": jnp.zeros((mlp,), jnp.float32),
            "ff2_w": normal(k4, (mlp, E)),
            "ff2_b": jnp.zeros((E,), jnp.float32),
            "ln2_g": jnp.ones((E,), jnp.float32),
            "ln2_b": jnp.zeros((E,), jnp.float32),
        })
    return raw


def prepare_params(raw, cfg):
    """One-time kernel-ready preparation: cast to bf16, (1, N) f32 biases,
    pad MLP weights to the hidden tile, fold 1/sqrt(hd) into the Q projection."""
    E, nH = cfg["embedding_dim"], cfg["num_heads"]
    hd = E // nH
    mlp, Hp = cfg["mlp_size"], cfg["hidden_pad"]
    scale = 1.0 / float(hd) ** 0.5

    def w_cast(a):
        return a.astype(WEIGHT_DTYPE)

    def row(a):
        return a.reshape(1, -1).astype(jnp.float32)

    p = {
        "patch_w": w_cast(raw["patch_w"]),
        "patch_b": row(raw["patch_b"]),
        "class_embedding": raw["class_embedding"].reshape(1, 1, E).astype(COMPUTE_DTYPE),
        "position_embedding": raw["position_embedding"].reshape(-1, 1, E).astype(COMPUTE_DTYPE),
        "cls_ln_g": row(raw["cls_ln_g"]),
        "cls_ln_b": row(raw["cls_ln_b"]),
        "head_w": w_cast(raw["head_w"]),
        "head_b": row(raw["head_b"]),
        "layers": [],
    }
    for lr in raw["layers"]:
        in_w = lr["in_w"].astype(jnp.float32).at[:, :E].multiply(scale)
        in_b = lr["in_b"].astype(jnp.float32).at[:E].multiply(scale)
        ff1_w = jnp.pad(lr["ff1_w"], ((0, 0), (0, Hp - mlp)))
        ff1_b = jnp.pad(lr["ff1_b"], ((0, Hp - mlp),))
        ff2_w = jnp.pad(lr["ff2_w"], ((0, Hp - mlp), (0, 0)))
        p["layers"].append({
            "in_w": w_cast(in_w), "in_b": in_b.reshape(1, -1),
            "out_w": w_cast(lr["out_w"]), "out_b": row(lr["out_b"]),
            "ln1_g": row(lr["ln1_g"]), "ln1_b": row(lr["ln1_b"]),
            "ff1_w": w_cast(ff1_w), "ff1_b": row(ff1_b),
            "ff2_w": w_cast(ff2_w), "ff2_b": row(lr["ff2_b"]),
            "ln2_g": row(lr["ln2_g"]), "ln2_b": row(lr["ln2_b"]),
        })
    return p


if __name__ == "__main__":
    key = jax.random.PRNGKey(0)
    k_x, k_p = jax.random.split(key)

    # Small shapes consistent with the module (img % patch == 0).
    B, C, IMG, PATCH = 2, 3, 16, 8
    EMB, HEADS, MLP, LAYERS, CLASSES = 32, 4, 64, 2, 10

    cfg = make_config(img_size=IMG, in_channels=C, patch_size=PATCH,
                      num_layers=LAYERS, embedding_dim=EMB, num_heads=HEADS,
                      mlp_size=MLP, num_classes=CLASSES)
    raw = make_params(k_p, cfg)
    params = prepare_params(raw, cfg)          # one-time cast/pad/scale-fold

    x = jax.random.normal(k_x, (B, C, IMG, IMG), dtype=jnp.float32)

    fwd = jax.jit(functools.partial(vit_forward, cfg=cfg))
    logits = fwd(x, params)
    jax.block_until_ready(logits)
    assert logits.shape == (B, CLASSES), logits.shape
    assert bool(jnp.all(jnp.isfinite(logits)))
    print("KERNEL_OK")
</pallas_src>

<mosaic_0001>
module attributes {stable_mosaic.version = 11 : i64} {
  func.func @_linear_kernel(%arg0: i32, %arg1: memref<8x192xbf16, #tpu.memory_space<vmem>>, %arg2: memref<192x32xbf16, #tpu.memory_space<vmem>>, %arg3: memref<1x32xf32, #tpu.memory_space<vmem>>, %arg4: memref<8x32xbf16, #tpu.memory_space<vmem>>) attributes {dimension_semantics = [#tpu.dimension_semantics<parallel>], iteration_bounds = array<i64: 1>, scalar_prefetch = 0 : i64, scratch_operands = 0 : i64, tpu.core_type = #tpu.core_type<tc>, window_params = [{transform_indices = @transform_0, window_bounds = array<i64: 8, 192>}, {pipeline_mode = #tpu.pipeline_mode<synchronous>, transform_indices = @transform_1, window_bounds = array<i64: 192, 32>}, {pipeline_mode = #tpu.pipeline_mode<synchronous>, transform_indices = @transform_2, window_bounds = array<i64: 1, 32>}, {transform_indices = @transform_3, window_bounds = array<i64: 8, 32>}]} {
    %c0 = arith.constant 0 : index
    %c0_0 = arith.constant 0 : index
    %0 = vector.load %arg1[%c0, %c0_0] : memref<8x192xbf16, #tpu.memory_space<vmem>>, vector<8x192xbf16>
    %c0_1 = arith.constant 0 : index
    %c0_2 = arith.constant 0 : index
    %1 = vector.load %arg2[%c0_1, %c0_2] : memref<192x32xbf16, #tpu.memory_space<vmem>>, vector<192x32xbf16>
    %cst = arith.constant dense<0.000000e+00> : vector<8x32xf32>
    %2 = tpu.matmul %0, %1, %cst {dimension_numbers = #tpu.dot_dimension_numbers<[1], [0], [0], [1], [0, 0, 1, 1], [], []>} : vector<8x192xbf16>, vector<192x32xbf16>, vector<8x32xf32> -> vector<8x32xf32>
    %c0_3 = arith.constant 0 : index
    %c0_4 = arith.constant 0 : index
    %3 = vector.load %arg3[%c0_3, %c0_4] : memref<1x32xf32, #tpu.memory_space<vmem>>, vector<1x32xf32>
    %4 = vector.broadcast %3 : vector<1x32xf32> to vector<8x32xf32>
    %5 = arith.addf %2, %4 : vector<8x32xf32>
    %6 = arith.truncf %5 : vector<8x32xf32> to vector<8x32xbf16>
    %c0_5 = arith.constant 0 : index
    %c0_6 = arith.constant 0 : index
    %7 = vector.load %arg4[%c0_5, %c0_6] : memref<8x32xbf16, #tpu.memory_space<vmem>>, vector<8x32xbf16>
    tpu.vector_store %arg4[%c0_5, %c0_6], %6 {strides = array<i32>} : memref<8x32xbf16, #tpu.memory_space<vmem>>, vector<8x32xbf16>,
    return
  }
  func.func @transform_0(%arg0: i32) -> (i32, i32) {
    %c0_i32 = arith.constant 0 : i32
    %c0_i32_0 = arith.constant 0 : i32
    return %arg0, %c0_i32 : i32, i32
  }
  func.func @transform_1(%arg0: i32) -> (i32, i32) {
    %c0_i32 = arith.constant 0 : i32
    %c0_i32_0 = arith.constant 0 : i32
    %c0_i32_1 = arith.constant 0 : i32
    return %c0_i32, %c0_i32_0 : i32, i32
  }
  func.func @transform_2(%arg0: i32) -> (i32, i32) {
    %c0_i32 = arith.constant 0 : i32
    %c0_i32_0 = arith.constant 0 : i32
    %c0_i32_1 = arith.constant 0 : i32
    return %c0_i32, %c0_i32_0 : i32, i32
  }
  func.func @transform_3(%arg0: i32) -> (i32, i32) {
    %c0_i32 = arith.constant 0 : i32
    %c0_i32_0 = arith.constant 0 : i32
    return %arg0, %c0_i32 : i32, i32
  }
}

module attributes {stable_mosaic.version = 11 : i64} {
  func.func @_attention_kernel(%arg0: i32, %arg1: memref<8x2x96xbf16, #tpu.memory_space<vmem>>, %arg2: memref<8x2x32xbf16, #tpu.memory_space<vmem>>) attributes {dimension_semantics = [#tpu.dimension_semantics<parallel>], iteration_bounds = array<i64: 1>, scalar_prefetch = 0 : i64, scratch_operands = 0 : i64, tpu.core_type = #tpu.core_type<tc>, window_params = [{transform_indices = @transform_0, window_bounds = array<i64: 8, 2, 96>}, {transform_indices = @transform_1, window_bounds = array<i64: 8, 2, 32>}]} {
    %c0 = arith.constant 0 : index
    %c0_0 = arith.constant 0 : index
    %c0_1 = arith.constant 0 : index
    %0 = vector.load %arg1[%c0, %c0_0, %c0_1] : memref<8x2x96xbf16, #tpu.memory_space<vmem>>, vector<8x2x96xbf16>
    %1 = vector.extract_strided_slice %0 {offsets = [0, 0, 0], sizes = [8, 2, 8], strides = [1, 1, 1]} : vector<8x2x96xbf16> to vector<8x2x8xbf16>
    %2 = vector.extract_strided_slice %0 {offsets = [0, 0, 32], sizes = [8, 2, 8], strides = [1, 1, 1]} : vector<8x2x96xbf16> to vector<8x2x8xbf16>
    %3 = vector.extract_strided_slice %0 {offsets = [0, 0, 64], sizes = [8, 2, 8], strides = [1, 1, 1]} : vector<8x2x96xbf16> to vector<8x2x8xbf16>
    "tpu.trace_start"() <{level = 10 : i32, message = "tbd,tcd->tbc"}> : () -> ()
    %cst = arith.constant dense<0.000000e+00> : vector<8x2x2xf32>
    %4 = tpu.matmul %1, %2, %cst {dimension_numbers = #tpu.dot_dimension_numbers<[2], [2], [1], [1], [0, 0, 0, 1, 1, 1], [0], [0]>} : vector<8x2x8xbf16>, vector<8x2x8xbf16>, vector<8x2x2xf32> -> vector<8x2x2xf32>
    "tpu.trace_stop"() : () -> ()
    %cst_2 = arith.constant dense<0xFF800000> : vector<8x2xf32>
    %5 = vector.multi_reduction <maximumf>, %4, %cst_2 [2] : vector<8x2x2xf32> to vector<8x2xf32>
    %6 = vector.shape_cast %5 : vector<8x2xf32> to vector<8x2x1xf32>
    %7 = vector.broadcast %6 : vector<8x2x1xf32> to vector<8x2x2xf32>
    %8 = arith.subf %4, %7 : vector<8x2x2xf32>
    %9 = math.exp %8 : vector<8x2x2xf32>
    %cst_3 = arith.constant dense<0.000000e+00> : vector<8x2xf32>
    %10 = vector.multi_reduction <add>, %9, %cst_3 [2] : vector<8x2x2xf32> to vector<8x2xf32>
    %11 = vector.shape_cast %10 : vector<8x2xf32> to vector<8x2x1xf32>
    %12 = tpu.reciprocal %11 {approx = true} : vector<8x2x1xf32> -> vector<8x2x1xf32>
    %13 = vector.broadcast %12 : vector<8x2x1xf32> to vector<8x2x2xf32>
    %14 = arith.mulf %9, %13 : vector<8x2x2xf32>
    %15 = arith.truncf %14 : vector<8x2x2xf32> to vector<8x2x2xbf16>
    "tpu.trace_start"() <{level = 10 : i32, message = "tbc,tcd->tbd"}> : () -> ()
    %cst_4 = arith.constant dense<0.000000e+00> : vector<8x2x8xf32>
    %16 = tpu.matmul %15, %3, %cst_4 {dimension_numbers = #tpu.dot_dimension_numbers<[2], [1], [1], [2], [0, 0, 0, 1, 1, 2], [0], [0]>} : vector<8x2x2xbf16>, vector<8x2x8xbf16>, vector<8x2x8xf32> -> vector<8x2x8xf32>
    "tpu.trace_stop"() : () -> ()
    %17 = arith.truncf %16 : vector<8x2x8xf32> to vector<8x2x8xbf16>
    %18 = vector.extract_strided_slice %0 {offsets = [0, 0, 8], sizes = [8, 2, 8], strides = [1, 1, 1]} : vector<8x2x96xbf16> to vector<8x2x8xbf16>
    %19 = vector.extract_strided_slice %0 {offsets = [0, 0, 40], sizes = [8, 2, 8], strides = [1, 1, 1]} : vector<8x2x96xbf16> to vector<8x2x8xbf16>
    %20 = vector.extract_strided_slice %0 {offsets = [0, 0, 72], sizes = [8, 2, 8], strides = [1, 1, 1]} : vector<8x2x96xbf16> to vector<8x2x8xbf16>
    "tpu.trace_start"() <{level = 10 : i32, message = "tbd,tcd->tbc"}> : () -> ()
    %cst_5 = arith.constant dense<0.000000e+00> : vector<8x2x2xf32>
    %21 = tpu.matmul %18, %19, %cst_5 {dimension_numbers = #tpu.dot_dimension_numbers<[2], [2], [1], [1], [0, 0, 0, 1, 1, 1], [0], [0]>} : vector<8x2x8xbf16>, vector<8x2x8xbf16>, vector<8x2x2xf32> -> vector<8x2x2xf32>
    "tpu.trace_stop"() : () -> ()
    %cst_6 = arith.constant dense<0xFF800000> : vector<8x2xf32>
    %22 = vector.multi_reduction <maximumf>, %21, %cst_6 [2] : vector<8x2x2xf32> to vector<8x2xf32>
    %23 = vector.shape_cast %22 : vector<8x2xf32> to vector<8x2x1xf32>
    %24 = vector.broadcast %23 : vector<8x2x1xf32> to vector<8x2x2xf32>
    %25 = arith.subf %21, %24 : vector<8x2x2xf32>
    %26 = math.exp %25 : vector<8x2x2xf32>
    %cst_7 = arith.constant dense<0.000000e+00> : vector<8x2xf32>
    %27 = vector.multi_reduction <add>, %26, %cst_7 [2] : vector<8x2x2xf32> to vector<8x2xf32>
    %28 = vector.shape_cast %27 : vector<8x2xf32> to vector<8x2x1xf32>
    %29 = tpu.reciprocal %28 {approx = true} : vector<8x2x1xf32> -> vector<8x2x1xf32>
    %30 = vector.broadcast %29 : vector<8x2x1xf32> to vector<8x2x2xf32>
    %31 = arith.mulf %26, %30 : vector<8x2x2xf32>
    %32 = arith.truncf %31 : vector<8x2x2xf32> to vector<8x2x2xbf16>
    "tpu.trace_start"() <{level = 10 : i32, message = "tbc,tcd->tbd"}> : () -> ()
    %cst_8 = arith.constant dense<0.000000e+00> : vector<8x2x8xf32>
    %33 = tpu.matmul %32, %20, %cst_8 {dimension_numbers = #tpu.dot_dimension_numbers<[2], [1], [1], [2], [0, 0, 0, 1, 1, 2], [0], [0]>} : vector<8x2x2xbf16>, vector<8x2x8xbf16>, vector<8x2x8xf32> -> vector<8x2x8xf32>
    "tpu.trace_stop"() : () -> ()
    %34 = arith.truncf %33 : vector<8x2x8xf32> to vector<8x2x8xbf16>
    %35 = vector.extract_strided_slice %0 {offsets = [0, 0, 16], sizes = [8, 2, 8], strides = [1, 1, 1]} : vector<8x2x96xbf16> to vector<8x2x8xbf16>
    %36 = vector.extract_strided_slice %0 {offsets = [0, 0, 48], sizes = [8, 2, 8], strides = [1, 1, 1]} : vector<8x2x96xbf16> to vector<8x2x8xbf16>
    %37 = vector.extract_strided_slice %0 {offsets = [0, 0, 80], sizes = [8, 2, 8], strides = [1, 1, 1]} : vector<8x2x96xbf16> to vector<8x2x8xbf16>
    "tpu.trace_start"() <{level = 10 : i32, message = "tbd,tcd->tbc"}> : () -> ()
    %cst_9 = arith.constant dense<0.000000e+00> : vector<8x2x2xf32>
    %38 = tpu.matmul %35, %36, %cst_9 {dimension_numbers = #tpu.dot_dimension_numbers<[2], [2], [1], [1], [0, 0, 0, 1, 1, 1], [0], [0]>} : vector<8x2x8xbf16>, vector<8x2x8xbf16>, vector<8x2x2xf32> -> vector<8x2x2xf32>
    "tpu.trace_stop"() : () -> ()
    %cst_10 = arith.constant dense<0xFF800000> : vector<8x2xf32>
    %39 = vector.multi_reduction <maximumf>, %38, %cst_10 [2] : vector<8x2x2xf32> to vector<8x2xf32>
    %40 = vector.shape_cast %39 : vector<8x2xf32> to vector<8x2x1xf32>
    %41 = vector.broadcast %40 : vector<8x2x1xf32> to vector<8x2x2xf32>
    %42 = arith.subf %38, %41 : vector<8x2x2xf32>
    %43 = math.exp %42 : vector<8x2x2xf32>
    %cst_11 = arith.constant dense<0.000000e+00> : vector<8x2xf32>
    %44 = vector.multi_reduction <add>, %43, %cst_11 [2] : vector<8x2x2xf32> to vector<8x2xf32>
    %45 = vector.shape_cast %44 : vector<8x2xf32> to vector<8x2x1xf32>
    %46 = tpu.reciprocal %45 {approx = true} : vector<8x2x1xf32> -> vector<8x2x1xf32>
    %47 = vector.broadcast %46 : vector<8x2x1xf32> to vector<8x2x2xf32>
    %48 = arith.mulf %43, %47 : vector<8x2x2xf32>
    %49 = arith.truncf %48 : vector<8x2x2xf32> to vector<8x2x2xbf16>
    "tpu.trace_start"() <{level = 10 : i32, message = "tbc,tcd->tbd"}> : () -> ()
    %cst_12 = arith.constant dense<0.000000e+00> : vector<8x2x8xf32>
    %50 = tpu.matmul %49, %37, %cst_12 {dimension_numbers = #tpu.dot_dimension_numbers<[2], [1], [1], [2], [0, 0, 0, 1, 1, 2], [0], [0]>} : vector<8x2x2xbf16>, vector<8x2x8xbf16>, vector<8x2x8xf32> -> vector<8x2x8xf32>
    "tpu.trace_stop"() : () -> ()
    %51 = arith.truncf %50 : vector<8x2x8xf32> to vector<8x2x8xbf16>
    %52 = vector.extract_strided_slice %0 {offsets = [0, 0, 24], sizes = [8, 2, 8], strides = [1, 1, 1]} : vector<8x2x96xbf16> to vector<8x2x8xbf16>
    %53 = vector.extract_strided_slice %0 {offsets = [0, 0, 56], sizes = [8, 2, 8], strides = [1, 1, 1]} : vector<8x2x96xbf16> to vector<8x2x8xbf16>
    %54 = vector.extract_strided_slice %0 {offsets = [0, 0, 88], sizes = [8, 2, 8], strides = [1, 1, 1]} : vector<8x2x96xbf16> to vector<8x2x8xbf16>
    "tpu.trace_start"() <{level = 10 : i32, message = "tbd,tcd->tbc"}> : () -> ()
    %cst_13 = arith.constant dense<0.000000e+00> : vector<8x2x2xf32>
    %55 = tpu.matmul %52, %53, %cst_13 {dimension_numbers = #tpu.dot_dimension_numbers<[2], [2], [1], [1], [0, 0, 0, 1, 1, 1], [0], [0]>} : vector<8x2x8xbf16>, vector<8x2x8xbf16>, vector<8x2x2xf32> -> vector<8x2x2xf32>
    "tpu.trace_stop"() : () -> ()
    %cst_14 = arith.constant dense<0xFF800000> : vector<8x2xf32>
    %56 = vector.multi_reduction <maximumf>, %55, %cst_14 [2] : vector<8x2x2xf32> to vector<8x2xf32>
    %57 = vector.shape_cast %56 : vector<8x2xf32> to vector<8x2x1xf32>
    %58 = vector.broadcast %57 : vector<8x2x1xf32> to vector<8x2x2xf32>
    %59 = arith.subf %55, %58 : vector<8x2x2xf32>
    %60 = math.exp %59 : vector<8x2x2xf32>
    %cst_15 = arith.constant dense<0.000000e+00> : vector<8x2xf32>
    %61 = vector.multi_reduction <add>, %60, %cst_15 [2] : vector<8x2x2xf32> to vector<8x2xf32>
    %62 = vector.shape_cast %61 : vector<8x2xf32> to vector<8x2x1xf32>
    %63 = tpu.reciprocal %62 {approx = true} : vector<8x2x1xf32> -> vector<8x2x1xf32>
    %64 = vector.broadcast %63 : vector<8x2x1xf32> to vector<8x2x2xf32>
    %65 = arith.mulf %60, %64 : vector<8x2x2xf32>
    %66 = arith.truncf %65 : vector<8x2x2xf32> to vector<8x2x2xbf16>
    "tpu.trace_start"() <{level = 10 : i32, message = "tbc,tcd->tbd"}> : () -> ()
    %cst_16 = arith.constant dense<0.000000e+00> : vector<8x2x8xf32>
    %67 = tpu.matmul %66, %54, %cst_16 {dimension_numbers = #tpu.dot_dimension_numbers<[2], [1], [1], [2], [0, 0, 0, 1, 1, 2], [0], [0]>} : vector<8x2x2xbf16>, vector<8x2x8xbf16>, vector<8x2x8xf32> -> vector<8x2x8xf32>
    "tpu.trace_stop"() : () -> ()
    %68 = arith.truncf %67 : vector<8x2x8xf32> to vector<8x2x8xbf16>
    %69 = tpu.concatenate %17, %34, %51, %68 in 2 : vector<8x2x8xbf16>, vector<8x2x8xbf16>, vector<8x2x8xbf16>, vector<8x2x8xbf16> -> vector<8x2x32xbf16>
    %c0_17 = arith.constant 0 : index
    %c0_18 = arith.constant 0 : index
    %c0_19 = arith.constant 0 : index
    %70 = vector.load %arg2[%c0_17, %c0_18, %c0_19] : memref<8x2x32xbf16, #tpu.memory_space<vmem>>, vector<8x2x32xbf16>
    tpu.vector_store %arg2[%c0_17, %c0_18, %c0_19], %69 {strides = array<i32>} : memref<8x2x32xbf16, #tpu.memory_space<vmem>>, vector<8x2x32xbf16>,
    return
  }
  func.func @transform_0(%arg0: i32) -> (i32, i32, i32) {
    %c0_i32 = arith.constant 0 : i32
    %c0_i32_0 = arith.constant 0 : i32
    %c0_i32_1 = arith.constant 0 : i32
    return %arg0, %c0_i32, %c0_i32_0 : i32, i32, i32
  }
  func.func @transform_1(%arg0: i32) -> (i32, i32, i32) {
    %c0_i32 = arith.constant 0 : i32
    %c0_i32_0 = arith.constant 0 : i32
    %c0_i32_1 = arith.constant 0 : i32
    return %arg0, %c0_i32, %c0_i32_0 : i32, i32, i32
  }
}

module attributes {stable_mosaic.version = 11 : i64} {
  func.func @_linear_res_ln_kernel(%arg0: i32, %arg1: memref<16x32xbf16, #tpu.memory_space<vmem>>, %arg2: memref<32x32xbf16, #tpu.memory_space<vmem>>, %arg3: memref<1x32xf32, #tpu.memory_space<vmem>>, %arg4: memref<16x32xbf16, #tpu.memory_space<vmem>>, %arg5: memref<1x32xf32, #tpu.memory_space<vmem>>, %arg6: memref<1x32xf32, #tpu.memory_space<vmem>>, %arg7: memref<16x32xbf16, #tpu.memory_space<vmem>>) attributes {dimension_semantics = [#tpu.dimension_semantics<parallel>], iteration_bounds = array<i64: 1>, scalar_prefetch = 0 : i64, scratch_operands = 0 : i64, tpu.core_type = #tpu.core_type<tc>, window_params = [{transform_indices = @transform_0, window_bounds = array<i64: 16, 32>}, {pipeline_mode = #tpu.pipeline_mode<synchronous>, transform_indices = @transform_1, window_bounds = array<i64: 32, 32>}, {pipeline_mode = #tpu.pipeline_mode<synchronous>, transform_indices = @transform_2, window_bounds = array<i64: 1, 32>}, {transform_indices = @transform_3, window_bounds = array<i64: 16, 32>}, {pipeline_mode = #tpu.pipeline_mode<synchronous>, transform_indices = @transform_4, window_bounds = array<i64: 1, 32>}, {pipeline_mode = #tpu.pipeline_mode<synchronous>, transform_indices = @transform_5, window_bounds = array<i64: 1, 32>}, {transform_indices = @transform_6, window_bounds = array<i64: 16, 32>}]} {
    %c0 = arith.constant 0 : index
    %c0_0 = arith.constant 0 : index
    %0 = vector.load %arg1[%c0, %c0_0] : memref<16x32xbf16, #tpu.memory_space<vmem>>, vector<16x32xbf16>
    %c0_1 = arith.constant 0 : index
    %c0_2 = arith.constant 0 : index
    %1 = vector.load %arg2[%c0_1, %c0_2] : memref<32x32xbf16, #tpu.memory_space<vmem>>, vector<32x32xbf16>
    %cst = arith.constant dense<0.000000e+00> : vector<16x32xf32>
    %2 = tpu.matmul %0, %1, %cst {dimension_numbers = #tpu.dot_dimension_numbers<[1], [0], [0], [1], [0, 0, 1, 1], [], []>} : vector<16x32xbf16>, vector<32x32xbf16>, vector<16x32xf32> -> vector<16x32xf32>
    %c0_3 = arith.constant 0 : index
    %c0_4 = arith.constant 0 : index
    %3 = vector.load %arg3[%c0_3, %c0_4] : memref<1x32xf32, #tpu.memory_space<vmem>>, vector<1x32xf32>
    %4 = vector.broadcast %3 : vector<1x32xf32> to vector<16x32xf32>
    %5 = arith.addf %2, %4 : vector<16x32xf32>
    %c0_5 = arith.constant 0 : index
    %c0_6 = arith.constant 0 : index
    %6 = vector.load %arg4[%c0_5, %c0_6] : memref<16x32xbf16, #tpu.memory_space<vmem>>, vector<16x32xbf16>
    %7 = arith.extf %6 : vector<16x32xbf16> to vector<16x32xf32>
    %8 = arith.addf %5, %7 : vector<16x32xf32>
    %cst_7 = arith.constant dense<0.000000e+00> : vector<16xf32>
    %9 = vector.multi_reduction <add>, %8, %cst_7 [1] : vector<16x32xf32> to vector<16xf32>
    %10 = vector.shape_cast %9 : vector<16xf32> to vector<16x1xf32>
    %cst_8 = arith.constant 3.200000e+01 : f32
    %11 = vector.broadcast %cst_8 : f32 to vector<16x1xf32>
    %12 = arith.divf %10, %11 : vector<16x1xf32>
    %13 = vector.broadcast %12 : vector<16x1xf32> to vector<16x32xf32>
    %14 = arith.subf %8, %13 : vector<16x32xf32>
    %15 = arith.mulf %14, %14 : vector<16x32xf32>
    %cst_9 = arith.constant dense<0.000000e+00> : vector<16xf32>
    %16 = vector.multi_reduction <add>, %15, %cst_9 [1] : vector<16x32xf32> to vector<16xf32>
    %17 = vector.shape_cast %16 : vector<16xf32> to vector<16x1xf32>
    %cst_10 = arith.constant 3.200000e+01 : f32
    %18 = vector.broadcast %cst_10 : f32 to vector<16x1xf32>
    %19 = arith.divf %17, %18 : vector<16x1xf32>
    %20 = vector.broadcast %12 : vector<16x1xf32> to vector<16x32xf32>
    %21 = arith.subf %8, %20 : vector<16x32xf32>
    %cst_11 = arith.constant 9.99999974E-6 : f32
    %22 = vector.broadcast %cst_11 : f32 to vector<16x1xf32>
    %23 = arith.addf %19, %22 : vector<16x1xf32>
    %24 = math.rsqrt %23 : vector<16x1xf32>
    %25 = vector.broadcast %24 : vector<16x1xf32> to vector<16x32xf32>
    %26 = arith.mulf %21, %25 : vector<16x32xf32>
    %c0_12 = arith.constant 0 : index
    %c0_13 = arith.constant 0 : index
    %27 = vector.load %arg5[%c0_12, %c0_13] : memref<1x32xf32, #tpu.memory_space<vmem>>, vector<1x32xf32>
    %28 = vector.broadcast %27 : vector<1x32xf32> to vector<16x32xf32>
    %29 = arith.mulf %26, %28 : vector<16x32xf32>
    %c0_14 = arith.constant 0 : index
    %c0_15 = arith.constant 0 : index
    %30 = vector.load %arg6[%c0_14, %c0_15] : memref<1x32xf32, #tpu.memory_space<vmem>>, vector<1x32xf32>
    %31 = vector.broadcast %30 : vector<1x32xf32> to vector<16x32xf32>
    %32 = arith.addf %29, %31 : vector<16x32xf32>
    %33 = arith.truncf %32 : vector<16x32xf32> to vector<16x32xbf16>
    %c0_16 = arith.constant 0 : index
    %c0_17 = arith.constant 0 : index
    %34 = vector.load %arg7[%c0_16, %c0_17] : memref<16x32xbf16, #tpu.memory_space<vmem>>, vector<16x32xbf16>
    tpu.vector_store %arg7[%c0_16, %c0_17], %33 {strides = array<i32>} : memref<16x32xbf16, #tpu.memory_space<vmem>>, vector<16x32xbf16>,
    return
  }
  func.func @transform_0(%arg0: i32) -> (i32, i32) {
    %c0_i32 = arith.constant 0 : i32
    %c0_i32_0 = arith.constant 0 : i32
    return %arg0, %c0_i32 : i32, i32
  }
  func.func @transform_1(%arg0: i32) -> (i32, i32) {
    %c0_i32 = arith.constant 0 : i32
    %c0_i32_0 = arith.constant 0 : i32
    %c0_i32_1 = arith.constant 0 : i32
    return %c0_i32, %c0_i32_0 : i32, i32
  }
  func.func @transform_2(%arg0: i32) -> (i32, i32) {
    %c0_i32 = arith.constant 0 : i32
    %c0_i32_0 = arith.constant 0 : i32
    %c0_i32_1 = arith.constant 0 : i32
    return %c0_i32, %c0_i32_0 : i32, i32
  }
  func.func @transform_3(%arg0: i32) -> (i32, i32) {
    %c0_i32 = arith.constant 0 : i32
    %c0_i32_0 = arith.constant 0 : i32
    return %arg0, %c0_i32 : i32, i32
  }
  func.func @transform_4(%arg0: i32) -> (i32, i32) {
    %c0_i32 = arith.constant 0 : i32
    %c0_i32_0 = arith.constant 0 : i32
    %c0_i32_1 = arith.constant 0 : i32
    return %c0_i32, %c0_i32_0 : i32, i32
  }
  func.func @transform_5(%arg0: i32) -> (i32, i32) {
    %c0_i32 = arith.constant 0 : i32
    %c0_i32_0 = arith.constant 0 : i32
    %c0_i32_1 = arith.constant 0 : i32
    return %c0_i32, %c0_i32_0 : i32, i32
  }
  func.func @transform_6(%arg0: i32) -> (i32, i32) {
    %c0_i32 = arith.constant 0 : i32
    %c0_i32_0 = arith.constant 0 : i32
    return %arg0, %c0_i32 : i32, i32
  }
}

module attributes {stable_mosaic.version = 11 : i64} {
  func.func @_linear_kernel(%arg0: i32, %arg1: memref<16x32xbf16, #tpu.memory_space<vmem>>, %arg2: memref<32x96xbf16, #tpu.memory_space<vmem>>, %arg3: memref<1x96xf32, #tpu.memory_space<vmem>>, %arg4: memref<16x96xbf16, #tpu.memory_space<vmem>>) attributes {dimension_semantics = [#tpu.dimension_semantics<parallel>], iteration_bounds = array<i64: 1>, scalar_prefetch = 0 : i64, scratch_operands = 0 : i64, tpu.core_type = #tpu.core_type<tc>, window_params = [{transform_indices = @transform_0, window_bounds = array<i64: 16, 32>}, {pipeline_mode = #tpu.pipeline_mode<synchronous>, transform_indices = @transform_1, window_bounds = array<i64: 32, 96>}, {pipeline_mode = #tpu.pipeline_mode<synchronous>, transform_indices = @transform_2, window_bounds = array<i64: 1, 96>}, {transform_indices = @transform_3, window_bounds = array<i64: 16, 96>}]} {
    %c0 = arith.constant 0 : index
    %c0_0 = arith.constant 0 : index
    %0 = vector.load %arg1[%c0, %c0_0] : memref<16x32xbf16, #tpu.memory_space<vmem>>, vector<16x32xbf16>
    %c0_1 = arith.constant 0 : index
    %c0_2 = arith.constant 0 : index
    %1 = vector.load %arg2[%c0_1, %c0_2] : memref<32x96xbf16, #tpu.memory_space<vmem>>, vector<32x96xbf16>
    %cst = arith.constant dense<0.000000e+00> : vector<16x96xf32>
    %2 = tpu.matmul %0, %1, %cst {dimension_numbers = #tpu.dot_dimension_numbers<[1], [0], [0], [1], [0, 0, 1, 1], [], []>} : vector<16x32xbf16>, vector<32x96xbf16>, vector<16x96xf32> -> vector<16x96xf32>
    %c0_3 = arith.constant 0 : index
    %c0_4 = arith.constant 0 : index
    %3 = vector.load %arg3[%c0_3, %c0_4] : memref<1x96xf32, #tpu.memory_space<vmem>>, vector<1x96xf32>
    %4 = vector.broadcast %3 : vector<1x96xf32> to vector<16x96xf32>
    %5 = arith.addf %2, %4 : vector<16x96xf32>
    %6 = arith.truncf %5 : vector<16x96xf32> to vector<16x96xbf16>
    %c0_5 = arith.constant 0 : index
    %c0_6 = arith.constant 0 : index
    %7 = vector.load %arg4[%c0_5, %c0_6] : memref<16x96xbf16, #tpu.memory_space<vmem>>, vector<16x96xbf16>
    tpu.vector_store %arg4[%c0_5, %c0_6], %6 {strides = array<i32>} : memref<16x96xbf16, #tpu.memory_space<vmem>>, vector<16x96xbf16>,
    return
  }
  func.func @transform_0(%arg0: i32) -> (i32, i32) {
    %c0_i32 = arith.constant 0 : i32
    %c0_i32_0 = arith.constant 0 : i32
    return %arg0, %c0_i32 : i32, i32
  }
  func.func @transform_1(%arg0: i32) -> (i32, i32) {
    %c0_i32 = arith.constant 0 : i32
    %c0_i32_0 = arith.constant 0 : i32
    %c0_i32_1 = arith.constant 0 : i32
    return %c0_i32, %c0_i32_0 : i32, i32
  }
  func.func @transform_2(%arg0: i32) -> (i32, i32) {
    %c0_i32 = arith.constant 0 : i32
    %c0_i32_0 = arith.constant 0 : i32
    %c0_i32_1 = arith.constant 0 : i32
    return %c0_i32, %c0_i32_0 : i32, i32
  }
  func.func @transform_3(%arg0: i32) -> (i32, i32) {
    %c0_i32 = arith.constant 0 : i32
    %c0_i32_0 = arith.constant 0 : i32
    return %arg0, %c0_i32 : i32, i32
  }
}

module attributes {stable_mosaic.version = 11 : i64} {
  func.func @_mlp_res_ln_kernel(%arg0: i32, %arg1: i32, %arg2: memref<16x32xbf16, #tpu.memory_space<vmem>>, %arg3: memref<32x64xbf16, #tpu.memory_space<vmem>>, %arg4: memref<1x64xf32, #tpu.memory_space<vmem>>, %arg5: memref<64x32xbf16, #tpu.memory_space<vmem>>, %arg6: memref<1x32xf32, #tpu.memory_space<vmem>>, %arg7: memref<1x32xf32, #tpu.memory_space<vmem>>, %arg8: memref<1x32xf32, #tpu.memory_space<vmem>>, %arg9: memref<16x32xbf16, #tpu.memory_space<vmem>>, %arg10: memref<16x32xf32, #tpu.memory_space<vmem>>) attributes {dimension_semantics = [#tpu.dimension_semantics<parallel>, #tpu.dimension_semantics<arbitrary>], iteration_bounds = array<i64: 1, 1>, scalar_prefetch = 0 : i64, scratch_operands = 1 : i64, tpu.core_type = #tpu.core_type<tc>, window_params = [{transform_indices = @transform_0, window_bounds = array<i64: 16, 32>}, {transform_indices = @transform_1, window_bounds = array<i64: 32, 64>}, {transform_indices = @transform_2, window_bounds = array<i64: 1, 64>}, {transform_indices = @transform_3, window_bounds = array<i64: 64, 32>}, {pipeline_mode = #tpu.pipeline_mode<synchronous>, transform_indices = @transform_4, window_bounds = array<i64: 1, 32>}, {pipeline_mode = #tpu.pipeline_mode<synchronous>, transform_indices = @transform_5, window_bounds = array<i64: 1, 32>}, {pipeline_mode = #tpu.pipeline_mode<synchronous>, transform_indices = @transform_6, window_bounds = array<i64: 1, 32>}, {transform_indices = @transform_7, window_bounds = array<i64: 16, 32>}]} {
    %c0_i32 = arith.constant 0 : i32
    %0 = arith.cmpi eq, %arg1, %c0_i32 : i32
    %1 = arith.extui %0 : i1 to i32
    %c0_i32_0 = arith.constant 0 : i32
    %2 = arith.cmpi ne, %1, %c0_i32_0 : i32
    scf.if %2 {
      %cst_16 = arith.constant 0.000000e+00 : f32
      %20 = vector.broadcast %cst_16 : f32 to vector<16x32xf32>
      %c0_17 = arith.constant 0 : index
      %c0_18 = arith.constant 0 : index
      %21 = vector.load %arg10[%c0_17, %c0_18] : memref<16x32xf32, #tpu.memory_space<vmem>>, vector<16x32xf32>
      tpu.vector_store %arg10[%c0_17, %c0_18], %20 {strides = array<i32>} : memref<16x32xf32, #tpu.memory_space<vmem>>, vector<16x32xf32>,
    } else {
    }
    %c0 = arith.constant 0 : index
    %c0_1 = arith.constant 0 : index
    %3 = vector.load %arg2[%c0, %c0_1] : memref<16x32xbf16, #tpu.memory_space<vmem>>, vector<16x32xbf16>
    %c0_2 = arith.constant 0 : index
    %c0_3 = arith.constant 0 : index
    %4 = vector.load %arg3[%c0_2, %c0_3] : memref<32x64xbf16, #tpu.memory_space<vmem>>, vector<32x64xbf16>
    %cst = arith.constant dense<0.000000e+00> : vector<16x64xf32>
    %5 = tpu.matmul %3, %4, %cst {dimension_numbers = #tpu.dot_dimension_numbers<[1], [0], [0], [1], [0, 0, 1, 1], [], []>} : vector<16x32xbf16>, vector<32x64xbf16>, vector<16x64xf32> -> vector<16x64xf32>
    %c0_4 = arith.constant 0 : index
    %c0_5 = arith.constant 0 : index
    %6 = vector.load %arg4[%c0_4, %c0_5] : memref<1x64xf32, #tpu.memory_space<vmem>>, vector<1x64xf32>
    %7 = vector.broadcast %6 : vector<1x64xf32> to vector<16x64xf32>
    %8 = arith.addf %5, %7 : vector<16x64xf32>
    %cst_6 = arith.constant 0.000000e+00 : f32
    %9 = vector.broadcast %cst_6 : f32 to vector<16x64xf32>
    %10 = arith.maximumf %8, %9 : vector<16x64xf32>
    %c0_7 = arith.constant 0 : index
    %c0_8 = arith.constant 0 : index
    %11 = vector.load %arg10[%c0_7, %c0_8] : memref<16x32xf32, #tpu.memory_space<vmem>>, vector<16x32xf32>
    %12 = arith.truncf %10 : vector<16x64xf32> to vector<16x64xbf16>
    %c0_9 = arith.constant 0 : index
    %c0_10 = arith.constant 0 : index
    %13 = vector.load %arg5[%c0_9, %c0_10] : memref<64x32xbf16, #tpu.memory_space<vmem>>, vector<64x32xbf16>
    %cst_11 = arith.constant dense<0.000000e+00> : vector<16x32xf32>
    %14 = tpu.matmul %12, %13, %cst_11 {dimension_numbers = #tpu.dot_dimension_numbers<[1], [0], [0], [1], [0, 0, 1, 1], [], []>} : vector<16x64xbf16>, vector<64x32xbf16>, vector<16x32xf32> -> vector<16x32xf32>
    %15 = arith.addf %11, %14 : vector<16x32xf32>
    %c0_12 = arith.constant 0 : index
    %c0_13 = arith.constant 0 : index
    %16 = vector.load %arg10[%c0_12, %c0_13] : memref<16x32xf32, #tpu.memory_space<vmem>>, vector<16x32xf32>
    tpu.vector_store %arg10[%c0_12, %c0_13], %15 {strides = array<i32>} : memref<16x32xf32, #tpu.memory_space<vmem>>, vector<16x32xf32>,
    %c0_i32_14 = arith.constant 0 : i32
    %17 = arith.cmpi eq, %arg1, %c0_i32_14 : i32
    %18 = arith.extui %17 : i1 to i32
    %c0_i32_15 = arith.constant 0 : i32
    %19 = arith.cmpi ne, %18, %c0_i32_15 : i32
    scf.if %19 {
      %c0_16 = arith.constant 0 : index
      %c0_17 = arith.constant 0 : index
      %20 = vector.load %arg10[%c0_16, %c0_17] : memref<16x32xf32, #tpu.memory_space<vmem>>, vector<16x32xf32>
      %c0_18 = arith.constant 0 : index
      %c0_19 = arith.constant 0 : index
      %21 = vector.load %arg6[%c0_18, %c0_19] : memref<1x32xf32, #tpu.memory_space<vmem>>, vector<1x32xf32>
      %22 = vector.broadcast %21 : vector<1x32xf32> to vector<16x32xf32>
      %23 = arith.addf %20, %22 : vector<16x32xf32>
      %c0_20 = arith.constant 0 : index
      %c0_21 = arith.constant 0 : index
      %24 = vector.load %arg2[%c0_20, %c0_21] : memref<16x32xbf16, #tpu.memory_space<vmem>>, vector<16x32xbf16>
      %25 = arith.extf %24 : vector<16x32xbf16> to vector<16x32xf32>
      %26 = arith.addf %23, %25 : vector<16x32xf32>
      %cst_22 = arith.constant dense<0.000000e+00> : vector<16xf32>
      %27 = vector.multi_reduction <add>, %26, %cst_22 [1] : vector<16x32xf32> to vector<16xf32>
      %28 = vector.shape_cast %27 : vector<16xf32> to vector<16x1xf32>
      %cst_23 = arith.constant 3.200000e+01 : f32
      %29 = vector.broadcast %cst_23 : f32 to vector<16x1xf32>
      %30 = arith.divf %28, %29 : vector<16x1xf32>
      %31 = vector.broadcast %30 : vector<16x1xf32> to vector<16x32xf32>
      %32 = arith.subf %26, %31 : vector<16x32xf32>
      %33 = arith.mulf %32, %32 : vector<16x32xf32>
      %cst_24 = arith.constant dense<0.000000e+00> : vector<16xf32>
      %34 = vector.multi_reduction <add>, %33, %cst_24 [1] : vector<16x32xf32> to vector<16xf32>
      %35 = vector.shape_cast %34 : vector<16xf32> to vector<16x1xf32>
      %cst_25 = arith.constant 3.200000e+01 : f32
      %36 = vector.broadcast %cst_25 : f32 to vector<16x1xf32>
      %37 = arith.divf %35, %36 : vector<16x1xf32>
      %38 = vector.broadcast %30 : vector<16x1xf32> to vector<16x32xf32>
      %39 = arith.subf %26, %38 : vector<16x32xf32>
      %cst_26 = arith.constant 9.99999974E-6 : f32
      %40 = vector.broadcast %cst_26 : f32 to vector<16x1xf32>
      %41 = arith.addf %37, %40 : vector<16x1xf32>
      %42 = math.rsqrt %41 : vector<16x1xf32>
      %43 = vector.broadcast %42 : vector<16x1xf32> to vector<16x32xf32>
      %44 = arith.mulf %39, %43 : vector<16x32xf32>
      %c0_27 = arith.constant 0 : index
      %c0_28 = arith.constant 0 : index
      %45 = vector.load %arg7[%c0_27, %c0_28] : memref<1x32xf32, #tpu.memory_space<vmem>>, vector<1x32xf32>
      %46 = vector.broadcast %45 : vector<1x32xf32> to vector<16x32xf32>
      %47 = arith.mulf %44, %46 : vector<16x32xf32>
      %c0_29 = arith.constant 0 : index
      %c0_30 = arith.constant 0 : index
      %48 = vector.load %arg8[%c0_29, %c0_30] : memref<1x32xf32, #tpu.memory_space<vmem>>, vector<1x32xf32>
      %49 = vector.broadcast %48 : vector<1x32xf32> to vector<16x32xf32>
      %50 = arith.addf %47, %49 : vector<16x32xf32>
      %51 = arith.truncf %50 : vector<16x32xf32> to vector<16x32xbf16>
      %c0_31 = arith.constant 0 : index
      %c0_32 = arith.constant 0 : index
      %52 = vector.load %arg9[%c0_31, %c0_32] : memref<16x32xbf16, #tpu.memory_space<vmem>>, vector<16x32xbf16>
      tpu.vector_store %arg9[%c0_31, %c0_32], %51 {strides = array<i32>} : memref<16x32xbf16, #tpu.memory_space<vmem>>, vector<16x32xbf16>,
    } else {
    }
    return
  }
  func.func @transform_0(%arg0: i32, %arg1: i32) -> (i32, i32) {
    %c0_i32 = arith.constant 0 : i32
    %c0_i32_0 = arith.constant 0 : i32
    return %arg0, %c0_i32 : i32, i32
  }
  func.func @transform_1(%arg0: i32, %arg1: i32) -> (i32, i32) {
    %c0_i32 = arith.constant 0 : i32
    %c0_i32_0 = arith.constant 0 : i32
    return %c0_i32, %arg1 : i32, i32
  }
  func.func @transform_2(%arg0: i32, %arg1: i32) -> (i32, i32) {
    %c0_i32 = arith.constant 0 : i32
    %c0_i32_0 = arith.constant 0 : i32
    return %c0_i32, %arg1 : i32, i32
  }
  func.func @transform_3(%arg0: i32, %arg1: i32) -> (i32, i32) {
    %c0_i32 = arith.constant 0 : i32
    %c0_i32_0 = arith.constant 0 : i32
    return %arg1, %c0_i32 : i32, i32
  }
  func.func @transform_4(%arg0: i32, %arg1: i32) -> (i32, i32) {
    %c0_i32 = arith.constant 0 : i32
    %c0_i32_0 = arith.constant 0 : i32
    %c0_i32_1 = arith.constant 0 : i32
    return %c0_i32, %c0_i32_0 : i32, i32
  }
  func.func @transform_5(%arg0: i32, %arg1: i32) -> (i32, i32) {
    %c0_i32 = arith.constant 0 : i32
    %c0_i32_0 = arith.constant 0 : i32
    %c0_i32_1 = arith.constant 0 : i32
    return %c0_i32, %c0_i32_0 : i32, i32
  }
  func.func @transform_6(%arg0: i32, %arg1: i32) -> (i32, i32) {
    %c0_i32 = arith.constant 0 : i32
    %c0_i32_0 = arith.constant 0 : i32
    %c0_i32_1 = arith.constant 0 : i32
    return %c0_i32, %c0_i32_0 : i32, i32
  }
  func.func @transform_7(%arg0: i32, %arg1: i32) -> (i32, i32) {
    %c0_i32 = arith.constant 0 : i32
    %c0_i32_0 = arith.constant 0 : i32
    return %arg0, %c0_i32 : i32, i32
  }
}

module attributes {stable_mosaic.version = 11 : i64} {
  func.func @_ln_linear_kernel(%arg0: i32, %arg1: memref<8x32xbf16, #tpu.memory_space<vmem>>, %arg2: memref<1x32xf32, #tpu.memory_space<vmem>>, %arg3: memref<1x32xf32, #tpu.memory_space<vmem>>, %arg4: memref<32x10xbf16, #tpu.memory_space<vmem>>, %arg5: memref<1x10xf32, #tpu.memory_space<vmem>>, %arg6: memref<8x10xf32, #tpu.memory_space<vmem>>) attributes {dimension_semantics = [#tpu.dimension_semantics<arbitrary>], iteration_bounds = array<i64: 1>, scalar_prefetch = 0 : i64, scratch_operands = 0 : i64, tpu.core_type = #tpu.core_type<tc>, window_params = [{pipeline_mode = #tpu.pipeline_mode<synchronous>, transform_indices = @transform_0, window_bounds = array<i64: 8, 32>}, {pipeline_mode = #tpu.pipeline_mode<synchronous>, transform_indices = @transform_1, window_bounds = array<i64: 1, 32>}, {pipeline_mode = #tpu.pipeline_mode<synchronous>, transform_indices = @transform_2, window_bounds = array<i64: 1, 32>}, {pipeline_mode = #tpu.pipeline_mode<synchronous>, transform_indices = @transform_3, window_bounds = array<i64: 32, 10>}, {pipeline_mode = #tpu.pipeline_mode<synchronous>, transform_indices = @transform_4, window_bounds = array<i64: 1, 10>}, {pipeline_mode = #tpu.pipeline_mode<synchronous>, transform_indices = @transform_5, window_bounds = array<i64: 8, 10>}]} {
    %c0 = arith.constant 0 : index
    %c0_0 = arith.constant 0 : index
    %0 = vector.load %arg1[%c0, %c0_0] : memref<8x32xbf16, #tpu.memory_space<vmem>>, vector<8x32xbf16>
    %1 = arith.extf %0 : vector<8x32xbf16> to vector<8x32xf32>
    %cst = arith.constant dense<0.000000e+00> : vector<8xf32>
    %2 = vector.multi_reduction <add>, %1, %cst [1] : vector<8x32xf32> to vector<8xf32>
    %3 = vector.shape_cast %2 : vector<8xf32> to vector<8x1xf32>
    %cst_1 = arith.constant 3.200000e+01 : f32
    %4 = vector.broadcast %cst_1 : f32 to vector<8x1xf32>
    %5 = arith.divf %3, %4 : vector<8x1xf32>
    %6 = vector.broadcast %5 : vector<8x1xf32> to vector<8x32xf32>
    %7 = arith.subf %1, %6 : vector<8x32xf32>
    %8 = arith.mulf %7, %7 : vector<8x32xf32>
    %cst_2 = arith.constant dense<0.000000e+00> : vector<8xf32>
    %9 = vector.multi_reduction <add>, %8, %cst_2 [1] : vector<8x32xf32> to vector<8xf32>
    %10 = vector.shape_cast %9 : vector<8xf32> to vector<8x1xf32>
    %cst_3 = arith.constant 3.200000e+01 : f32
    %11 = vector.broadcast %cst_3 : f32 to vector<8x1xf32>
    %12 = arith.divf %10, %11 : vector<8x1xf32>
    %13 = vector.broadcast %5 : vector<8x1xf32> to vector<8x32xf32>
    %14 = arith.subf %1, %13 : vector<8x32xf32>
    %cst_4 = arith.constant 9.99999974E-6 : f32
    %15 = vector.broadcast %cst_4 : f32 to vector<8x1xf32>
    %16 = arith.addf %12, %15 : vector<8x1xf32>
    %17 = math.rsqrt %16 : vector<8x1xf32>
    %18 = vector.broadcast %17 : vector<8x1xf32> to vector<8x32xf32>
    %19 = arith.mulf %14, %18 : vector<8x32xf32>
    %c0_5 = arith.constant 0 : index
    %c0_6 = arith.constant 0 : index
    %20 = vector.load %arg2[%c0_5, %c0_6] : memref<1x32xf32, #tpu.memory_space<vmem>>, vector<1x32xf32>
    %21 = vector.broadcast %20 : vector<1x32xf32> to vector<8x32xf32>
    %22 = arith.mulf %19, %21 : vector<8x32xf32>
    %c0_7 = arith.constant 0 : index
    %c0_8 = arith.constant 0 : index
    %23 = vector.load %arg3[%c0_7, %c0_8] : memref<1x32xf32, #tpu.memory_space<vmem>>, vector<1x32xf32>
    %24 = vector.broadcast %23 : vector<1x32xf32> to vector<8x32xf32>
    %25 = arith.addf %22, %24 : vector<8x32xf32>
    %26 = arith.truncf %25 : vector<8x32xf32> to vector<8x32xbf16>
    %c0_9 = arith.constant 0 : index
    %c0_10 = arith.constant 0 : index
    %27 = vector.load %arg4[%c0_9, %c0_10] : memref<32x10xbf16, #tpu.memory_space<vmem>>, vector<32x10xbf16>
    %cst_11 = arith.constant dense<0.000000e+00> : vector<8x10xf32>
    %28 = tpu.matmul %26, %27, %cst_11 {dimension_numbers = #tpu.dot_dimension_numbers<[1], [0], [0], [1], [0, 0, 1, 1], [], []>} : vector<8x32xbf16>, vector<32x10xbf16>, vector<8x10xf32> -> vector<8x10xf32>
    %c0_12 = arith.constant 0 : index
    %c0_13 = arith.constant 0 : index
    %29 = vector.load %arg5[%c0_12, %c0_13] : memref<1x10xf32, #tpu.memory_space<vmem>>, vector<1x10xf32>
    %30 = vector.broadcast %29 : vector<1x10xf32> to vector<8x10xf32>
    %31 = arith.addf %28, %30 : vector<8x10xf32>
    %c0_14 = arith.constant 0 : index
    %c0_15 = arith.constant 0 : index
    %32 = vector.load %arg6[%c0_14, %c0_15] : memref<8x10xf32, #tpu.memory_space<vmem>>, vector<8x10xf32>
    tpu.vector_store %arg6[%c0_14, %c0_15], %31 {strides = array<i32>} : memref<8x10xf32, #tpu.memory_space<vmem>>, vector<8x10xf32>,
    return
  }
  func.func @transform_0(%arg0: i32) -> (i32, i32) {
    %c0_i32 = arith.constant 0 : i32
    %c0_i32_0 = arith.constant 0 : i32
    %c0_i32_1 = arith.constant 0 : i32
    return %c0_i32, %c0_i32_0 : i32, i32
  }
  func.func @transform_1(%arg0: i32) -> (i32, i32) {
    %c0_i32 = arith.constant 0 : i32
    %c0_i32_0 = arith.constant 0 : i32
    %c0_i32_1 = arith.constant 0 : i32
    return %c0_i32, %c0_i32_0 : i32, i32
  }
  func.func @transform_2(%arg0: i32) -> (i32, i32) {
    %c0_i32 = arith.constant 0 : i32
    %c0_i32_0 = arith.constant 0 : i32
    %c0_i32_1 = arith.constant 0 : i32
    return %c0_i32, %c0_i32_0 : i32, i32
  }
  func.func @transform_3(%arg0: i32) -> (i32, i32) {
    %c0_i32 = arith.constant 0 : i32
    %c0_i32_0 = arith.constant 0 : i32
    %c0_i32_1 = arith.constant 0 : i32
    return %c0_i32, %c0_i32_0 : i32, i32
  }
  func.func @transform_4(%arg0: i32) -> (i32, i32) {
    %c0_i32 = arith.constant 0 : i32
    %c0_i32_0 = arith.constant 0 : i32
    %c0_i32_1 = arith.constant 0 : i32
    return %c0_i32, %c0_i32_0 : i32, i32
  }
  func.func @transform_5(%arg0: i32) -> (i32, i32) {
    %c0_i32 = arith.constant 0 : i32
    %c0_i32_0 = arith.constant 0 : i32
    %c0_i32_1 = arith.constant 0 : i32
    return %c0_i32, %c0_i32_0 : i32, i32
  }
}

</mosaic_0001>

<llo_original>
// kernel: vit_forward.11
$region0: #{vit_forward.11}
  #allocation0 [shape = 'u32[]', space=smem, size = 0x4, offset = 0x4, fixed_abs, tag = 'smem constant byte address 0x4 - core index']
  #allocation1 [shape = 'u32[72,128]{1,0:T(1,128)}', space=vmem, size = 0x9000, scoped, tag = 'internal scratch']
  %s0 = inlined_call_operand.vmem [shape: bf16[16,32], index: 0, kind: input, shape index: {}]
  %s1 = inlined_call_operand.vmem [shape: bf16[32,96], index: 1, kind: input, shape index: {}]
  %s2 = inlined_call_operand.vmem [shape: f32[1,96], index: 2, kind: input, shape index: {}]
  %s3 = inlined_call_operand.vmem [shape: bf16[16,96], index: 3, kind: output, shape index: {}]
  %s4 = sld [smem:[#allocation0]]
  $region22: #{vit_forward.11} parent=0
    _
  %s6 = ssub.s32 1, %s4
  %s7 = scalar_select 0, %s6, %s4
  // Predicated region
  $region2: #{vit_forward.11} parent=0 // pred_check
    _
  $region3: #{vit_forward.11} parent=0 // pred_check_branch
    %9 = sbr.rel (0) target = $region5
  $region4: #{vit_forward.11} parent=0 // pred_region
    _
  $region5: #{vit_forward.11} parent=0 // pred_fallthru
    _
  // Predicated region
  $region6: #{vit_forward.11} parent=0 // pred_check
    _
  $region7: #{vit_forward.11} parent=0 // pred_check_branch
    %11 = sbr.rel (0) target = $region9
  $region8: #{vit_forward.11} parent=0 // pred_region
    _
  $region9: #{vit_forward.11} parent=0 // pred_fallthru
    _
  // Predicated region
  $region10: #{vit_forward.11} parent=0 // pred_check
    _
  $region11: #{vit_forward.11} parent=0 // pred_check_branch
    %13 = sbr.rel (0) target = $region13
  $region12: #{vit_forward.11} parent=0 // pred_region
    _
  $region13: #{vit_forward.11} parent=0 // pred_fallthru
    _
  %v15 = vld [vmem:[%s0] sm:$0xf]
  %v16 = vld [vmem:[%s0 + $0x4] sm:$0xf]
  %v17 = vld [vmem:[%s1] sm:$0xf]
  %v18 = vld [vmem:[%s1 + $0x4] sm:$0xf]
  %v19 = vld [vmem:[%s1 + $0x8] sm:$0xf]
  %v20 = vld [vmem:[%s1 + $0xc] sm:$0xf]
  %v21 = vld [vmem:[%s2] sm:$0x1]
  %v23 = vperm.slane %v21, 0
  %v27 = vunpack.c.l.b16 %v15
  %v28 = vunpack.c.l.b16 %v16
  %v29 = vpack.c.b16 %v28, %v27
  %v34 = vunpack.c.l.b16 %v17
  %v35 = vunpack.c.l.b16 %v18
  %v36 = vunpack.c.l.b16 %v19
  %v37 = vunpack.c.l.b16 %v20
  %v38 = vpack.c.b16 %v35, %v34
  %v39 = vpack.c.b16 %v37, %v36
  %vm42 = vcmask 261120
  %v44 = vsel %vm42, %v29, 0
  %46 = vmatpush.bf16.msra.mxu0 0
  %47 = vmatpush.bf16.msra.mxu0 0
  %48 = vmatpush.bf16.msra.mxu0 0
  %49 = vmatpush.bf16.msra.mxu0 0
  %50 = vmatpush.bf16.msra.mxu0 0
  %51 = vmatpush.bf16.msra.mxu0 0
  %52 = vmatpush.bf16.msra.mxu0 %v39
  %53 = vmatpush.bf16.msra.mxu0 %v38
  %54 = vmatmul.bf16.gmra.mxu0 %v44
  %v55 = vpop.f32.mrf.mxu0
  %v56 = vadd.f32 %v23, %v55
  %v57 = vpop.f32.mrf.mxu0
  %v58 = vadd.f32 %v23, %v57
  %59 = vdwg.mxu0
  %v60 = vpack.c.bf16 %v56, %v56
  %v61 = vpack.c.bf16 %v58, %v58
  %vm62 = vcmask 781312
  %63 = vst.msk [vmem:[%s3] sm:$0xf] %vm62, %v60
  %64 = vst.msk [vmem:[%s3 + $0x4] sm:$0xf] %vm62, %v61
  // Predicated region
  $region14: #{vit_forward.11} parent=0 // pred_check
    _
  $region15: #{vit_forward.11} parent=0 // pred_check_branch
    %66 = sbr.rel (0) target = $region17
  $region16: #{vit_forward.11} parent=0 // pred_region
    _
  $region17: #{vit_forward.11} parent=0 // pred_fallthru
    _
  // Predicated region
  $region18: #{vit_forward.11} parent=0 // pred_check
    _
  $region19: #{vit_forward.11} parent=0 // pred_check_branch
    %68 = sbr.rel (0) target = $region21
  $region20: #{vit_forward.11} parent=0 // pred_region
    _
  $region21: #{vit_forward.11} parent=0 // pred_fallthru
    _

// kernel: vit_forward.10
$region0: #{vit_forward.10}
  #allocation0 [shape = 'u32[]', space=smem, size = 0x4, offset = 0x4, fixed_abs, tag = 'smem constant byte address 0x4 - core index']
  #allocation1 [shape = 'u32[72,128]{1,0:T(1,128)}', space=vmem, size = 0x9000, scoped, tag = 'internal scratch']
  %s0 = inlined_call_operand.vmem [shape: bf16[8,192], index: 0, kind: input, shape index: {}]
  %s1 = inlined_call_operand.vmem [shape: bf16[192,32], index: 1, kind: input, shape index: {}]
  %s2 = inlined_call_operand.vmem [shape: f32[1,32], index: 2, kind: input, shape index: {}]
  %s3 = inlined_call_operand.vmem [shape: bf16[8,32], index: 3, kind: output, shape index: {}]
  %s4 = sld [smem:[#allocation0]]
  $region22: #{vit_forward.10} parent=0
    _
  %s6 = ssub.s32 1, %s4
  %s7 = scalar_select 0, %s6, %s4
  // Predicated region
  $region2: #{vit_forward.10} parent=0 // pred_check
    _
  $region3: #{vit_forward.10} parent=0 // pred_check_branch
    %9 = sbr.rel (0) target = $region5
  $region4: #{vit_forward.10} parent=0 // pred_region
    _
  $region5: #{vit_forward.10} parent=0 // pred_fallthru
    _
  // Predicated region
  $region6: #{vit_forward.10} parent=0 // pred_check
    _
  $region7: #{vit_forward.10} parent=0 // pred_check_branch
    %11 = sbr.rel (0) target = $region9
  $region8: #{vit_forward.10} parent=0 // pred_region
    _
  $region9: #{vit_forward.10} parent=0 // pred_fallthru
    _
  // Predicated region
  $region10: #{vit_forward.10} parent=0 // pred_check
    _
  $region11: #{vit_forward.10} parent=0 // pred_check_branch
    %13 = sbr.rel (0) target = $region13
  $region12: #{vit_forward.10} parent=0 // pred_region
    _
  $region13: #{vit_forward.10} parent=0 // pred_fallthru
    _
  %v15 = vld [vmem:[%s0] sm:$0xff]
  %v16 = vld [vmem:[%s1] sm:$0xf]
  %v17 = vld [vmem:[%s1 + $0x4] sm:$0xf]
  %v18 = vld [vmem:[%s1 + $0x8] sm:$0xf]
  %v19 = vld [vmem:[%s1 + $0xc] sm:$0xf]
  %v20 = vld [vmem:[%s1 + $0x10] sm:$0xf]
  %v21 = vld [vmem:[%s1 + $0x14] sm:$0xf]
  %v22 = vld [vmem:[%s1 + $0x18] sm:$0xf]
  %v23 = vld [vmem:[%s1 + $0x1c] sm:$0xf]
  %v24 = vld [vmem:[%s1 + $0x20] sm:$0xf]
  %v25 = vld [vmem:[%s1 + $0x24] sm:$0xf]
  %v26 = vld [vmem:[%s1 + $0x28] sm:$0xf]
  %v27 = vld [vmem:[%s1 + $0x2c] sm:$0xf]
  %v28 = vld [vmem:[%s1 + $0x30] sm:$0xf]
  %v29 = vld [vmem:[%s1 + $0x34] sm:$0xf]
  %v30 = vld [vmem:[%s1 + $0x38] sm:$0xf]
  %v31 = vld [vmem:[%s1 + $0x3c] sm:$0xf]
  %v32 = vld [vmem:[%s1 + $0x40] sm:$0xf]
  %v33 = vld [vmem:[%s1 + $0x44] sm:$0xf]
  %v34 = vld [vmem:[%s1 + $0x48] sm:$0xf]
  %v35 = vld [vmem:[%s1 + $0x4c] sm:$0xf]
  %v36 = vld [vmem:[%s1 + $0x50] sm:$0xf]
  %v37 = vld [vmem:[%s1 + $0x54] sm:$0xf]
  %v38 = vld [vmem:[%s1 + $0x58] sm:$0xf]
  %v39 = vld [vmem:[%s1 + $0x5c] sm:$0xf]
  %v40 = vld [vmem:[%s2] sm:$0x1]
  %v42 = vperm.slane %v40, 0
  %v45 = vunpack.c.l.b16 %v15
  %v46 = vunpack.c.h.b16 %v15
  %v47 = vpack.c.b16 %v45, %v45
  %v48 = vpack.c.b16 %v46, %v46
  %v74 = vunpack.c.l.b16 %v16
  %v75 = vunpack.c.l.b16 %v17
  %v76 = vunpack.c.l.b16 %v18
  %v77 = vunpack.c.l.b16 %v19
  %v78 = vunpack.c.l.b16 %v20
  %v79 = vunpack.c.l.b16 %v21
  %v80 = vunpack.c.l.b16 %v22
  %v81 = vunpack.c.l.b16 %v23
  %v82 = vunpack.c.l.b16 %v24
  %v83 = vunpack.c.l.b16 %v25
  %v84 = vunpack.c.l.b16 %v26
  %v85 = vunpack.c.l.b16 %v27
  %v86 = vunpack.c.l.b16 %v28
  %v87 = vunpack.c.l.b16 %v29
  %v88 = vunpack.c.l.b16 %v30
  %v89 = vunpack.c.l.b16 %v31
  %v90 = vunpack.c.l.b16 %v32
  %v91 = vunpack.c.l.b16 %v33
  %v92 = vunpack.c.l.b16 %v34
  %v93 = vunpack.c.l.b16 %v35
  %v94 = vunpack.c.l.b16 %v36
  %v95 = vunpack.c.l.b16 %v37
  %v96 = vunpack.c.l.b16 %v38
  %v97 = vunpack.c.l.b16 %v39
  %v98 = vpack.c.b16 %v75, %v74
  %v99 = vpack.c.b16 %v77, %v76
  %v100 = vpack.c.b16 %v79, %v78
  %v101 = vpack.c.b16 %v81, %v80
  %v102 = vpack.c.b16 %v83, %v82
  %v103 = vpack.c.b16 %v85, %v84
  %v104 = vpack.c.b16 %v87, %v86
  %v105 = vpack.c.b16 %v89, %v88
  %v106 = vpack.c.b16 %v91, %v90
  %v107 = vpack.c.b16 %v93, %v92
  %v108 = vpack.c.b16 %v95, %v94
  %v109 = vpack.c.b16 %v97, %v96
  %vm122 = vcmask 523264
  %v124 = vsel %vm122, %v48, 0
  %126 = vmatpush.bf16.msra.mxu0 %v105
  %127 = vmatpush.bf16.msra.mxu0 %v104
  %128 = vmatpush.bf16.msra.mxu0 %v103
  %129 = vmatpush.bf16.msra.mxu0 %v102
  %130 = vmatpush.bf16.msra.mxu0 %v101
  %131 = vmatpush.bf16.msra.mxu0 %v100
  %132 = vmatpush.bf16.msra.mxu0 %v99
  %133 = vmatpush.bf16.msra.mxu0 %v98
  %134 = vmatmul.bf16.gmra.mxu0 %v47
  %v135 = vpop.f32.mrf.mxu0
  %v136 = vadd.f32 %v42, %v135
  %v137 = vpop.f32.mrf.mxu0
  %138 = vdwg.mxu0
  %139 = vmatpush.bf16.msra.mxu0 0
  %140 = vmatpush.bf16.msra.mxu0 0
  %141 = vmatpush.bf16.msra.mxu0 0
  %142 = vmatpush.bf16.msra.mxu0 0
  %143 = vmatpush.bf16.msra.mxu0 %v109
  %144 = vmatpush.bf16.msra.mxu0 %v108
  %145 = vmatpush.bf16.msra.mxu0 %v107
  %146 = vmatpush.bf16.msra.mxu0 %v106
  %147 = vmatmul.bf16.gmra.mxu0 %v124
  %v148 = vpop.f32.mrf.mxu0
  %v149 = vadd.f32 %v136, %v148
  %v150 = vpop.f32.mrf.mxu0
  %151 = vdwg.mxu0
  %v152 = vpack.c.bf16 %v149, %v149
  %vm153 = vcmask 257024
  %154 = vst.msk [vmem:[%s3] sm:$0xf] %vm153, %v152
  // Predicated region
  $region14: #{vit_forward.10} parent=0 // pred_check
    _
  $region15: #{vit_forward.10} parent=0 // pred_check_branch
    %156 = sbr.rel (0) target = $region17
  $region16: #{vit_forward.10} parent=0 // pred_region
    _
  $region17: #{vit_forward.10} parent=0 // pred_fallthru
    _
  // Predicated region
  $region18: #{vit_forward.10} parent=0 // pred_check
    _
  $region19: #{vit_forward.10} parent=0 // pred_check_branch
    %158 = sbr.rel (0) target = $region21
  $region20: #{vit_forward.10} parent=0 // pred_region
    _
  $region21: #{vit_forward.10} parent=0 // pred_fallthru
    _

// kernel: vit_forward.13
$region0: #{vit_forward.13}
  #allocation0 [shape = 'u32[]', space=smem, size = 0x4, offset = 0x4, fixed_abs, tag = 'smem constant byte address 0x4 - core index']
  #allocation1 [shape = 'u32[72,128]{1,0:T(1,128)}', space=vmem, size = 0x9000, scoped, tag = 'internal scratch']
  %s0 = inlined_call_operand.vmem [shape: bf16[16,32], index: 0, kind: input, shape index: {}]
  %s1 = inlined_call_operand.vmem [shape: bf16[32,32], index: 1, kind: input, shape index: {}]
  %s2 = inlined_call_operand.vmem [shape: f32[1,32], index: 2, kind: input, shape index: {}]
  %s3 = inlined_call_operand.vmem [shape: bf16[16,32], index: 3, kind: input, shape index: {}]
  %s4 = inlined_call_operand.vmem [shape: f32[1,32], index: 4, kind: input, shape index: {}]
  %s5 = inlined_call_operand.vmem [shape: f32[1,32], index: 5, kind: input, shape index: {}]
  %s6 = inlined_call_operand.vmem [shape: bf16[16,32], index: 6, kind: output, shape index: {}]
  %s7 = sld [smem:[#allocation0]]
  $region34: #{vit_forward.13} parent=0
    _
  %s9 = ssub.s32 1, %s7
  %s10 = scalar_select 0, %s9, %s7
  // Predicated region
  $region2: #{vit_forward.13} parent=0 // pred_check
    _
  $region3: #{vit_forward.13} parent=0 // pred_check_branch
    %12 = sbr.rel (0) target = $region5
  $region4: #{vit_forward.13} parent=0 // pred_region
    _
  $region5: #{vit_forward.13} parent=0 // pred_fallthru
    _
  // Predicated region
  $region6: #{vit_forward.13} parent=0 // pred_check
    _
  $region7: #{vit_forward.13} parent=0 // pred_check_branch
    %14 = sbr.rel (0) target = $region9
  $region8: #{vit_forward.13} parent=0 // pred_region
    _
  $region9: #{vit_forward.13} parent=0 // pred_fallthru
    _
  // Predicated region
  $region10: #{vit_forward.13} parent=0 // pred_check
    _
  $region11: #{vit_forward.13} parent=0 // pred_check_branch
    %16 = sbr.rel (0) target = $region13
  $region12: #{vit_forward.13} parent=0 // pred_region
    _
  $region13: #{vit_forward.13} parent=0 // pred_fallthru
    _
  // Predicated region
  $region14: #{vit_forward.13} parent=0 // pred_check
    _
  $region15: #{vit_forward.13} parent=0 // pred_check_branch
    %18 = sbr.rel (0) target = $region17
  $region16: #{vit_forward.13} parent=0 // pred_region
    _
  $region17: #{vit_forward.13} parent=0 // pred_fallthru
    _
  // Predicated region
  $region18: #{vit_forward.13} parent=0 // pred_check
    _
  $region19: #{vit_forward.13} parent=0 // pred_check_branch
    %20 = sbr.rel (0) target = $region21
  $region20: #{vit_forward.13} parent=0 // pred_region
    _
  $region21: #{vit_forward.13} parent=0 // pred_fallthru
    _
  // Predicated region
  $region22: #{vit_forward.13} parent=0 // pred_check
    _
  $region23: #{vit_forward.13} parent=0 // pred_check_branch
    %22 = sbr.rel (0) target = $region25
  $region24: #{vit_forward.13} parent=0 // pred_region
    _
  $region25: #{vit_forward.13} parent=0 // pred_fallthru
    _
  %v24 = vld [vmem:[%s0] sm:$0xf]
  %v25 = vld [vmem:[%s0 + $0x4] sm:$0xf]
  %v26 = vld [vmem:[%s1] sm:$0xf]
  %v27 = vld [vmem:[%s1 + $0x4] sm:$0xf]
  %v28 = vld [vmem:[%s1 + $0x8] sm:$0xf]
  %v29 = vld [vmem:[%s1 + $0xc] sm:$0xf]
  %v30 = vld [vmem:[%s2] sm:$0x1]
  %v32 = vperm.slane %v30, 0
  %v36 = vunpack.c.l.b16 %v24
  %v37 = vunpack.c.l.b16 %v25
  %v38 = vpack.c.b16 %v37, %v36
  %v43 = vunpack.c.l.b16 %v26
  %v44 = vunpack.c.l.b16 %v27
  %v45 = vunpack.c.l.b16 %v28
  %v46 = vunpack.c.l.b16 %v29
  %v47 = vpack.c.b16 %v44, %v43
  %v48 = vpack.c.b16 %v46, %v45
  %vm51 = vcmask 261120
  %v53 = vsel %vm51, %v38, 0
  %55 = vmatpush.bf16.msra.mxu0 0
  %56 = vmatpush.bf16.msra.mxu0 0
  %57 = vmatpush.bf16.msra.mxu0 0
  %58 = vmatpush.bf16.msra.mxu0 0
  %59 = vmatpush.bf16.msra.mxu0 0
  %60 = vmatpush.bf16.msra.mxu0 0
  %61 = vmatpush.bf16.msra.mxu0 %v48
  %62 = vmatpush.bf16.msra.mxu0 %v47
  %63 = vmatmul.bf16.gmra.mxu0 %v53
  %v64 = vpop.f32.mrf.mxu0
  %v65 = vadd.f32 %v32, %v64
  %v66 = vpop.f32.mrf.mxu0
  %v67 = vadd.f32 %v32, %v66
  %68 = vdwg.mxu0
  %v69 = vld [vmem:[%s3] sm:$0xf]
  %v70 = vld [vmem:[%s3 + $0x4] sm:$0xf]
  %v71 = vunpack.c.l.bf16 %v69
  %v72 = vunpack.c.l.bf16 %v70
  %v73 = vadd.f32 %v65, %v71
  %v74 = vadd.f32 %v67, %v72
  %v75 = vsel %vm51, %v73, 0.0
  %76 = vadd.xlane.f32.xlu0 %v75
  %v77 = vpop.xlane.xlu0 %76
  %v78 = vsel %vm51, %v74, 0.0
  %79 = vadd.xlane.f32.xlu0 %v78
  %v80 = vpop.xlane.xlu0 %79
  %v81 = vrcp.pop 32.0
  %v82 = vmul.f32 32.0, %v81
  %v83 = vsub.f32 1.0, %v82
  %v84 = vmul.f32 %v81, %v83
  %v85 = vadd.f32 %v81, %v84
  %vm86 = vweird.f32 %v81
  %v87 = vsel %vm86, %v81, %v85
  %v88 = vmul.f32 %v77, %v87
  %v89 = vmul.f32 %v80, %v87
  %v90 = vsub.f32 %v73, %v88
  %v91 = vsub.f32 %v74, %v89
  %v92 = vmul.f32 %v90, %v90
  %v93 = vmul.f32 %v91, %v91
  %v94 = vsel %vm51, %v92, 0.0
  %95 = vadd.xlane.f32.xlu0 %v94
  %v96 = vpop.xlane.xlu0 %95
  %v97 = vsel %vm51, %v93, 0.0
  %98 = vadd.xlane.f32.xlu0 %v97
  %v99 = vpop.xlane.xlu0 %98
  %v100 = vmul.f32 %v96, %v87
  %v101 = vmul.f32 %v99, %v87
  %v102 = vadd.f32 %v100, 1e-05
  %v103 = vadd.f32 %v101, 1e-05
  %v104 = vrsqrt.pop %v102
  %v105 = vmul.f32 %v104, %v102
  %v106 = vmul.f32 %v105, %v104
  %v107 = vmul.f32 0.5, %v106
  %v108 = vsub.f32 1.5, %v107
  %v109 = vmul.f32 %v104, %v108
  %vm110 = vweird.f32 %v102
  %vm111 = vweird.f32 %v104
  %vm112 = vmor %vm110, %vm111
  %v113 = vsel %vm112, %v104, %v109
  %v114 = vrsqrt.pop %v103
  %v115 = vmul.f32 %v114, %v103
  %v116 = vmul.f32 %v115, %v114
  %v117 = vmul.f32 0.5, %v116
  %v118 = vsub.f32 1.5, %v117
  %v119 = vmul.f32 %v114, %v118
  %vm120 = vweird.f32 %v103
  %vm121 = vweird.f32 %v114
  %vm122 = vmor %vm120, %vm121
  %v123 = vsel %vm122, %v114, %v119
  %v124 = vmul.f32 %v90, %v113
  %v125 = vmul.f32 %v91, %v123
  %v126 = vld [vmem:[%s4] sm:$0x1]
  %v128 = vperm.slane %v126, 0
  %v130 = vmul.f32 %v124, %v128
  %v131 = vmul.f32 %v125, %v128
  %v132 = vld [vmem:[%s5] sm:$0x1]
  %v134 = vperm.slane %v132, 0
  %v136 = vadd.f32 %v130, %v134
  %v137 = vadd.f32 %v131, %v134
  %v138 = vpack.c.bf16 %v136, %v136
  %v139 = vpack.c.bf16 %v137, %v137
  %vm140 = vcmask 257024
  %141 = vst.msk [vmem:[%s6] sm:$0xf] %vm140, %v138
  %142 = vst.msk [vmem:[%s6 + $0x4] sm:$0xf] %vm140, %v139
  // Predicated region
  $region26: #{vit_forward.13} parent=0 // pred_check
    _
  $region27: #{vit_forward.13} parent=0 // pred_check_branch
    %144 = sbr.rel (0) target = $region29
  $region28: #{vit_forward.13} parent=0 // pred_region
    _
  $region29: #{vit_forward.13} parent=0 // pred_fallthru
    _
  // Predicated region
  $region30: #{vit_forward.13} parent=0 // pred_check
    _
  $region31: #{vit_forward.13} parent=0 // pred_check_branch
    %146 = sbr.rel (0) target = $region33
  $region32: #{vit_forward.13} parent=0 // pred_region
    _
  $region33: #{vit_forward.13} parent=0 // pred_fallthru
    _

// kernel: vit_forward.14
$region0: #{vit_forward.14}
  #allocation0 [shape = 'u32[]', space=smem, size = 0x4, offset = 0x4, fixed_abs, tag = 'smem constant byte address 0x4 - core index']
  #allocation1 [shape = 'u32[72,128]{1,0:T(1,128)}', space=vmem, size = 0x9000, scoped, tag = 'internal scratch']
  #allocation2 [shape = 'f32[16,32]{1,0:T(8,128)}', space=vmem, size = 0x2000, scoped, tag = 'scratch operand']
  %s0 = inlined_call_operand.vmem [shape: bf16[16,32], index: 0, kind: input, shape index: {}]
  %s1 = inlined_call_operand.vmem [shape: bf16[32,64], index: 1, kind: input, shape index: {}]
  %s2 = inlined_call_operand.vmem [shape: f32[1,64], index: 2, kind: input, shape index: {}]
  %s3 = inlined_call_operand.vmem [shape: bf16[64,32], index: 3, kind: input, shape index: {}]
  %s4 = inlined_call_operand.vmem [shape: f32[1,32], index: 4, kind: input, shape index: {}]
  %s5 = inlined_call_operand.vmem [shape: f32[1,32], index: 5, kind: input, shape index: {}]
  %s6 = inlined_call_operand.vmem [shape: f32[1,32], index: 6, kind: input, shape index: {}]
  %s7 = inlined_call_operand.vmem [shape: bf16[16,32], index: 7, kind: output, shape index: {}]
  %s8 = sld [smem:[#allocation0]]
  $region46: #{vit_forward.14} parent=0
    _
  %s10 = ssub.s32 1, %s8
  %s11 = scalar_select 0, %s10, %s8
  // Predicated region
  $region2: #{vit_forward.14} parent=0 // pred_check
    _
  $region3: #{vit_forward.14} parent=0 // pred_check_branch
    %13 = sbr.rel (0) target = $region5
  $region4: #{vit_forward.14} parent=0 // pred_region
    _
  $region5: #{vit_forward.14} parent=0 // pred_fallthru
    _
  // Predicated region
  $region6: #{vit_forward.14} parent=0 // pred_check
    _
  $region7: #{vit_forward.14} parent=0 // pred_check_branch
    %15 = sbr.rel (0) target = $region9
  $region8: #{vit_forward.14} parent=0 // pred_region
    _
  $region9: #{vit_forward.14} parent=0 // pred_fallthru
    _
  // Predicated region
  $region10: #{vit_forward.14} parent=0 // pred_check
    _
  $region11: #{vit_forward.14} parent=0 // pred_check_branch
    %17 = sbr.rel (0) target = $region13
  $region12: #{vit_forward.14} parent=0 // pred_region
    _
  $region13: #{vit_forward.14} parent=0 // pred_fallthru
    _
  // Predicated region
  $region14: #{vit_forward.14} parent=0 // pred_check
    _
  $region15: #{vit_forward.14} parent=0 // pred_check_branch
    %19 = sbr.rel (0) target = $region17
  $region16: #{vit_forward.14} parent=0 // pred_region
    _
  $region17: #{vit_forward.14} parent=0 // pred_fallthru
    _
  // Predicated region
  $region18: #{vit_forward.14} parent=0 // pred_check
    _
  $region19: #{vit_forward.14} parent=0 // pred_check_branch
    %21 = sbr.rel (0) target = $region21
  $region20: #{vit_forward.14} parent=0 // pred_region
    _
  $region21: #{vit_forward.14} parent=0 // pred_fallthru
    _
  // Predicated region
  $region22: #{vit_forward.14} parent=0 // pred_check
    _
  $region23: #{vit_forward.14} parent=0 // pred_check_branch
    %23 = sbr.rel (0) target = $region25
  $region24: #{vit_forward.14} parent=0 // pred_region
    _
  $region25: #{vit_forward.14} parent=0 // pred_fallthru
    _
  // Predicated region
  $region26: #{vit_forward.14} parent=0 // pred_check
    _
  $region27: #{vit_forward.14} parent=0 // pred_check_branch
    %25 = sbr.rel (0) target = $region29
  $region28: #{vit_forward.14} parent=0 // pred_region
    _
  $region29: #{vit_forward.14} parent=0 // pred_fallthru
    _
  %p27 = scmp.eq.s32.totalorder 0, 0
  // Predicated region
  $region30: #{vit_forward.14} parent=0 // pred_check
    %p28 = pneg %p27
  $region31: #{vit_forward.14} parent=0 // pred_check_branch
    %30 = sbr.rel (%p28) target = $region33
  $region32: #{vit_forward.14} parent=0 // pred_region
    %vm31 = vcmask 261120
    %32 = vst.msk [vmem:[#allocation2] sm:$0xff] %vm31, 0.0
    %33 = vst.msk [vmem:[#allocation2 + $0x8] sm:$0xff] %vm31, 0.0
  $region33: #{vit_forward.14} parent=0 // pred_fallthru
    _
  %v34 = vld [vmem:[%s0] sm:$0xf]
  %v35 = vld [vmem:[%s0 + $0x4] sm:$0xf]
  %v36 = vld [vmem:[%s1] sm:$0xf]
  %v37 = vld [vmem:[%s1 + $0x4] sm:$0xf]
  %v38 = vld [vmem:[%s1 + $0x8] sm:$0xf]
  %v39 = vld [vmem:[%s1 + $0xc] sm:$0xf]
  %v40 = vld [vmem:[%s2] sm:$0x1]
  %v42 = vperm.slane %v40, 0
  %v46 = vunpack.c.l.b16 %v34
  %v47 = vunpack.c.l.b16 %v35
  %v48 = vpack.c.b16 %v47, %v46
  %v53 = vunpack.c.l.b16 %v36
  %v54 = vunpack.c.l.b16 %v37
  %v55 = vunpack.c.l.b16 %v38
  %v56 = vunpack.c.l.b16 %v39
  %v57 = vpack.c.b16 %v54, %v53
  %v58 = vpack.c.b16 %v56, %v55
  %vm61 = vcmask 261120
  %v63 = vsel %vm61, %v48, 0
  %65 = vmatpush.bf16.msra.mxu0 0
  %66 = vmatpush.bf16.msra.mxu0 0
  %67 = vmatpush.bf16.msra.mxu0 0
  %68 = vmatpush.bf16.msra.mxu0 0
  %69 = vmatpush.bf16.msra.mxu0 0
  %70 = vmatpush.bf16.msra.mxu0 0
  %71 = vmatpush.bf16.msra.mxu0 %v58
  %72 = vmatpush.bf16.msra.mxu0 %v57
  %73 = vmatmul.bf16.gmra.mxu0 %v63
  %v74 = vpop.f32.mrf.mxu0
  %v75 = vadd.f32 %v42, %v74
  %v76 = vpop.f32.mrf.mxu0
  %v77 = vadd.f32 %v42, %v76
  %78 = vdwg.mxu0
  %v79 = vmax.f32 %v75, 0.0
  %v80 = vmax.f32 %v77, 0.0
  %v81 = vld [vmem:[#allocation2] sm:$0xff]
  %v82 = vld [vmem:[#allocation2 + $0x8] sm:$0xff]
  %v83 = vpack.c.bf16 %v80, %v79
  %v84 = vld [vmem:[%s3] sm:$0xf]
  %v85 = vld [vmem:[%s3 + $0x4] sm:$0xf]
  %v86 = vld [vmem:[%s3 + $0x8] sm:$0xf]
  %v87 = vld [vmem:[%s3 + $0xc] sm:$0xf]
  %v88 = vld [vmem:[%s3 + $0x10] sm:$0xf]
  %v89 = vld [vmem:[%s3 + $0x14] sm:$0xf]
  %v90 = vld [vmem:[%s3 + $0x18] sm:$0xf]
  %v91 = vld [vmem:[%s3 + $0x1c] sm:$0xf]
  %v100 = vunpack.c.l.b16 %v84
  %v101 = vunpack.c.l.b16 %v85
  %v102 = vunpack.c.l.b16 %v86
  %v103 = vunpack.c.l.b16 %v87
  %v104 = vunpack.c.l.b16 %v88
  %v105 = vunpack.c.l.b16 %v89
  %v106 = vunpack.c.l.b16 %v90
  %v107 = vunpack.c.l.b16 %v91
  %v108 = vpack.c.b16 %v101, %v100
  %v109 = vpack.c.b16 %v103, %v102
  %v110 = vpack.c.b16 %v105, %v104
  %v111 = vpack.c.b16 %v107, %v106
  %vm116 = vcmask 523264
  %v118 = vsel %vm116, %v83, 0
  %120 = vmatpush.bf16.msra.mxu0 0
  %121 = vmatpush.bf16.msra.mxu0 0
  %122 = vmatpush.bf16.msra.mxu0 0
  %123 = vmatpush.bf16.msra.mxu0 0
  %124 = vmatpush.bf16.msra.mxu0 %v111
  %125 = vmatpush.bf16.msra.mxu0 %v110
  %126 = vmatpush.bf16.msra.mxu0 %v109
  %127 = vmatpush.bf16.msra.mxu0 %v108
  %128 = vmatmul.bf16.gmra.mxu0 %v118
  %v129 = vpop.f32.mrf.mxu0
  %v130 = vadd.f32 0.0, %v129
  %v131 = vpop.f32.mrf.mxu0
  %v132 = vadd.f32 0.0, %v131
  %133 = vdwg.mxu0
  %v134 = vadd.f32 %v81, %v130
  %v135 = vadd.f32 %v82, %v132
  %136 = vst.msk [vmem:[#allocation2] sm:$0xff] %vm61, %v134
  %137 = vst.msk [vmem:[#allocation2 + $0x8] sm:$0xff] %vm61, %v135
  // Predicated region
  $region34: #{vit_forward.14} parent=0 // pred_check
    %p138 = pneg %p27
  $region35: #{vit_forward.14} parent=0 // pred_check_branch
    %140 = sbr.rel (%p138) target = $region37
  $region36: #{vit_forward.14} parent=0 // pred_region
    %v141 = vld [vmem:[#allocation2] sm:$0xff]
    %v142 = vld [vmem:[#allocation2 + $0x8] sm:$0xff]
    %v143 = vld [vmem:[%s4] sm:$0x1]
    %v145 = vperm.slane %v143, 0
    %v147 = vadd.f32 %v141, %v145
    %v148 = vadd.f32 %v142, %v145
    %v149 = vld [vmem:[%s0] sm:$0xf]
    %v150 = vld [vmem:[%s0 + $0x4] sm:$0xf]
    %v151 = vunpack.c.l.bf16 %v149
    %v152 = vunpack.c.l.bf16 %v150
    %v153 = vadd.f32 %v147, %v151
    %v154 = vadd.f32 %v148, %v152
    %v155 = vsel %vm61, %v153, 0.0
    %156 = vadd.xlane.f32.xlu0 %v155
    %v157 = vpop.xlane.xlu0 %156
    %v158 = vsel %vm61, %v154, 0.0
    %159 = vadd.xlane.f32.xlu0 %v158
    %v160 = vpop.xlane.xlu0 %159
    %v161 = vrcp.pop 32.0
    %v162 = vmul.f32 32.0, %v161
    %v163 = vsub.f32 1.0, %v162
    %v164 = vmul.f32 %v161, %v163
    %v165 = vadd.f32 %v161, %v164
    %vm166 = vweird.f32 %v161
    %v167 = vsel %vm166, %v161, %v165
    %v168 = vmul.f32 %v157, %v167
    %v169 = vmul.f32 %v160, %v167
    %v170 = vsub.f32 %v153, %v168
    %v171 = vsub.f32 %v154, %v169
    %v172 = vmul.f32 %v170, %v170
    %v173 = vmul.f32 %v171, %v171
    %v174 = vsel %vm61, %v172, 0.0
    %175 = vadd.xlane.f32.xlu0 %v174
    %v176 = vpop.xlane.xlu0 %175
    %v177 = vsel %vm61, %v173, 0.0
    %178 = vadd.xlane.f32.xlu0 %v177
    %v179 = vpop.xlane.xlu0 %178
    %v180 = vmul.f32 %v176, %v167
    %v181 = vmul.f32 %v179, %v167
    %v182 = vadd.f32 %v180, 1e-05
    %v183 = vadd.f32 %v181, 1e-05
    %v184 = vrsqrt.pop %v182
    %v185 = vmul.f32 %v184, %v182
    %v186 = vmul.f32 %v185, %v184
    %v187 = vmul.f32 0.5, %v186
    %v188 = vsub.f32 1.5, %v187
    %v189 = vmul.f32 %v184, %v188
    %vm190 = vweird.f32 %v182
    %vm191 = vweird.f32 %v184
    %vm192 = vmor %vm190, %vm191
    %v193 = vsel %vm192, %v184, %v189
    %v194 = vrsqrt.pop %v183
    %v195 = vmul.f32 %v194, %v183
    %v196 = vmul.f32 %v195, %v194
    %v197 = vmul.f32 0.5, %v196
    %v198 = vsub.f32 1.5, %v197
    %v199 = vmul.f32 %v194, %v198
    %vm200 = vweird.f32 %v183
    %vm201 = vweird.f32 %v194
    %vm202 = vmor %vm200, %vm201
    %v203 = vsel %vm202, %v194, %v199
    %v204 = vmul.f32 %v170, %v193
    %v205 = vmul.f32 %v171, %v203
    %v206 = vld [vmem:[%s5] sm:$0x1]
    %v208 = vperm.slane %v206, 0
    %v210 = vmul.f32 %v204, %v208
    %v211 = vmul.f32 %v205, %v208
    %v212 = vld [vmem:[%s6] sm:$0x1]
    %v214 = vperm.slane %v212, 0
    %v216 = vadd.f32 %v210, %v214
    %v217 = vadd.f32 %v211, %v214
    %v218 = vpack.c.bf16 %v216, %v216
    %v219 = vpack.c.bf16 %v217, %v217
    %vm220 = vcmask 257024
    %221 = vst.msk [vmem:[%s7] sm:$0xf] %vm220, %v218
    %222 = vst.msk [vmem:[%s7 + $0x4] sm:$0xf] %vm220, %v219
  $region37: #{vit_forward.14} parent=0 // pred_fallthru
    _
  // Predicated region
  $region38: #{vit_forward.14} parent=0 // pred_check
    _
  $region39: #{vit_forward.14} parent=0 // pred_check_branch
    %224 = sbr.rel (0) target = $region41
  $region40: #{vit_forward.14} parent=0 // pred_region
    _
  $region41: #{vit_forward.14} parent=0 // pred_fallthru
    _
  // Predicated region
  $region42: #{vit_forward.14} parent=0 // pred_check
    _
  $region43: #{vit_forward.14} parent=0 // pred_check_branch
    %226 = sbr.rel (0) target = $region45
  $region44: #{vit_forward.14} parent=0 // pred_region
    _
  $region45: #{vit_forward.14} parent=0 // pred_fallthru
    _

// kernel: vit_forward.19
$region0: #{vit_forward.19}
  #allocation0 [shape = 'u32[]', space=smem, size = 0x4, offset = 0x4, fixed_abs, tag = 'smem constant byte address 0x4 - core index']
  #allocation1 [shape = 'u32[72,128]{1,0:T(1,128)}', space=vmem, size = 0x9000, scoped, tag = 'internal scratch']
  %s0 = inlined_call_operand.vmem [shape: bf16[8,32], index: 0, kind: input, shape index: {}]
  %s1 = inlined_call_operand.vmem [shape: f32[1,32], index: 1, kind: input, shape index: {}]
  %s2 = inlined_call_operand.vmem [shape: f32[1,32], index: 2, kind: input, shape index: {}]
  %s3 = inlined_call_operand.vmem [shape: bf16[32,10], index: 3, kind: input, shape index: {}]
  %s4 = inlined_call_operand.vmem [shape: f32[1,10], index: 4, kind: input, shape index: {}]
  %s5 = inlined_call_operand.vmem [shape: f32[8,10], index: 5, kind: output, shape index: {}]
  %s6 = sld [smem:[#allocation0]]
  $region30: #{vit_forward.19} parent=0
    _
  %s8 = ssub.s32 1, %s6
  %s9 = scalar_select 0, %s8, %s6
  // Predicated region
  $region2: #{vit_forward.19} parent=0 // pred_check
    _
  $region3: #{vit_forward.19} parent=0 // pred_check_branch
    %11 = sbr.rel (0) target = $region5
  $region4: #{vit_forward.19} parent=0 // pred_region
    _
  $region5: #{vit_forward.19} parent=0 // pred_fallthru
    _
  // Predicated region
  $region6: #{vit_forward.19} parent=0 // pred_check
    _
  $region7: #{vit_forward.19} parent=0 // pred_check_branch
    %13 = sbr.rel (0) target = $region9
  $region8: #{vit_forward.19} parent=0 // pred_region
    _
  $region9: #{vit_forward.19} parent=0 // pred_fallthru
    _
  // Predicated region
  $region10: #{vit_forward.19} parent=0 // pred_check
    _
  $region11: #{vit_forward.19} parent=0 // pred_check_branch
    %15 = sbr.rel (0) target = $region13
  $region12: #{vit_forward.19} parent=0 // pred_region
    _
  $region13: #{vit_forward.19} parent=0 // pred_fallthru
    _
  // Predicated region
  $region14: #{vit_forward.19} parent=0 // pred_check
    _
  $region15: #{vit_forward.19} parent=0 // pred_check_branch
    %17 = sbr.rel (0) target = $region17
  $region16: #{vit_forward.19} parent=0 // pred_region
    _
  $region17: #{vit_forward.19} parent=0 // pred_fallthru
    _
  // Predicated region
  $region18: #{vit_forward.19} parent=0 // pred_check
    _
  $region19: #{vit_forward.19} parent=0 // pred_check_branch
    %19 = sbr.rel (0) target = $region21
  $region20: #{vit_forward.19} parent=0 // pred_region
    _
  $region21: #{vit_forward.19} parent=0 // pred_fallthru
    _
  %v21 = vld [vmem:[%s0] sm:$0xf]
  %v22 = vunpack.c.l.bf16 %v21
  %vm23 = vcmask 261120
  %v24 = vsel %vm23, %v22, 0.0
  %25 = vadd.xlane.f32.xlu0 %v24
  %v26 = vpop.xlane.xlu0 %25
  %v27 = vrcp.pop 32.0
  %v28 = vmul.f32 32.0, %v27
  %v29 = vsub.f32 1.0, %v28
  %v30 = vmul.f32 %v27, %v29
  %v31 = vadd.f32 %v27, %v30
  %vm32 = vweird.f32 %v27
  %v33 = vsel %vm32, %v27, %v31
  %v34 = vmul.f32 %v26, %v33
  %v35 = vsub.f32 %v22, %v34
  %v36 = vmul.f32 %v35, %v35
  %v37 = vsel %vm23, %v36, 0.0
  %38 = vadd.xlane.f32.xlu0 %v37
  %v39 = vpop.xlane.xlu0 %38
  %v40 = vmul.f32 %v39, %v33
  %v41 = vadd.f32 %v40, 1e-05
  %v42 = vrsqrt.pop %v41
  %v43 = vmul.f32 %v42, %v41
  %v44 = vmul.f32 %v43, %v42
  %v45 = vmul.f32 0.5, %v44
  %v46 = vsub.f32 1.5, %v45
  %v47 = vmul.f32 %v42, %v46
  %vm48 = vweird.f32 %v41
  %vm49 = vweird.f32 %v42
  %vm50 = vmor %vm48, %vm49
  %v51 = vsel %vm50, %v42, %v47
  %v52 = vmul.f32 %v35, %v51
  %v53 = vld [vmem:[%s1] sm:$0x1]
  %v55 = vperm.slane %v53, 0
  %v57 = vmul.f32 %v52, %v55
  %v58 = vld [vmem:[%s2] sm:$0x1]
  %v60 = vperm.slane %v58, 0
  %v62 = vadd.f32 %v57, %v60
  %v63 = vpack.c.bf16 %v62, %v62
  %v64 = vld [vmem:[%s3] sm:$0xf]
  %v65 = vld [vmem:[%s3 + $0x4] sm:$0xf]
  %v66 = vld [vmem:[%s3 + $0x8] sm:$0xf]
  %v67 = vld [vmem:[%s3 + $0xc] sm:$0xf]
  %v68 = vld [vmem:[%s4] sm:$0x1]
  %v70 = vperm.slane %v68, 0
  %v76 = vunpack.c.l.b16 %v64
  %v77 = vunpack.c.l.b16 %v65
  %v78 = vunpack.c.l.b16 %v66
  %v79 = vunpack.c.l.b16 %v67
  %v80 = vpack.c.b16 %v77, %v76
  %v81 = vpack.c.b16 %v79, %v78
  %v85 = vsel %vm23, %v63, 0
  %87 = vmatpush.bf16.msra.mxu0 0
  %88 = vmatpush.bf16.msra.mxu0 0
  %89 = vmatpush.bf16.msra.mxu0 0
  %90 = vmatpush.bf16.msra.mxu0 0
  %91 = vmatpush.bf16.msra.mxu0 0
  %92 = vmatpush.bf16.msra.mxu0 0
  %93 = vmatpush.bf16.msra.mxu0 %v81
  %94 = vmatpush.bf16.msra.mxu0 %v80
  %95 = vmatmul.bf16.gmra.mxu0 %v85
  %v96 = vpop.f32.mrf.mxu0
  %v97 = vadd.f32 %v70, %v96
  %v98 = vpop.f32.mrf.mxu0
  %99 = vdwg.mxu0
  %vm100 = vcmask 80896
  %101 = vst.msk [vmem:[%s5] sm:$0xff] %vm100, %v97
  // Predicated region
  $region22: #{vit_forward.19} parent=0 // pred_check
    _
  $region23: #{vit_forward.19} parent=0 // pred_check_branch
    %103 = sbr.rel (0) target = $region25
  $region24: #{vit_forward.19} parent=0 // pred_region
    _
  $region25: #{vit_forward.19} parent=0 // pred_fallthru
    _
  // Predicated region
  $region26: #{vit_forward.19} parent=0 // pred_check
    _
  $region27: #{vit_forward.19} parent=0 // pred_check_branch
    %105 = sbr.rel (0) target = $region29
  $region28: #{vit_forward.19} parent=0 // pred_region
    _
  $region29: #{vit_forward.19} parent=0 // pred_fallthru
    _

// kernel: vit_forward.12
$region0: #{vit_forward.12}
  #allocation0 [shape = 'u32[]', space=smem, size = 0x4, offset = 0x4, fixed_abs, tag = 'smem constant byte address 0x4 - core index']
  #allocation1 [shape = 'u32[72,128]{1,0:T(1,128)}', space=vmem, size = 0x9000, scoped, tag = 'internal scratch']
  %s0 = inlined_call_operand.vmem [shape: bf16[8,2,96], index: 0, kind: input, shape index: {}]
  %s1 = inlined_call_operand.vmem [shape: bf16[8,2,32], index: 1, kind: output, shape index: {}]
  %s2 = sld [smem:[#allocation0]]
  $region14: #{vit_forward.12} parent=0
    _
  %s4 = ssub.s32 1, %s2
  %s5 = scalar_select 0, %s4, %s2
  // Predicated region
  $region2: #{vit_forward.12} parent=0 // pred_check
    _
  $region3: #{vit_forward.12} parent=0 // pred_check_branch
    %7 = sbr.rel (0) target = $region5
  $region4: #{vit_forward.12} parent=0 // pred_region
    _
  $region5: #{vit_forward.12} parent=0 // pred_fallthru
    _
  %v9 = vld [vmem:[%s0] sm:$0x1]
  %v10 = vld [vmem:[%s0 + $0x1] sm:$0x1]
  %v11 = vld [vmem:[%s0 + $0x2] sm:$0x1]
  %v12 = vld [vmem:[%s0 + $0x3] sm:$0x1]
  %v13 = vld [vmem:[%s0 + $0x4] sm:$0x1]
  %v14 = vld [vmem:[%s0 + $0x5] sm:$0x1]
  %v15 = vld [vmem:[%s0 + $0x6] sm:$0x1]
  %v16 = vld [vmem:[%s0 + $0x7] sm:$0x1]
  %18 = vst [vmem:[#allocation1] ss:$9 sm:$0xff] %v9
  %v19 = vld [vmem:[#allocation1] sm:$0xff]
  %21 = vrot.lane.b32.xlu0 %v19, 96
  %v22 = vpop.permute.xlu0 %21
  %vm23 = vcmask 64512
  %v24 = vsel %vm23, %v9, 0
  %v27 = vsel %vm23, %v22, 0
  %29 = vmatpush.bf16.xpose.msra.mxu0 0
  %30 = vmatpush.bf16.xpose.msra.mxu0 0
  %31 = vmatpush.bf16.xpose.msra.mxu0 0
  %32 = vmatpush.bf16.xpose.msra.mxu0 0
  %33 = vmatpush.bf16.xpose.msra.mxu0 0
  %34 = vmatpush.bf16.xpose.msra.mxu0 0
  %35 = vmatpush.bf16.xpose.msra.mxu0 0
  %36 = vmatpush.bf16.xpose.msra.mxu0 %v27
  %37 = vmatmul.bf16.gmra.mxu0 %v24
  %v38 = vpop.f32.mrf.mxu0
  %v39 = vadd.f32 0.0, %v38
  %v40 = vpop.f32.mrf.mxu0
  %41 = vdwg.mxu0
  %43 = vst [vmem:[#allocation1] ss:$9 sm:$0xff] %v10
  %v44 = vld [vmem:[#allocation1] sm:$0xff]
  %46 = vrot.lane.b32.xlu0 %v44, 96
  %v47 = vpop.permute.xlu0 %46
  %v48 = vsel %vm23, %v10, 0
  %v51 = vsel %vm23, %v47, 0
  %53 = vmatpush.bf16.xpose.msra.mxu0 0
  %54 = vmatpush.bf16.xpose.msra.mxu0 0
  %55 = vmatpush.bf16.xpose.msra.mxu0 0
  %56 = vmatpush.bf16.xpose.msra.mxu0 0
  %57 = vmatpush.bf16.xpose.msra.mxu0 0
  %58 = vmatpush.bf16.xpose.msra.mxu0 0
  %59 = vmatpush.bf16.xpose.msra.mxu0 0
  %60 = vmatpush.bf16.xpose.msra.mxu0 %v51
  %61 = vmatmul.bf16.gmra.mxu0 %v48
  %v62 = vpop.f32.mrf.mxu0
  %v63 = vadd.f32 0.0, %v62
  %v64 = vpop.f32.mrf.mxu0
  %65 = vdwg.mxu0
  %67 = vst [vmem:[#allocation1] ss:$9 sm:$0xff] %v11
  %v68 = vld [vmem:[#allocation1] sm:$0xff]
  %70 = vrot.lane.b32.xlu0 %v68, 96
  %v71 = vpop.permute.xlu0 %70
  %v72 = vsel %vm23, %v11, 0
  %v75 = vsel %vm23, %v71, 0
  %77 = vmatpush.bf16.xpose.msra.mxu0 0
  %78 = vmatpush.bf16.xpose.msra.mxu0 0
  %79 = vmatpush.bf16.xpose.msra.mxu0 0
  %80 = vmatpush.bf16.xpose.msra.mxu0 0
  %81 = vmatpush.bf16.xpose.msra.mxu0 0
  %82 = vmatpush.bf16.xpose.msra.mxu0 0
  %83 = vmatpush.bf16.xpose.msra.mxu0 0
  %84 = vmatpush.bf16.xpose.msra.mxu0 %v75
  %85 = vmatmul.bf16.gmra.mxu0 %v72
  %v86 = vpop.f32.mrf.mxu0
  %v87 = vadd.f32 0.0, %v86
  %v88 = vpop.f32.mrf.mxu0
  %89 = vdwg.mxu0
  %91 = vst [vmem:[#allocation1] ss:$9 sm:$0xff] %v12
  %v92 = vld [vmem:[#allocation1] sm:$0xff]
  %94 = vrot.lane.b32.xlu0 %v92, 96
  %v95 = vpop.permute.xlu0 %94
  %v96 = vsel %vm23, %v12, 0
  %v99 = vsel %vm23, %v95, 0
  %101 = vmatpush.bf16.xpose.msra.mxu0 0
  %102 = vmatpush.bf16.xpose.msra.mxu0 0
  %103 = vmatpush.bf16.xpose.msra.mxu0 0
  %104 = vmatpush.bf16.xpose.msra.mxu0 0
  %105 = vmatpush.bf16.xpose.msra.mxu0 0
  %106 = vmatpush.bf16.xpose.msra.mxu0 0
  %107 = vmatpush.bf16.xpose.msra.mxu0 0
  %108 = vmatpush.bf16.xpose.msra.mxu0 %v99
  %109 = vmatmul.bf16.gmra.mxu0 %v96
  %v110 = vpop.f32.mrf.mxu0
  %v111 = vadd.f32 0.0, %v110
  %v112 = vpop.f32.mrf.mxu0
  %113 = vdwg.mxu0
  %115 = vst [vmem:[#allocation1] ss:$9 sm:$0xff] %v13
  %v116 = vld [vmem:[#allocation1] sm:$0xff]
  %118 = vrot.lane.b32.xlu0 %v116, 96
  %v119 = vpop.permute.xlu0 %118
  %v120 = vsel %vm23, %v13, 0
  %v123 = vsel %vm23, %v119, 0
  %125 = vmatpush.bf16.xpose.msra.mxu0 0
  %126 = vmatpush.bf16.xpose.msra.mxu0 0
  %127 = vmatpush.bf16.xpose.msra.mxu0 0
  %128 = vmatpush.bf16.xpose.msra.mxu0 0
  %129 = vmatpush.bf16.xpose.msra.mxu0 0
  %130 = vmatpush.bf16.xpose.msra.mxu0 0
  %131 = vmatpush.bf16.xpose.msra.mxu0 0
  %132 = vmatpush.bf16.xpose.msra.mxu0 %v123
  %133 = vmatmul.bf16.gmra.mxu0 %v120
  %v134 = vpop.f32.mrf.mxu0
  %v135 = vadd.f32 0.0, %v134
  %v136 = vpop.f32.mrf.mxu0
  %137 = vdwg.mxu0
  %139 = vst [vmem:[#allocation1] ss:$9 sm:$0xff] %v14
  %v140 = vld [vmem:[#allocation1] sm:$0xff]
  %142 = vrot.lane.b32.xlu0 %v140, 96
  %v143 = vpop.permute.xlu0 %142
  %v144 = vsel %vm23, %v14, 0
  %v147 = vsel %vm23, %v143, 0
  %149 = vmatpush.bf16.xpose.msra.mxu0 0
  %150 = vmatpush.bf16.xpose.msra.mxu0 0
  %151 = vmatpush.bf16.xpose.msra.mxu0 0
  %152 = vmatpush.bf16.xpose.msra.mxu0 0
  %153 = vmatpush.bf16.xpose.msra.mxu0 0
  %154 = vmatpush.bf16.xpose.msra.mxu0 0
  %155 = vmatpush.bf16.xpose.msra.mxu0 0
  %156 = vmatpush.bf16.xpose.msra.mxu0 %v147
  %157 = vmatmul.bf16.gmra.mxu0 %v144
  %v158 = vpop.f32.mrf.mxu0
  %v159 = vadd.f32 0.0, %v158
  %v160 = vpop.f32.mrf.mxu0
  %161 = vdwg.mxu0
  %163 = vst [vmem:[#allocation1] ss:$9 sm:$0xff] %v15
  %v164 = vld [vmem:[#allocation1] sm:$0xff]
  %166 = vrot.lane.b32.xlu0 %v164, 96
  %v167 = vpop.permute.xlu0 %166
  %v168 = vsel %vm23, %v15, 0
  %v171 = vsel %vm23, %v167, 0
  %173 = vmatpush.bf16.xpose.msra.mxu0 0
  %174 = vmatpush.bf16.xpose.msra.mxu0 0
  %175 = vmatpush.bf16.xpose.msra.mxu0 0
  %176 = vmatpush.bf16.xpose.msra.mxu0 0
  %177 = vmatpush.bf16.xpose.msra.mxu0 0
  %178 = vmatpush.bf16.xpose.msra.mxu0 0
  %179 = vmatpush.bf16.xpose.msra.mxu0 0
  %180 = vmatpush.bf16.xpose.msra.mxu0 %v171
  %181 = vmatmul.bf16.gmra.mxu0 %v168
  %v182 = vpop.f32.mrf.mxu0
  %v183 = vadd.f32 0.0, %v182
  %v184 = vpop.f32.mrf.mxu0
  %185 = vdwg.mxu0
  %187 = vst [vmem:[#allocation1] ss:$9 sm:$0xff] %v16
  %v188 = vld [vmem:[#allocation1] sm:$0xff]
  %190 = vrot.lane.b32.xlu0 %v188, 96
  %v191 = vpop.permute.xlu0 %190
  %v192 = vsel %vm23, %v16, 0
  %v195 = vsel %vm23, %v191, 0
  %197 = vmatpush.bf16.xpose.msra.mxu0 0
  %198 = vmatpush.bf16.xpose.msra.mxu0 0
  %199 = vmatpush.bf16.xpose.msra.mxu0 0
  %200 = vmatpush.bf16.xpose.msra.mxu0 0
  %201 = vmatpush.bf16.xpose.msra.mxu0 0
  %202 = vmatpush.bf16.xpose.msra.mxu0 0
  %203 = vmatpush.bf16.xpose.msra.mxu0 0
  %204 = vmatpush.bf16.xpose.msra.mxu0 %v195
  %205 = vmatmul.bf16.gmra.mxu0 %v192
  %v206 = vpop.f32.mrf.mxu0
  %v207 = vadd.f32 0.0, %v206
  %v208 = vpop.f32.mrf.mxu0
  %209 = vdwg.mxu0
  %vm210 = vcmask 9216
  %v211 = vsel %vm210, %v39, -inf
  %212 = vmax.xlane.f32.xlu0 %v211
  %v213 = vpop.xlane.xlu0 %212
  %v214 = vsel %vm210, %v63, -inf
  %215 = vmax.xlane.f32.xlu0 %v214
  %v216 = vpop.xlane.xlu0 %215
  %v217 = vsel %vm210, %v87, -inf
  %218 = vmax.xlane.f32.xlu0 %v217
  %v219 = vpop.xlane.xlu0 %218
  %v220 = vsel %vm210, %v111, -inf
  %221 = vmax.xlane.f32.xlu0 %v220
  %v222 = vpop.xlane.xlu0 %221
  %v223 = vsel %vm210, %v135, -inf
  %224 = vmax.xlane.f32.xlu0 %v223
  %v225 = vpop.xlane.xlu0 %224
  %v226 = vsel %vm210, %v159, -inf
  %227 = vmax.xlane.f32.xlu0 %v226
  %v228 = vpop.xlane.xlu0 %227
  %v229 = vsel %vm210, %v183, -inf
  %230 = vmax.xlane.f32.xlu0 %v229
  %v231 = vpop.xlane.xlu0 %230
  %v232 = vsel %vm210, %v207, -inf
  %233 = vmax.xlane.f32.xlu0 %v232
  %v234 = vpop.xlane.xlu0 %233
  %v235 = vsub.f32 %v39, %v213
  %v236 = vsub.f32 %v63, %v216
  %v237 = vsub.f32 %v87, %v219
  %v238 = vsub.f32 %v111, %v222
  %v239 = vsub.f32 %v135, %v225
  %v240 = vsub.f32 %v159, %v228
  %v241 = vsub.f32 %v183, %v231
  %v242 = vsub.f32 %v207, %v234
  %v243 = vmul.f32 %v235, 1.442695
  %v244 = vpow.pop %v243
  %v245 = vmul.f32 %v236, 1.442695
  %v246 = vpow.pop %v245
  %v247 = vmul.f32 %v237, 1.442695
  %v248 = vpow.pop %v247
  %v249 = vmul.f32 %v238, 1.442695
  %v250 = vpow.pop %v249
  %v251 = vmul.f32 %v239, 1.442695
  %v252 = vpow.pop %v251
  %v253 = vmul.f32 %v240, 1.442695
  %v254 = vpow.pop %v253
  %v255 = vmul.f32 %v241, 1.442695
  %v256 = vpow.pop %v255
  %v257 = vmul.f32 %v242, 1.442695
  %v258 = vpow.pop %v257
  %v259 = vsel %vm210, %v244, 0.0
  %260 = vadd.xlane.f32.xlu0 %v259
  %v261 = vpop.xlane.xlu0 %260
  %v262 = vsel %vm210, %v246, 0.0
  %263 = vadd.xlane.f32.xlu0 %v262
  %v264 = vpop.xlane.xlu0 %263
  %v265 = vsel %vm210, %v248, 0.0
  %266 = vadd.xlane.f32.xlu0 %v265
  %v267 = vpop.xlane.xlu0 %266
  %v268 = vsel %vm210, %v250, 0.0
  %269 = vadd.xlane.f32.xlu0 %v268
  %v270 = vpop.xlane.xlu0 %269
  %v271 = vsel %vm210, %v252, 0.0
  %272 = vadd.xlane.f32.xlu0 %v271
  %v273 = vpop.xlane.xlu0 %272
  %v274 = vsel %vm210, %v254, 0.0
  %275 = vadd.xlane.f32.xlu0 %v274
  %v276 = vpop.xlane.xlu0 %275
  %v277 = vsel %vm210, %v256, 0.0
  %278 = vadd.xlane.f32.xlu0 %v277
  %v279 = vpop.xlane.xlu0 %278
  %v280 = vsel %vm210, %v258, 0.0
  %281 = vadd.xlane.f32.xlu0 %v280
  %v282 = vpop.xlane.xlu0 %281
  %v283 = vrcp.pop %v261
  %v284 = vrcp.pop %v264
  %v285 = vrcp.pop %v267
  %v286 = vrcp.pop %v270
  %v287 = vrcp.pop %v273
  %v288 = vrcp.pop %v276
  %v289 = vrcp.pop %v279
  %v290 = vrcp.pop %v282
  %v291 = vmul.f32 %v244, %v283
  %v292 = vmul.f32 %v246, %v284
  %v293 = vmul.f32 %v248, %v285
  %v294 = vmul.f32 %v250, %v286
  %v295 = vmul.f32 %v252, %v287
  %v296 = vmul.f32 %v254, %v288
  %v297 = vmul.f32 %v256, %v289
  %v298 = vmul.f32 %v258, %v290
  %v299 = vpack.c.bf16 %v291, %v291
  %v300 = vpack.c.bf16 %v292, %v292
  %v301 = vpack.c.bf16 %v293, %v293
  %v302 = vpack.c.bf16 %v294, %v294
  %v303 = vpack.c.bf16 %v295, %v295
  %v304 = vpack.c.bf16 %v296, %v296
  %v305 = vpack.c.bf16 %v297, %v297
  %v306 = vpack.c.bf16 %v298, %v298
  %307 = vst [vmem:[#allocation1] ss:$9 sm:$0xff] %v9
  %v308 = vld [vmem:[#allocation1] sm:$0xff]
  %310 = vrot.lane.b32.xlu0 %v308, 64
  %v311 = vpop.permute.xlu0 %310
  %vm312 = vcmask 15360
  %v314 = vsel %vm312, %v299, 0
  %vm316 = vcmask 1040384
  %v318 = vsel %vm316, %v311, 0
  %320 = vmatpush.bf16.msra.mxu0 0
  %321 = vmatpush.bf16.msra.mxu0 0
  %322 = vmatpush.bf16.msra.mxu0 0
  %323 = vmatpush.bf16.msra.mxu0 0
  %324 = vmatpush.bf16.msra.mxu0 0
  %325 = vmatpush.bf16.msra.mxu0 0
  %326 = vmatpush.bf16.msra.mxu0 0
  %327 = vmatpush.bf16.msra.mxu0 %v318
  %328 = vmatmul.bf16.gmra.mxu0 %v314
  %v329 = vpop.f32.mrf.mxu0
  %v330 = vadd.f32 0.0, %v329
  %v331 = vpop.f32.mrf.mxu0
  %332 = vdwg.mxu0
  %333 = vst [vmem:[#allocation1] ss:$9 sm:$0xff] %v10
  %v334 = vld [vmem:[#allocation1] sm:$0xff]
  %336 = vrot.lane.b32.xlu0 %v334, 64
  %v337 = vpop.permute.xlu0 %336
  %v339 = vsel %vm312, %v300, 0
  %v342 = vsel %vm316, %v337, 0
  %344 = vmatpush.bf16.msra.mxu0 0
  %345 = vmatpush.bf16.msra.mxu0 0
  %346 = vmatpush.bf16.msra.mxu0 0
  %347 = vmatpush.bf16.msra.mxu0 0
  %348 = vmatpush.bf16.msra.mxu0 0
  %349 = vmatpush.bf16.msra.mxu0 0
  %350 = vmatpush.bf16.msra.mxu0 0
  %351 = vmatpush.bf16.msra.mxu0 %v342
  %352 = vmatmul.bf16.gmra.mxu0 %v339
  %v353 = vpop.f32.mrf.mxu0
  %v354 = vadd.f32 0.0, %v353
  %v355 = vpop.f32.mrf.mxu0
  %356 = vdwg.mxu0
  %357 = vst [vmem:[#allocation1] ss:$9 sm:$0xff] %v11
  %v358 = vld [vmem:[#allocation1] sm:$0xff]
  %360 = vrot.lane.b32.xlu0 %v358, 64
  %v361 = vpop.permute.xlu0 %360
  %v363 = vsel %vm312, %v301, 0
  %v366 = vsel %vm316, %v361, 0
  %368 = vmatpush.bf16.msra.mxu0 0
  %369 = vmatpush.bf16.msra.mxu0 0
  %370 = vmatpush.bf16.msra.mxu0 0
  %371 = vmatpush.bf16.msra.mxu0 0
  %372 = vmatpush.bf16.msra.mxu0 0
  %373 = vmatpush.bf16.msra.mxu0 0
  %374 = vmatpush.bf16.msra.mxu0 0
  %375 = vmatpush.bf16.msra.mxu0 %v366
  %376 = vmatmul.bf16.gmra.mxu0 %v363
  %v377 = vpop.f32.mrf.mxu0
  %v378 = vadd.f32 0.0, %v377
  %v379 = vpop.f32.mrf.mxu0
  %380 = vdwg.mxu0
  %381 = vst [vmem:[#allocation1] ss:$9 sm:$0xff] %v12
  %v382 = vld [vmem:[#allocation1] sm:$0xff]
  %384 = vrot.lane.b32.xlu0 %v382, 64
  %v385 = vpop.permute.xlu0 %384
  %v387 = vsel %vm312, %v302, 0
  %v390 = vsel %vm316, %v385, 0
  %392 = vmatpush.bf16.msra.mxu0 0
  %393 = vmatpush.bf16.msra.mxu0 0
  %394 = vmatpush.bf16.msra.mxu0 0
  %395 = vmatpush.bf16.msra.mxu0 0
  %396 = vmatpush.bf16.msra.mxu0 0
  %397 = vmatpush.bf16.msra.mxu0 0
  %398 = vmatpush.bf16.msra.mxu0 0
  %399 = vmatpush.bf16.msra.mxu0 %v390
  %400 = vmatmul.bf16.gmra.mxu0 %v387
  %v401 = vpop.f32.mrf.mxu0
  %v402 = vadd.f32 0.0, %v401
  %v403 = vpop.f32.mrf.mxu0
  %404 = vdwg.mxu0
  %405 = vst [vmem:[#allocation1] ss:$9 sm:$0xff] %v13
  %v406 = vld [vmem:[#allocation1] sm:$0xff]
  %408 = vrot.lane.b32.xlu0 %v406, 64
  %v409 = vpop.permute.xlu0 %408
  %v411 = vsel %vm312, %v303, 0
  %v414 = vsel %vm316, %v409, 0
  %416 = vmatpush.bf16.msra.mxu0 0
  %417 = vmatpush.bf16.msra.mxu0 0
  %418 = vmatpush.bf16.msra.mxu0 0
  %419 = vmatpush.bf16.msra.mxu0 0
  %420 = vmatpush.bf16.msra.mxu0 0
  %421 = vmatpush.bf16.msra.mxu0 0
  %422 = vmatpush.bf16.msra.mxu0 0
  %423 = vmatpush.bf16.msra.mxu0 %v414
  %424 = vmatmul.bf16.gmra.mxu0 %v411
  %v425 = vpop.f32.mrf.mxu0
  %v426 = vadd.f32 0.0, %v425
  %v427 = vpop.f32.mrf.mxu0
  %428 = vdwg.mxu0
  %429 = vst [vmem:[#allocation1] ss:$9 sm:$0xff] %v14
  %v430 = vld [vmem:[#allocation1] sm:$0xff]
  %432 = vrot.lane.b32.xlu0 %v430, 64
  %v433 = vpop.permute.xlu0 %432
  %v435 = vsel %vm312, %v304, 0
  %v438 = vsel %vm316, %v433, 0
  %440 = vmatpush.bf16.msra.mxu0 0
  %441 = vmatpush.bf16.msra.mxu0 0
  %442 = vmatpush.bf16.msra.mxu0 0
  %443 = vmatpush.bf16.msra.mxu0 0
  %444 = vmatpush.bf16.msra.mxu0 0
  %445 = vmatpush.bf16.msra.mxu0 0
  %446 = vmatpush.bf16.msra.mxu0 0
  %447 = vmatpush.bf16.msra.mxu0 %v438
  %448 = vmatmul.bf16.gmra.mxu0 %v435
  %v449 = vpop.f32.mrf.mxu0
  %v450 = vadd.f32 0.0, %v449
  %v451 = vpop.f32.mrf.mxu0
  %452 = vdwg.mxu0
  %453 = vst [vmem:[#allocation1] ss:$9 sm:$0xff] %v15
  %v454 = vld [vmem:[#allocation1] sm:$0xff]
  %456 = vrot.lane.b32.xlu0 %v454, 64
  %v457 = vpop.permute.xlu0 %456
  %v459 = vsel %vm312, %v305, 0
  %v462 = vsel %vm316, %v457, 0
  %464 = vmatpush.bf16.msra.mxu0 0
  %465 = vmatpush.bf16.msra.mxu0 0
  %466 = vmatpush.bf16.msra.mxu0 0
  %467 = vmatpush.bf16.msra.mxu0 0
  %468 = vmatpush.bf16.msra.mxu0 0
  %469 = vmatpush.bf16.msra.mxu0 0
  %470 = vmatpush.bf16.msra.mxu0 0
  %471 = vmatpush.bf16.msra.mxu0 %v462
  %472 = vmatmul.bf16.gmra.mxu0 %v459
  %v473 = vpop.f32.mrf.mxu0
  %v474 = vadd.f32 0.0, %v473
  %v475 = vpop.f32.mrf.mxu0
  %476 = vdwg.mxu0
  %477 = vst [vmem:[#allocation1] ss:$9 sm:$0xff] %v16
  %v478 = vld [vmem:[#allocation1] sm:$0xff]
  %480 = vrot.lane.b32.xlu0 %v478, 64
  %v481 = vpop.permute.xlu0 %480
  %v483 = vsel %vm312, %v306, 0
  %v486 = vsel %vm316, %v481, 0
  %488 = vmatpush.bf16.msra.mxu0 0
  %489 = vmatpush.bf16.msra.mxu0 0
  %490 = vmatpush.bf16.msra.mxu0 0
  %491 = vmatpush.bf16.msra.mxu0 0
  %492 = vmatpush.bf16.msra.mxu0 0
  %493 = vmatpush.bf16.msra.mxu0 0
  %494 = vmatpush.bf16.msra.mxu0 0
  %495 = vmatpush.bf16.msra.mxu0 %v486
  %496 = vmatmul.bf16.gmra.mxu0 %v483
  %v497 = vpop.f32.mrf.mxu0
  %v498 = vadd.f32 0.0, %v497
  %v499 = vpop.f32.mrf.mxu0
  %500 = vdwg.mxu0
  %v501 = vpack.c.bf16 %v330, %v330
  %v502 = vpack.c.bf16 %v354, %v354
  %v503 = vpack.c.bf16 %v378, %v378
  %v504 = vpack.c.bf16 %v402, %v402
  %v505 = vpack.c.bf16 %v426, %v426
  %v506 = vpack.c.bf16 %v450, %v450
  %v507 = vpack.c.bf16 %v474, %v474
  %v508 = vpack.c.bf16 %v498, %v498
  %509 = vst [vmem:[#allocation1] ss:$9 sm:$0xff] %v9
  %v510 = vld [vmem:[#allocation1] sm:$0xff]
  %512 = vrot.lane.b32.xlu0 %v510, 120
  %v513 = vpop.permute.xlu0 %512
  %514 = vst [vmem:[#allocation1] ss:$9 sm:$0xff] %v9
  %v515 = vld [vmem:[#allocation1] sm:$0xff]
  %517 = vrot.lane.b32.xlu0 %v515, 88
  %v518 = vpop.permute.xlu0 %517
  %v520 = vsel %vm23, %v513, 0
  %v523 = vsel %vm23, %v518, 0
  %525 = vmatpush.bf16.xpose.msra.mxu0 0
  %526 = vmatpush.bf16.xpose.msra.mxu0 0
  %527 = vmatpush.bf16.xpose.msra.mxu0 0
  %528 = vmatpush.bf16.xpose.msra.mxu0 0
  %529 = vmatpush.bf16.xpose.msra.mxu0 0
  %530 = vmatpush.bf16.xpose.msra.mxu0 0
  %531 = vmatpush.bf16.xpose.msra.mxu0 0
  %532 = vmatpush.bf16.xpose.msra.mxu0 %v523
  %533 = vmatmul.bf16.gmra.mxu0 %v520
  %v534 = vpop.f32.mrf.mxu0
  %v535 = vadd.f32 0.0, %v534
  %v536 = vpop.f32.mrf.mxu0
  %537 = vdwg.mxu0
  %538 = vst [vmem:[#allocation1] ss:$9 sm:$0xff] %v10
  %v539 = vld [vmem:[#allocation1] sm:$0xff]
  %541 = vrot.lane.b32.xlu0 %v539, 120
  %v542 = vpop.permute.xlu0 %541
  %543 = vst [vmem:[#allocation1] ss:$9 sm:$0xff] %v10
  %v544 = vld [vmem:[#allocation1] sm:$0xff]
  %546 = vrot.lane.b32.xlu0 %v544, 88
  %v547 = vpop.permute.xlu0 %546
  %v549 = vsel %vm23, %v542, 0
  %v552 = vsel %vm23, %v547, 0
  %554 = vmatpush.bf16.xpose.msra.mxu0 0
  %555 = vmatpush.bf16.xpose.msra.mxu0 0
  %556 = vmatpush.bf16.xpose.msra.mxu0 0
  %557 = vmatpush.bf16.xpose.msra.mxu0 0
  %558 = vmatpush.bf16.xpose.msra.mxu0 0
  %559 = vmatpush.bf16.xpose.msra.mxu0 0
  %560 = vmatpush.bf16.xpose.msra.mxu0 0
  %561 = vmatpush.bf16.xpose.msra.mxu0 %v552
  %562 = vmatmul.bf16.gmra.mxu0 %v549
  %v563 = vpop.f32.mrf.mxu0
  %v564 = vadd.f32 0.0, %v563
  %v565 = vpop.f32.mrf.mxu0
  %566 = vdwg.mxu0
  %567 = vst [vmem:[#allocation1] ss:$9 sm:$0xff] %v11
  %v568 = vld [vmem:[#allocation1] sm:$0xff]
  %570 = vrot.lane.b32.xlu0 %v568, 120
  %v571 = vpop.permute.xlu0 %570
  %572 = vst [vmem:[#allocation1] ss:$9 sm:$0xff] %v11
  %v573 = vld [vmem:[#allocation1] sm:$0xff]
  %575 = vrot.lane.b32.xlu0 %v573, 88
  %v576 = vpop.permute.xlu0 %575
  %v578 = vsel %vm23, %v571, 0
  %v581 = vsel %vm23, %v576, 0
  %583 = vmatpush.bf16.xpose.msra.mxu0 0
  %584 = vmatpush.bf16.xpose.msra.mxu0 0
  %585 = vmatpush.bf16.xpose.msra.mxu0 0
  %586 = vmatpush.bf16.xpose.msra.mxu0 0
  %587 = vmatpush.bf16.xpose.msra.mxu0 0
  %588 = vmatpush.bf16.xpose.msra.mxu0 0
  %589 = vmatpush.bf16.xpose.msra.mxu0 0
  %590 = vmatpush.bf16.xpose.msra.mxu0 %v581
  %591 = vmatmul.bf16.gmra.mxu0 %v578
  %v592 = vpop.f32.mrf.mxu0
  %v593 = vadd.f32 0.0, %v592
  %v594 = vpop.f32.mrf.mxu0
  %595 = vdwg.mxu0
  %596 = vst [vmem:[#allocation1] ss:$9 sm:$0xff] %v12
  %v597 = vld [vmem:[#allocation1] sm:$0xff]
  %599 = vrot.lane.b32.xlu0 %v597, 120
  %v600 = vpop.permute.xlu0 %599
  %601 = vst [vmem:[#allocation1] ss:$9 sm:$0xff] %v12
  %v602 = vld [vmem:[#allocation1] sm:$0xff]
  %604 = vrot.lane.b32.xlu0 %v602, 88
  %v605 = vpop.permute.xlu0 %604
  %v607 = vsel %vm23, %v600, 0
  %v610 = vsel %vm23, %v605, 0
  %612 = vmatpush.bf16.xpose.msra.mxu0 0
  %613 = vmatpush.bf16.xpose.msra.mxu0 0
  %614 = vmatpush.bf16.xpose.msra.mxu0 0
  %615 = vmatpush.bf16.xpose.msra.mxu0 0
  %616 = vmatpush.bf16.xpose.msra.mxu0 0
  %617 = vmatpush.bf16.xpose.msra.mxu0 0
  %618 = vmatpush.bf16.xpose.msra.mxu0 0
  %619 = vmatpush.bf16.xpose.msra.mxu0 %v610
  %620 = vmatmul.bf16.gmra.mxu0 %v607
  %v621 = vpop.f32.mrf.mxu0
  %v622 = vadd.f32 0.0, %v621
  %v623 = vpop.f32.mrf.mxu0
  %624 = vdwg.mxu0
  %625 = vst [vmem:[#allocation1] ss:$9 sm:$0xff] %v13
  %v626 = vld [vmem:[#allocation1] sm:$0xff]
  %628 = vrot.lane.b32.xlu0 %v626, 120
  %v629 = vpop.permute.xlu0 %628
  %630 = vst [vmem:[#allocation1] ss:$9 sm:$0xff] %v13
  %v631 = vld [vmem:[#allocation1] sm:$0xff]
  %633 = vrot.lane.b32.xlu0 %v631, 88
  %v634 = vpop.permute.xlu0 %633
  %v636 = vsel %vm23, %v629, 0
  %v639 = vsel %vm23, %v634, 0
  %641 = vmatpush.bf16.xpose.msra.mxu0 0
  %642 = vmatpush.bf16.xpose.msra.mxu0 0
  %643 = vmatpush.bf16.xpose.msra.mxu0 0
  %644 = vmatpush.bf16.xpose.msra.mxu0 0
  %645 = vmatpush.bf16.xpose.msra.mxu0 0
  %646 = vmatpush.bf16.xpose.msra.mxu0 0
  %647 = vmatpush.bf16.xpose.msra.mxu0 0
  %648 = vmatpush.bf16.xpose.msra.mxu0 %v639
  %649 = vmatmul.bf16.gmra.mxu0 %v636
  %v650 = vpop.f32.mrf.mxu0
  %v651 = vadd.f32 0.0, %v650
  %v652 = vpop.f32.mrf.mxu0
  %653 = vdwg.mxu0
  %654 = vst [vmem:[#allocation1] ss:$9 sm:$0xff] %v14
  %v655 = vld [vmem:[#allocation1] sm:$0xff]
  %657 = vrot.lane.b32.xlu0 %v655, 120
  %v658 = vpop.permute.xlu0 %657
  %659 = vst [vmem:[#allocation1] ss:$9 sm:$0xff] %v14
  %v660 = vld [vmem:[#allocation1] sm:$0xff]
  %662 = vrot.lane.b32.xlu0 %v660, 88
  %v663 = vpop.permute.xlu0 %662
  %v665 = vsel %vm23, %v658, 0
  %v668 = vsel %vm23, %v663, 0
  %670 = vmatpush.bf16.xpose.msra.mxu0 0
  %671 = vmatpush.bf16.xpose.msra.mxu0 0
  %672 = vmatpush.bf16.xpose.msra.mxu0 0
  %673 = vmatpush.bf16.xpose.msra.mxu0 0
  %674 = vmatpush.bf16.xpose.msra.mxu0 0
  %675 = vmatpush.bf16.xpose.msra.mxu0 0
  %676 = vmatpush.bf16.xpose.msra.mxu0 0
  %677 = vmatpush.bf16.xpose.msra.mxu0 %v668
  %678 = vmatmul.bf16.gmra.mxu0 %v665
  %v679 = vpop.f32.mrf.mxu0
  %v680 = vadd.f32 0.0, %v679
  %v681 = vpop.f32.mrf.mxu0
  %682 = vdwg.mxu0
  %683 = vst [vmem:[#allocation1] ss:$9 sm:$0xff] %v15
  %v684 = vld [vmem:[#allocation1] sm:$0xff]
  %686 = vrot.lane.b32.xlu0 %v684, 120
  %v687 = vpop.permute.xlu0 %686
  %688 = vst [vmem:[#allocation1] ss:$9 sm:$0xff] %v15
  %v689 = vld [vmem:[#allocation1] sm:$0xff]
  %691 = vrot.lane.b32.xlu0 %v689, 88
  %v692 = vpop.permute.xlu0 %691
  %v694 = vsel %vm23, %v687, 0
  %v697 = vsel %vm23, %v692, 0
  %699 = vmatpush.bf16.xpose.msra.mxu0 0
  %700 = vmatpush.bf16.xpose.msra.mxu0 0
  %701 = vmatpush.bf16.xpose.msra.mxu0 0
  %702 = vmatpush.bf16.xpose.msra.mxu0 0
  %703 = vmatpush.bf16.xpose.msra.mxu0 0
  %704 = vmatpush.bf16.xpose.msra.mxu0 0
  %705 = vmatpush.bf16.xpose.msra.mxu0 0
  %706 = vmatpush.bf16.xpose.msra.mxu0 %v697
  %707 = vmatmul.bf16.gmra.mxu0 %v694
  %v708 = vpop.f32.mrf.mxu0
  %v709 = vadd.f32 0.0, %v708
  %v710 = vpop.f32.mrf.mxu0
  %711 = vdwg.mxu0
  %712 = vst [vmem:[#allocation1] ss:$9 sm:$0xff] %v16
  %v713 = vld [vmem:[#allocation1] sm:$0xff]
  %715 = vrot.lane.b32.xlu0 %v713, 120
  %v716 = vpop.permute.xlu0 %715
  %717 = vst [vmem:[#allocation1] ss:$9 sm:$0xff] %v16
  %v718 = vld [vmem:[#allocation1] sm:$0xff]
  %720 = vrot.lane.b32.xlu0 %v718, 88
  %v721 = vpop.permute.xlu0 %720
  %v723 = vsel %vm23, %v716, 0
  %v726 = vsel %vm23, %v721, 0
  %728 = vmatpush.bf16.xpose.msra.mxu0 0
  %729 = vmatpush.bf16.xpose.msra.mxu0 0
  %730 = vmatpush.bf16.xpose.msra.mxu0 0
  %731 = vmatpush.bf16.xpose.msra.mxu0 0
  %732 = vmatpush.bf16.xpose.msra.mxu0 0
  %733 = vmatpush.bf16.xpose.msra.mxu0 0
  %734 = vmatpush.bf16.xpose.msra.mxu0 0
  %735 = vmatpush.bf16.xpose.msra.mxu0 %v726
  %736 = vmatmul.bf16.gmra.mxu0 %v723
  %v737 = vpop.f32.mrf.mxu0
  %v738 = vadd.f32 0.0, %v737
  %v739 = vpop.f32.mrf.mxu0
  %740 = vdwg.mxu0
  %v741 = vsel %vm210, %v535, -inf
  %742 = vmax.xlane.f32.xlu0 %v741
  %v743 = vpop.xlane.xlu0 %742
  %v744 = vsel %vm210, %v564, -inf
  %745 = vmax.xlane.f32.xlu0 %v744
  %v746 = vpop.xlane.xlu0 %745
  %v747 = vsel %vm210, %v593, -inf
  %748 = vmax.xlane.f32.xlu0 %v747
  %v749 = vpop.xlane.xlu0 %748
  %v750 = vsel %vm210, %v622, -inf
  %751 = vmax.xlane.f32.xlu0 %v750
  %v752 = vpop.xlane.xlu0 %751
  %v753 = vsel %vm210, %v651, -inf
  %754 = vmax.xlane.f32.xlu0 %v753
  %v755 = vpop.xlane.xlu0 %754
  %v756 = vsel %vm210, %v680, -inf
  %757 = vmax.xlane.f32.xlu0 %v756
  %v758 = vpop.xlane.xlu0 %757
  %v759 = vsel %vm210, %v709, -inf
  %760 = vmax.xlane.f32.xlu0 %v759
  %v761 = vpop.xlane.xlu0 %760
  %v762 = vsel %vm210, %v738, -inf
  %763 = vmax.xlane.f32.xlu0 %v762
  %v764 = vpop.xlane.xlu0 %763
  %v765 = vsub.f32 %v535, %v743
  %v766 = vsub.f32 %v564, %v746
  %v767 = vsub.f32 %v593, %v749
  %v768 = vsub.f32 %v622, %v752
  %v769 = vsub.f32 %v651, %v755
  %v770 = vsub.f32 %v680, %v758
  %v771 = vsub.f32 %v709, %v761
  %v772 = vsub.f32 %v738, %v764
  %v773 = vmul.f32 %v765, 1.442695
  %v774 = vpow.pop %v773
  %v775 = vmul.f32 %v766, 1.442695
  %v776 = vpow.pop %v775
  %v777 = vmul.f32 %v767, 1.442695
  %v778 = vpow.pop %v777
  %v779 = vmul.f32 %v768, 1.442695
  %v780 = vpow.pop %v779
  %v781 = vmul.f32 %v769, 1.442695
  %v782 = vpow.pop %v781
  %v783 = vmul.f32 %v770, 1.442695
  %v784 = vpow.pop %v783
  %v785 = vmul.f32 %v771, 1.442695
  %v786 = vpow.pop %v785
  %v787 = vmul.f32 %v772, 1.442695
  %v788 = vpow.pop %v787
  %v789 = vsel %vm210, %v774, 0.0
  %790 = vadd.xlane.f32.xlu0 %v789
  %v791 = vpop.xlane.xlu0 %790
  %v792 = vsel %vm210, %v776, 0.0
  %793 = vadd.xlane.f32.xlu0 %v792
  %v794 = vpop.xlane.xlu0 %793
  %v795 = vsel %vm210, %v778, 0.0
  %796 = vadd.xlane.f32.xlu0 %v795
  %v797 = vpop.xlane.xlu0 %796
  %v798 = vsel %vm210, %v780, 0.0
  %799 = vadd.xlane.f32.xlu0 %v798
  %v800 = vpop.xlane.xlu0 %799
  %v801 = vsel %vm210, %v782, 0.0
  %802 = vadd.xlane.f32.xlu0 %v801
  %v803 = vpop.xlane.xlu0 %802
  %v804 = vsel %vm210, %v784, 0.0
  %805 = vadd.xlane.f32.xlu0 %v804
  %v806 = vpop.xlane.xlu0 %805
  %v807 = vsel %vm210, %v786, 0.0
  %808 = vadd.xlane.f32.xlu0 %v807
  %v809 = vpop.xlane.xlu0 %808
  %v810 = vsel %vm210, %v788, 0.0
  %811 = vadd.xlane.f32.xlu0 %v810
  %v812 = vpop.xlane.xlu0 %811
  %v813 = vrcp.pop %v791
  %v814 = vrcp.pop %v794
  %v815 = vrcp.pop %v797
  %v816 = vrcp.pop %v800
  %v817 = vrcp.pop %v803
  %v818 = vrcp.pop %v806
  %v819 = vrcp.pop %v809
  %v820 = vrcp.pop %v812
  %v821 = vmul.f32 %v774, %v813
  %v822 = vmul.f32 %v776, %v814
  %v823 = vmul.f32 %v778, %v815
  %v824 = vmul.f32 %v780, %v816
  %v825 = vmul.f32 %v782, %v817
  %v826 = vmul.f32 %v784, %v818
  %v827 = vmul.f32 %v786, %v819
  %v828 = vmul.f32 %v788, %v820
  %v829 = vpack.c.bf16 %v821, %v821
  %v830 = vpack.c.bf16 %v822, %v822
  %v831 = vpack.c.bf16 %v823, %v823
  %v832 = vpack.c.bf16 %v824, %v824
  %v833 = vpack.c.bf16 %v825, %v825
  %v834 = vpack.c.bf16 %v826, %v826
  %v835 = vpack.c.bf16 %v827, %v827
  %v836 = vpack.c.bf16 %v828, %v828
  %837 = vst [vmem:[#allocation1] ss:$9 sm:$0xff] %v9
  %v838 = vld [vmem:[#allocation1] sm:$0xff]
  %840 = vrot.lane.b32.xlu0 %v838, 56
  %v841 = vpop.permute.xlu0 %840
  %v843 = vsel %vm312, %v829, 0
  %v846 = vsel %vm316, %v841, 0
  %848 = vmatpush.bf16.msra.mxu0 0
  %849 = vmatpush.bf16.msra.mxu0 0
  %850 = vmatpush.bf16.msra.mxu0 0
  %851 = vmatpush.bf16.msra.mxu0 0
  %852 = vmatpush.bf16.msra.mxu0 0
  %853 = vmatpush.bf16.msra.mxu0 0
  %854 = vmatpush.bf16.msra.mxu0 0
  %855 = vmatpush.bf16.msra.mxu0 %v846
  %856 = vmatmul.bf16.gmra.mxu0 %v843
  %v857 = vpop.f32.mrf.mxu0
  %v858 = vadd.f32 0.0, %v857
  %v859 = vpop.f32.mrf.mxu0
  %860 = vdwg.mxu0
  %861 = vst [vmem:[#allocation1] ss:$9 sm:$0xff] %v10
  %v862 = vld [vmem:[#allocation1] sm:$0xff]
  %864 = vrot.lane.b32.xlu0 %v862, 56
  %v865 = vpop.permute.xlu0 %864
  %v867 = vsel %vm312, %v830, 0
  %v870 = vsel %vm316, %v865, 0
  %872 = vmatpush.bf16.msra.mxu0 0
  %873 = vmatpush.bf16.msra.mxu0 0
  %874 = vmatpush.bf16.msra.mxu0 0
  %875 = vmatpush.bf16.msra.mxu0 0
  %876 = vmatpush.bf16.msra.mxu0 0
  %877 = vmatpush.bf16.msra.mxu0 0
  %878 = vmatpush.bf16.msra.mxu0 0
  %879 = vmatpush.bf16.msra.mxu0 %v870
  %880 = vmatmul.bf16.gmra.mxu0 %v867
  %v881 = vpop.f32.mrf.mxu0
  %v882 = vadd.f32 0.0, %v881
  %v883 = vpop.f32.mrf.mxu0
  %884 = vdwg.mxu0
  %885 = vst [vmem:[#allocation1] ss:$9 sm:$0xff] %v11
  %v886 = vld [vmem:[#allocation1] sm:$0xff]
  %888 = vrot.lane.b32.xlu0 %v886, 56
  %v889 = vpop.permute.xlu0 %888
  %v891 = vsel %vm312, %v831, 0
  %v894 = vsel %vm316, %v889, 0
  %896 = vmatpush.bf16.msra.mxu0 0
  %897 = vmatpush.bf16.msra.mxu0 0
  %898 = vmatpush.bf16.msra.mxu0 0
  %899 = vmatpush.bf16.msra.mxu0 0
  %900 = vmatpush.bf16.msra.mxu0 0
  %901 = vmatpush.bf16.msra.mxu0 0
  %902 = vmatpush.bf16.msra.mxu0 0
  %903 = vmatpush.bf16.msra.mxu0 %v894
  %904 = vmatmul.bf16.gmra.mxu0 %v891
  %v905 = vpop.f32.mrf.mxu0
  %v906 = vadd.f32 0.0, %v905
  %v907 = vpop.f32.mrf.mxu0
  %908 = vdwg.mxu0
  %909 = vst [vmem:[#allocation1] ss:$9 sm:$0xff] %v12
  %v910 = vld [vmem:[#allocation1] sm:$0xff]
  %912 = vrot.lane.b32.xlu0 %v910, 56
  %v913 = vpop.permute.xlu0 %912
  %v915 = vsel %vm312, %v832, 0
  %v918 = vsel %vm316, %v913, 0
  %920 = vmatpush.bf16.msra.mxu0 0
  %921 = vmatpush.bf16.msra.mxu0 0
  %922 = vmatpush.bf16.msra.mxu0 0
  %923 = vmatpush.bf16.msra.mxu0 0
  %924 = vmatpush.bf16.msra.mxu0 0
  %925 = vmatpush.bf16.msra.mxu0 0
  %926 = vmatpush.bf16.msra.mxu0 0
  %927 = vmatpush.bf16.msra.mxu0 %v918
  %928 = vmatmul.bf16.gmra.mxu0 %v915
  %v929 = vpop.f32.mrf.mxu0
  %v930 = vadd.f32 0.0, %v929
  %v931 = vpop.f32.mrf.mxu0
  %932 = vdwg.mxu0
  %933 = vst [vmem:[#allocation1] ss:$9 sm:$0xff] %v13
  %v934 = vld [vmem:[#allocation1] sm:$0xff]
  %936 = vrot.lane.b32.xlu0 %v934, 56
  %v937 = vpop.permute.xlu0 %936
  %v939 = vsel %vm312, %v833, 0
  %v942 = vsel %vm316, %v937, 0
  %944 = vmatpush.bf16.msra.mxu0 0
  %945 = vmatpush.bf16.msra.mxu0 0
  %946 = vmatpush.bf16.msra.mxu0 0
  %947 = vmatpush.bf16.msra.mxu0 0
  %948 = vmatpush.bf16.msra.mxu0 0
  %949 = vmatpush.bf16.msra.mxu0 0
  %950 = vmatpush.bf16.msra.mxu0 0
  %951 = vmatpush.bf16.msra.mxu0 %v942
  %952 = vmatmul.bf16.gmra.mxu0 %v939
  %v953 = vpop.f32.mrf.mxu0
  %v954 = vadd.f32 0.0, %v953
  %v955 = vpop.f32.mrf.mxu0
  %956 = vdwg.mxu0
  %957 = vst [vmem:[#allocation1] ss:$9 sm:$0xff] %v14
  %v958 = vld [vmem:[#allocation1] sm:$0xff]
  %960 = vrot.lane.b32.xlu0 %v958, 56
  %v961 = vpop.permute.xlu0 %960
  %v963 = vsel %vm312, %v834, 0
  %v966 = vsel %vm316, %v961, 0
  %968 = vmatpush.bf16.msra.mxu0 0
  %969 = vmatpush.bf16.msra.mxu0 0
  %970 = vmatpush.bf16.msra.mxu0 0
  %971 = vmatpush.bf16.msra.mxu0 0
  %972 = vmatpush.bf16.msra.mxu0 0
  %973 = vmatpush.bf16.msra.mxu0 0
  %974 = vmatpush.bf16.msra.mxu0 0
  %975 = vmatpush.bf16.msra.mxu0 %v966
  %976 = vmatmul.bf16.gmra.mxu0 %v963
  %v977 = vpop.f32.mrf.mxu0
  %v978 = vadd.f32 0.0, %v977
  %v979 = vpop.f32.mrf.mxu0
  %980 = vdwg.mxu0
  %981 = vst [vmem:[#allocation1] ss:$9 sm:$0xff] %v15
  %v982 = vld [vmem:[#allocation1] sm:$0xff]
  %984 = vrot.lane.b32.xlu0 %v982, 56
  %v985 = vpop.permute.xlu0 %984
  %v987 = vsel %vm312, %v835, 0
  %v990 = vsel %vm316, %v985, 0
  %992 = vmatpush.bf16.msra.mxu0 0
  %993 = vmatpush.bf16.msra.mxu0 0
  %994 = vmatpush.bf16.msra.mxu0 0
  %995 = vmatpush.bf16.msra.mxu0 0
  %996 = vmatpush.bf16.msra.mxu0 0
  %997 = vmatpush.bf16.msra.mxu0 0
  %998 = vmatpush.bf16.msra.mxu0 0
  %999 = vmatpush.bf16.msra.mxu0 %v990
  %1000 = vmatmul.bf16.gmra.mxu0 %v987
  %v1001 = vpop.f32.mrf.mxu0
  %v1002 = vadd.f32 0.0, %v1001
  %v1003 = vpop.f32.mrf.mxu0
  %1004 = vdwg.mxu0
  %1005 = vst [vmem:[#allocation1] ss:$9 sm:$0xff] %v16
  %v1006 = vld [vmem:[#allocation1] sm:$0xff]
  %1008 = vrot.lane.b32.xlu0 %v1006, 56
  %v1009 = vpop.permute.xlu0 %1008
  %v1011 = vsel %vm312, %v836, 0
  %v1014 = vsel %vm316, %v1009, 0
  %1016 = vmatpush.bf16.msra.mxu0 0
  %1017 = vmatpush.bf16.msra.mxu0 0
  %1018 = vmatpush.bf16.msra.mxu0 0
  %1019 = vmatpush.bf16.msra.mxu0 0
  %1020 = vmatpush.bf16.msra.mxu0 0
  %1021 = vmatpush.bf16.msra.mxu0 0
  %1022 = vmatpush.bf16.msra.mxu0 0
  %1023 = vmatpush.bf16.msra.mxu0 %v1014
  %1024 = vmatmul.bf16.gmra.mxu0 %v1011
  %v1025 = vpop.f32.mrf.mxu0
  %v1026 = vadd.f32 0.0, %v1025
  %v1027 = vpop.f32.mrf.mxu0
  %1028 = vdwg.mxu0
  %v1029 = vpack.c.bf16 %v858, %v858
  %v1030 = vpack.c.bf16 %v882, %v882
  %v1031 = vpack.c.bf16 %v906, %v906
  %v1032 = vpack.c.bf16 %v930, %v930
  %v1033 = vpack.c.bf16 %v954, %v954
  %v1034 = vpack.c.bf16 %v978, %v978
  %v1035 = vpack.c.bf16 %v1002, %v1002
  %v1036 = vpack.c.bf16 %v1026, %v1026
  %1037 = vst [vmem:[#allocation1] ss:$9 sm:$0xff] %v9
  %v1038 = vld [vmem:[#allocation1] sm:$0xff]
  %1040 = vrot.lane.b32.xlu0 %v1038, 112
  %v1041 = vpop.permute.xlu0 %1040
  %1042 = vst [vmem:[#allocation1] ss:$9 sm:$0xff] %v9
  %v1043 = vld [vmem:[#allocation1] sm:$0xff]
  %1045 = vrot.lane.b32.xlu0 %v1043, 80
  %v1046 = vpop.permute.xlu0 %1045
  %v1048 = vsel %vm23, %v1041, 0
  %v1051 = vsel %vm23, %v1046, 0
  %1053 = vmatpush.bf16.xpose.msra.mxu0 0
  %1054 = vmatpush.bf16.xpose.msra.mxu0 0
  %1055 = vmatpush.bf16.xpose.msra.mxu0 0
  %1056 = vmatpush.bf16.xpose.msra.mxu0 0
  %1057 = vmatpush.bf16.xpose.msra.mxu0 0
  %1058 = vmatpush.bf16.xpose.msra.mxu0 0
  %1059 = vmatpush.bf16.xpose.msra.mxu0 0
  %1060 = vmatpush.bf16.xpose.msra.mxu0 %v1051
  %1061 = vmatmul.bf16.gmra.mxu0 %v1048
  %v1062 = vpop.f32.mrf.mxu0
  %v1063 = vadd.f32 0.0, %v1062
  %v1064 = vpop.f32.mrf.mxu0
  %1065 = vdwg.mxu0
  %1066 = vst [vmem:[#allocation1] ss:$9 sm:$0xff] %v10
  %v1067 = vld [vmem:[#allocation1] sm:$0xff]
  %1069 = vrot.lane.b32.xlu0 %v1067, 112
  %v1070 = vpop.permute.xlu0 %1069
  %1071 = vst [vmem:[#allocation1] ss:$9 sm:$0xff] %v10
  %v1072 = vld [vmem:[#allocation1] sm:$0xff]
  %1074 = vrot.lane.b32.xlu0 %v1072, 80
  %v1075 = vpop.permute.xlu0 %1074
  %v1077 = vsel %vm23, %v1070, 0
  %v1080 = vsel %vm23, %v1075, 0
  %1082 = vmatpush.bf16.xpose.msra.mxu0 0
  %1083 = vmatpush.bf16.xpose.msra.mxu0 0
  %1084 = vmatpush.bf16.xpose.msra.mxu0 0
  %1085 = vmatpush.bf16.xpose.msra.mxu0 0
  %1086 = vmatpush.bf16.xpose.msra.mxu0 0
  %1087 = vmatpush.bf16.xpose.msra.mxu0 0
  %1088 = vmatpush.bf16.xpose.msra.mxu0 0
  %1089 = vmatpush.bf16.xpose.msra.mxu0 %v1080
  %1090 = vmatmul.bf16.gmra.mxu0 %v1077
  %v1091 = vpop.f32.mrf.mxu0
  %v1092 = vadd.f32 0.0, %v1091
  %v1093 = vpop.f32.mrf.mxu0
  %1094 = vdwg.mxu0
  %1095 = vst [vmem:[#allocation1] ss:$9 sm:$0xff] %v11
  %v1096 = vld [vmem:[#allocation1] sm:$0xff]
  %1098 = vrot.lane.b32.xlu0 %v1096, 112
  %v1099 = vpop.permute.xlu0 %1098
  %1100 = vst [vmem:[#allocation1] ss:$9 sm:$0xff] %v11
  %v1101 = vld [vmem:[#allocation1] sm:$0xff]
  %1103 = vrot.lane.b32.xlu0 %v1101, 80
  %v1104 = vpop.permute.xlu0 %1103
  %v1106 = vsel %vm23, %v1099, 0
  %v1109 = vsel %vm23, %v1104, 0
  %1111 = vmatpush.bf16.xpose.msra.mxu0 0
  %1112 = vmatpush.bf16.xpose.msra.mxu0 0
  %1113 = vmatpush.bf16.xpose.msra.mxu0 0
  %1114 = vmatpush.bf16.xpose.msra.mxu0 0
  %1115 = vmatpush.bf16.xpose.msra.mxu0 0
  %1116 = vmatpush.bf16.xpose.msra.mxu0 0
  %1117 = vmatpush.bf16.xpose.msra.mxu0 0
  %1118 = vmatpush.bf16.xpose.msra.mxu0 %v1109
  %1119 = vmatmul.bf16.gmra.mxu0 %v1106
  %v1120 = vpop.f32.mrf.mxu0
  %v1121 = vadd.f32 0.0, %v1120
  %v1122 = vpop.f32.mrf.mxu0
  %1123 = vdwg.mxu0
  %1124 = vst [vmem:[#allocation1] ss:$9 sm:$0xff] %v12
  %v1125 = vld [vmem:[#allocation1] sm:$0xff]
  %1127 = vrot.lane.b32.xlu0 %v1125, 112
  %v1128 = vpop.permute.xlu0 %1127
  %1129 = vst [vmem:[#allocation1] ss:$9 sm:$0xff] %v12
  %v1130 = vld [vmem:[#allocation1] sm:$0xff]
  %1132 = vrot.lane.b32.xlu0 %v1130, 80
  %v1133 = vpop.permute.xlu0 %1132
  %v1135 = vsel %vm23, %v1128, 0
  %v1138 = vsel %vm23, %v1133, 0
  %1140 = vmatpush.bf16.xpose.msra.mxu0 0
  %1141 = vmatpush.bf16.xpose.msra.mxu0 0
  %1142 = vmatpush.bf16.xpose.msra.mxu0 0
  %1143 = vmatpush.bf16.xpose.msra.mxu0 0
  %1144 = vmatpush.bf16.xpose.msra.mxu0 0
  %1145 = vmatpush.bf16.xpose.msra.mxu0 0
  %1146 = vmatpush.bf16.xpose.msra.mxu0 0
  %1147 = vmatpush.bf16.xpose.msra.mxu0 %v1138
  %1148 = vmatmul.bf16.gmra.mxu0 %v1135
  %v1149 = vpop.f32.mrf.mxu0
  %v1150 = vadd.f32 0.0, %v1149
  %v1151 = vpop.f32.mrf.mxu0
  %1152 = vdwg.mxu0
  %1153 = vst [vmem:[#allocation1] ss:$9 sm:$0xff] %v13
  %v1154 = vld [vmem:[#allocation1] sm:$0xff]
  %1156 = vrot.lane.b32.xlu0 %v1154, 112
  %v1157 = vpop.permute.xlu0 %1156
  %1158 = vst [vmem:[#allocation1] ss:$9 sm:$0xff] %v13
  %v1159 = vld [vmem:[#allocation1] sm:$0xff]
  %1161 = vrot.lane.b32.xlu0 %v1159, 80
  %v1162 = vpop.permute.xlu0 %1161
  %v1164 = vsel %vm23, %v1157, 0
  %v1167 = vsel %vm23, %v1162, 0
  %1169 = vmatpush.bf16.xpose.msra.mxu0 0
  %1170 = vmatpush.bf16.xpose.msra.mxu0 0
  %1171 = vmatpush.bf16.xpose.msra.mxu0 0
  %1172 = vmatpush.bf16.xpose.msra.mxu0 0
  %1173 = vmatpush.bf16.xpose.msra.mxu0 0
  %1174 = vmatpush.bf16.xpose.msra.mxu0 0
  %1175 = vmatpush.bf16.xpose.msra.mxu0 0
  %1176 = vmatpush.bf16.xpose.msra.mxu0 %v1167
  %1177 = vmatmul.bf16.gmra.mxu0 %v1164
  %v1178 = vpop.f32.mrf.mxu0
  %v1179 = vadd.f32 0.0, %v1178
  %v1180 = vpop.f32.mrf.mxu0
  %1181 = vdwg.mxu0
  %1182 = vst [vmem:[#allocation1] ss:$9 sm:$0xff] %v14
  %v1183 = vld [vmem:[#allocation1] sm:$0xff]
  %1185 = vrot.lane.b32.xlu0 %v1183, 112
  %v1186 = vpop.permute.xlu0 %1185
  %1187 = vst [vmem:[#allocation1] ss:$9 sm:$0xff] %v14
  %v1188 = vld [vmem:[#allocation1] sm:$0xff]
  %1190 = vrot.lane.b32.xlu0 %v1188, 80
  %v1191 = vpop.permute.xlu0 %1190
  %v1193 = vsel %vm23, %v1186, 0
  %v1196 = vsel %vm23, %v1191, 0
  %1198 = vmatpush.bf16.xpose.msra.mxu0 0
  %1199 = vmatpush.bf16.xpose.msra.mxu0 0
  %1200 = vmatpush.bf16.xpose.msra.mxu0 0
  %1201 = vmatpush.bf16.xpose.msra.mxu0 0
  %1202 = vmatpush.bf16.xpose.msra.mxu0 0
  %1203 = vmatpush.bf16.xpose.msra.mxu0 0
  %1204 = vmatpush.bf16.xpose.msra.mxu0 0
  %1205 = vmatpush.bf16.xpose.msra.mxu0 %v1196
  %1206 = vmatmul.bf16.gmra.mxu0 %v1193
  %v1207 = vpop.f32.mrf.mxu0
  %v1208 = vadd.f32 0.0, %v1207
  %v1209 = vpop.f32.mrf.mxu0
  %1210 = vdwg.mxu0
  %1211 = vst [vmem:[#allocation1] ss:$9 sm:$0xff] %v15
  %v1212 = vld [vmem:[#allocation1] sm:$0xff]
  %1214 = vrot.lane.b32.xlu0 %v1212, 112
  %v1215 = vpop.permute.xlu0 %1214
  %1216 = vst [vmem:[#allocation1] ss:$9 sm:$0xff] %v15
  %v1217 = vld [vmem:[#allocation1] sm:$0xff]
  %1219 = vrot.lane.b32.xlu0 %v1217, 80
  %v1220 = vpop.permute.xlu0 %1219
  %v1222 = vsel %vm23, %v1215, 0
  %v1225 = vsel %vm23, %v1220, 0
  %1227 = vmatpush.bf16.xpose.msra.mxu0 0
  %1228 = vmatpush.bf16.xpose.msra.mxu0 0
  %1229 = vmatpush.bf16.xpose.msra.mxu0 0
  %1230 = vmatpush.bf16.xpose.msra.mxu0 0
  %1231 = vmatpush.bf16.xpose.msra.mxu0 0
  %1232 = vmatpush.bf16.xpose.msra.mxu0 0
  %1233 = vmatpush.bf16.xpose.msra.mxu0 0
  %1234 = vmatpush.bf16.xpose.msra.mxu0 %v1225
  %1235 = vmatmul.bf16.gmra.mxu0 %v1222
  %v1236 = vpop.f32.mrf.mxu0
  %v1237 = vadd.f32 0.0, %v1236
  %v1238 = vpop.f32.mrf.mxu0
  %1239 = vdwg.mxu0
  %1240 = vst [vmem:[#allocation1] ss:$9 sm:$0xff] %v16
  %v1241 = vld [vmem:[#allocation1] sm:$0xff]
  %1243 = vrot.lane.b32.xlu0 %v1241, 112
  %v1244 = vpop.permute.xlu0 %1243
  %1245 = vst [vmem:[#allocation1] ss:$9 sm:$0xff] %v16
  %v1246 = vld [vmem:[#allocation1] sm:$0xff]
  %1248 = vrot.lane.b32.xlu0 %v1246, 80
  %v1249 = vpop.permute.xlu0 %1248
  %v1251 = vsel %vm23, %v1244, 0
  %v1254 = vsel %vm23, %v1249, 0
  %1256 = vmatpush.bf16.xpose.msra.mxu0 0
  %1257 = vmatpush.bf16.xpose.msra.mxu0 0
  %1258 = vmatpush.bf16.xpose.msra.mxu0 0
  %1259 = vmatpush.bf16.xpose.msra.mxu0 0
  %1260 = vmatpush.bf16.xpose.msra.mxu0 0
  %1261 = vmatpush.bf16.xpose.msra.mxu0 0
  %1262 = vmatpush.bf16.xpose.msra.mxu0 0
  %1263 = vmatpush.bf16.xpose.msra.mxu0 %v1254
  %1264 = vmatmul.bf16.gmra.mxu0 %v1251
  %v1265 = vpop.f32.mrf.mxu0
  %v1266 = vadd.f32 0.0, %v1265
  %v1267 = vpop.f32.mrf.mxu0
  %1268 = vdwg.mxu0
  %v1269 = vsel %vm210, %v1063, -inf
  %1270 = vmax.xlane.f32.xlu0 %v1269
  %v1271 = vpop.xlane.xlu0 %1270
  %v1272 = vsel %vm210, %v1092, -inf
  %1273 = vmax.xlane.f32.xlu0 %v1272
  %v1274 = vpop.xlane.xlu0 %1273
  %v1275 = vsel %vm210, %v1121, -inf
  %1276 = vmax.xlane.f32.xlu0 %v1275
  %v1277 = vpop.xlane.xlu0 %1276
  %v1278 = vsel %vm210, %v1150, -inf
  %1279 = vmax.xlane.f32.xlu0 %v1278
  %v1280 = vpop.xlane.xlu0 %1279
  %v1281 = vsel %vm210, %v1179, -inf
  %1282 = vmax.xlane.f32.xlu0 %v1281
  %v1283 = vpop.xlane.xlu0 %1282
  %v1284 = vsel %vm210, %v1208, -inf
  %1285 = vmax.xlane.f32.xlu0 %v1284
  %v1286 = vpop.xlane.xlu0 %1285
  %v1287 = vsel %vm210, %v1237, -inf
  %1288 = vmax.xlane.f32.xlu0 %v1287
  %v1289 = vpop.xlane.xlu0 %1288
  %v1290 = vsel %vm210, %v1266, -inf
  %1291 = vmax.xlane.f32.xlu0 %v1290
  %v1292 = vpop.xlane.xlu0 %1291
  %v1293 = vsub.f32 %v1063, %v1271
  %v1294 = vsub.f32 %v1092, %v1274
  %v1295 = vsub.f32 %v1121, %v1277
  %v1296 = vsub.f32 %v1150, %v1280
  %v1297 = vsub.f32 %v1179, %v1283
  %v1298 = vsub.f32 %v1208, %v1286
  %v1299 = vsub.f32 %v1237, %v1289
  %v1300 = vsub.f32 %v1266, %v1292
  %v1301 = vmul.f32 %v1293, 1.442695
  %v1302 = vpow.pop %v1301
  %v1303 = vmul.f32 %v1294, 1.442695
  %v1304 = vpow.pop %v1303
  %v1305 = vmul.f32 %v1295, 1.442695
  %v1306 = vpow.pop %v1305
  %v1307 = vmul.f32 %v1296, 1.442695
  %v1308 = vpow.pop %v1307
  %v1309 = vmul.f32 %v1297, 1.442695
  %v1310 = vpow.pop %v1309
  %v1311 = vmul.f32 %v1298, 1.442695
  %v1312 = vpow.pop %v1311
  %v1313 = vmul.f32 %v1299, 1.442695
  %v1314 = vpow.pop %v1313
  %v1315 = vmul.f32 %v1300, 1.442695
  %v1316 = vpow.pop %v1315
  %v1317 = vsel %vm210, %v1302, 0.0
  %1318 = vadd.xlane.f32.xlu0 %v1317
  %v1319 = vpop.xlane.xlu0 %1318
  %v1320 = vsel %vm210, %v1304, 0.0
  %1321 = vadd.xlane.f32.xlu0 %v1320
  %v1322 = vpop.xlane.xlu0 %1321
  %v1323 = vsel %vm210, %v1306, 0.0
  %1324 = vadd.xlane.f32.xlu0 %v1323
  %v1325 = vpop.xlane.xlu0 %1324
  %v1326 = vsel %vm210, %v1308, 0.0
  %1327 = vadd.xlane.f32.xlu0 %v1326
  %v1328 = vpop.xlane.xlu0 %1327
  %v1329 = vsel %vm210, %v1310, 0.0
  %1330 = vadd.xlane.f32.xlu0 %v1329
  %v1331 = vpop.xlane.xlu0 %1330
  %v1332 = vsel %vm210, %v1312, 0.0
  %1333 = vadd.xlane.f32.xlu0 %v1332
  %v1334 = vpop.xlane.xlu0 %1333
  %v1335 = vsel %vm210, %v1314, 0.0
  %1336 = vadd.xlane.f32.xlu0 %v1335
  %v1337 = vpop.xlane.xlu0 %1336
  %v1338 = vsel %vm210, %v1316, 0.0
  %1339 = vadd.xlane.f32.xlu0 %v1338
  %v1340 = vpop.xlane.xlu0 %1339
  %v1341 = vrcp.pop %v1319
  %v1342 = vrcp.pop %v1322
  %v1343 = vrcp.pop %v1325
  %v1344 = vrcp.pop %v1328
  %v1345 = vrcp.pop %v1331
  %v1346 = vrcp.pop %v1334
  %v1347 = vrcp.pop %v1337
  %v1348 = vrcp.pop %v1340
  %v1349 = vmul.f32 %v1302, %v1341
  %v1350 = vmul.f32 %v1304, %v1342
  %v1351 = vmul.f32 %v1306, %v1343
  %v1352 = vmul.f32 %v1308, %v1344
  %v1353 = vmul.f32 %v1310, %v1345
  %v1354 = vmul.f32 %v1312, %v1346
  %v1355 = vmul.f32 %v1314, %v1347
  %v1356 = vmul.f32 %v1316, %v1348
  %v1357 = vpack.c.bf16 %v1349, %v1349
  %v1358 = vpack.c.bf16 %v1350, %v1350
  %v1359 = vpack.c.bf16 %v1351, %v1351
  %v1360 = vpack.c.bf16 %v1352, %v1352
  %v1361 = vpack.c.bf16 %v1353, %v1353
  %v1362 = vpack.c.bf16 %v1354, %v1354
  %v1363 = vpack.c.bf16 %v1355, %v1355
  %v1364 = vpack.c.bf16 %v1356, %v1356
  %1365 = vst [vmem:[#allocation1] ss:$9 sm:$0xff] %v9
  %v1366 = vld [vmem:[#allocation1] sm:$0xff]
  %1368 = vrot.lane.b32.xlu0 %v1366, 48
  %v1369 = vpop.permute.xlu0 %1368
  %v1371 = vsel %vm312, %v1357, 0
  %v1374 = vsel %vm316, %v1369, 0
  %1376 = vmatpush.bf16.msra.mxu0 0
  %1377 = vmatpush.bf16.msra.mxu0 0
  %1378 = vmatpush.bf16.msra.mxu0 0
  %1379 = vmatpush.bf16.msra.mxu0 0
  %1380 = vmatpush.bf16.msra.mxu0 0
  %1381 = vmatpush.bf16.msra.mxu0 0
  %1382 = vmatpush.bf16.msra.mxu0 0
  %1383 = vmatpush.bf16.msra.mxu0 %v1374
  %1384 = vmatmul.bf16.gmra.mxu0 %v1371
  %v1385 = vpop.f32.mrf.mxu0
  %v1386 = vadd.f32 0.0, %v1385
  %v1387 = vpop.f32.mrf.mxu0
  %1388 = vdwg.mxu0
  %1389 = vst [vmem:[#allocation1] ss:$9 sm:$0xff] %v10
  %v1390 = vld [vmem:[#allocation1] sm:$0xff]
  %1392 = vrot.lane.b32.xlu0 %v1390, 48
  %v1393 = vpop.permute.xlu0 %1392
  %v1395 = vsel %vm312, %v1358, 0
  %v1398 = vsel %vm316, %v1393, 0
  %1400 = vmatpush.bf16.msra.mxu0 0
  %1401 = vmatpush.bf16.msra.mxu0 0
  %1402 = vmatpush.bf16.msra.mxu0 0
  %1403 = vmatpush.bf16.msra.mxu0 0
  %1404 = vmatpush.bf16.msra.mxu0 0
  %1405 = vmatpush.bf16.msra.mxu0 0
  %1406 = vmatpush.bf16.msra.mxu0 0
  %1407 = vmatpush.bf16.msra.mxu0 %v1398
  %1408 = vmatmul.bf16.gmra.mxu0 %v1395
  %v1409 = vpop.f32.mrf.mxu0
  %v1410 = vadd.f32 0.0, %v1409
  %v1411 = vpop.f32.mrf.mxu0
  %1412 = vdwg.mxu0
  %1413 = vst [vmem:[#allocation1] ss:$9 sm:$0xff] %v11
  %v1414 = vld [vmem:[#allocation1] sm:$0xff]
  %1416 = vrot.lane.b32.xlu0 %v1414, 48
  %v1417 = vpop.permute.xlu0 %1416
  %v1419 = vsel %vm312, %v1359, 0
  %v1422 = vsel %vm316, %v1417, 0
  %1424 = vmatpush.bf16.msra.mxu0 0
  %1425 = vmatpush.bf16.msra.mxu0 0
  %1426 = vmatpush.bf16.msra.mxu0 0
  %1427 = vmatpush.bf16.msra.mxu0 0
  %1428 = vmatpush.bf16.msra.mxu0 0
  %1429 = vmatpush.bf16.msra.mxu0 0
  %1430 = vmatpush.bf16.msra.mxu0 0
  %1431 = vmatpush.bf16.msra.mxu0 %v1422
  %1432 = vmatmul.bf16.gmra.mxu0 %v1419
  %v1433 = vpop.f32.mrf.mxu0
  %v1434 = vadd.f32 0.0, %v1433
  %v1435 = vpop.f32.mrf.mxu0
  %1436 = vdwg.mxu0
  %1437 = vst [vmem:[#allocation1] ss:$9 sm:$0xff] %v12
  %v1438 = vld [vmem:[#allocation1] sm:$0xff]
  %1440 = vrot.lane.b32.xlu0 %v1438, 48
  %v1441 = vpop.permute.xlu0 %1440
  %v1443 = vsel %vm312, %v1360, 0
  %v1446 = vsel %vm316, %v1441, 0
  %1448 = vmatpush.bf16.msra.mxu0 0
  %1449 = vmatpush.bf16.msra.mxu0 0
  %1450 = vmatpush.bf16.msra.mxu0 0
  %1451 = vmatpush.bf16.msra.mxu0 0
  %1452 = vmatpush.bf16.msra.mxu0 0
  %1453 = vmatpush.bf16.msra.mxu0 0
  %1454 = vmatpush.bf16.msra.mxu0 0
  %1455 = vmatpush.bf16.msra.mxu0 %v1446
  %1456 = vmatmul.bf16.gmra.mxu0 %v1443
  %v1457 = vpop.f32.mrf.mxu0
  %v1458 = vadd.f32 0.0, %v1457
  %v1459 = vpop.f32.mrf.mxu0
  %1460 = vdwg.mxu0
  %1461 = vst [vmem:[#allocation1] ss:$9 sm:$0xff] %v13
  %v1462 = vld [vmem:[#allocation1] sm:$0xff]
  %1464 = vrot.lane.b32.xlu0 %v1462, 48
  %v1465 = vpop.permute.xlu0 %1464
  %v1467 = vsel %vm312, %v1361, 0
  %v1470 = vsel %vm316, %v1465, 0
  %1472 = vmatpush.bf16.msra.mxu0 0
  %1473 = vmatpush.bf16.msra.mxu0 0
  %1474 = vmatpush.bf16.msra.mxu0 0
  %1475 = vmatpush.bf16.msra.mxu0 0
  %1476 = vmatpush.bf16.msra.mxu0 0
  %1477 = vmatpush.bf16.msra.mxu0 0
  %1478 = vmatpush.bf16.msra.mxu0 0
  %1479 = vmatpush.bf16.msra.mxu0 %v1470
  %1480 = vmatmul.bf16.gmra.mxu0 %v1467
  %v1481 = vpop.f32.mrf.mxu0
  %v1482 = vadd.f32 0.0, %v1481
  %v1483 = vpop.f32.mrf.mxu0
  %1484 = vdwg.mxu0
  %1485 = vst [vmem:[#allocation1] ss:$9 sm:$0xff] %v14
  %v1486 = vld [vmem:[#allocation1] sm:$0xff]
  %1488 = vrot.lane.b32.xlu0 %v1486, 48
  %v1489 = vpop.permute.xlu0 %1488
  %v1491 = vsel %vm312, %v1362, 0
  %v1494 = vsel %vm316, %v1489, 0
  %1496 = vmatpush.bf16.msra.mxu0 0
  %1497 = vmatpush.bf16.msra.mxu0 0
  %1498 = vmatpush.bf16.msra.mxu0 0
  %1499 = vmatpush.bf16.msra.mxu0 0
  %1500 = vmatpush.bf16.msra.mxu0 0
  %1501 = vmatpush.bf16.msra.mxu0 0
  %1502 = vmatpush.bf16.msra.mxu0 0
  %1503 = vmatpush.bf16.msra.mxu0 %v1494
  %1504 = vmatmul.bf16.gmra.mxu0 %v1491
  %v1505 = vpop.f32.mrf.mxu0
  %v1506 = vadd.f32 0.0, %v1505
  %v1507 = vpop.f32.mrf.mxu0
  %1508 = vdwg.mxu0
  %1509 = vst [vmem:[#allocation1] ss:$9 sm:$0xff] %v15
  %v1510 = vld [vmem:[#allocation1] sm:$0xff]
  %1512 = vrot.lane.b32.xlu0 %v1510, 48
  %v1513 = vpop.permute.xlu0 %1512
  %v1515 = vsel %vm312, %v1363, 0
  %v1518 = vsel %vm316, %v1513, 0
  %1520 = vmatpush.bf16.msra.mxu0 0
  %1521 = vmatpush.bf16.msra.mxu0 0
  %1522 = vmatpush.bf16.msra.mxu0 0
  %1523 = vmatpush.bf16.msra.mxu0 0
  %1524 = vmatpush.bf16.msra.mxu0 0
  %1525 = vmatpush.bf16.msra.mxu0 0
  %1526 = vmatpush.bf16.msra.mxu0 0
  %1527 = vmatpush.bf16.msra.mxu0 %v1518
  %1528 = vmatmul.bf16.gmra.mxu0 %v1515
  %v1529 = vpop.f32.mrf.mxu0
  %v1530 = vadd.f32 0.0, %v1529
  %v1531 = vpop.f32.mrf.mxu0
  %1532 = vdwg.mxu0
  %1533 = vst [vmem:[#allocation1] ss:$9 sm:$0xff] %v16
  %v1534 = vld [vmem:[#allocation1] sm:$0xff]
  %1536 = vrot.lane.b32.xlu0 %v1534, 48
  %v1537 = vpop.permute.xlu0 %1536
  %v1539 = vsel %vm312, %v1364, 0
  %v1542 = vsel %vm316, %v1537, 0
  %1544 = vmatpush.bf16.msra.mxu0 0
  %1545 = vmatpush.bf16.msra.mxu0 0
  %1546 = vmatpush.bf16.msra.mxu0 0
  %1547 = vmatpush.bf16.msra.mxu0 0
  %1548 = vmatpush.bf16.msra.mxu0 0
  %1549 = vmatpush.bf16.msra.mxu0 0
  %1550 = vmatpush.bf16.msra.mxu0 0
  %1551 = vmatpush.bf16.msra.mxu0 %v1542
  %1552 = vmatmul.bf16.gmra.mxu0 %v1539
  %v1553 = vpop.f32.mrf.mxu0
  %v1554 = vadd.f32 0.0, %v1553
  %v1555 = vpop.f32.mrf.mxu0
  %1556 = vdwg.mxu0
  %v1557 = vpack.c.bf16 %v1386, %v1386
  %v1558 = vpack.c.bf16 %v1410, %v1410
  %v1559 = vpack.c.bf16 %v1434, %v1434
  %v1560 = vpack.c.bf16 %v1458, %v1458
  %v1561 = vpack.c.bf16 %v1482, %v1482
  %v1562 = vpack.c.bf16 %v1506, %v1506
  %v1563 = vpack.c.bf16 %v1530, %v1530
  %v1564 = vpack.c.bf16 %v1554, %v1554
  %1565 = vst [vmem:[#allocation1] ss:$9 sm:$0xff] %v9
  %v1566 = vld [vmem:[#allocation1] sm:$0xff]
  %1568 = vrot.lane.b32.xlu0 %v1566, 104
  %v1569 = vpop.permute.xlu0 %1568
  %1570 = vst [vmem:[#allocation1] ss:$9 sm:$0xff] %v9
  %v1571 = vld [vmem:[#allocation1] sm:$0xff]
  %1573 = vrot.lane.b32.xlu0 %v1571, 72
  %v1574 = vpop.permute.xlu0 %1573
  %v1576 = vsel %vm23, %v1569, 0
  %v1579 = vsel %vm23, %v1574, 0
  %1581 = vmatpush.bf16.xpose.msra.mxu0 0
  %1582 = vmatpush.bf16.xpose.msra.mxu0 0
  %1583 = vmatpush.bf16.xpose.msra.mxu0 0
  %1584 = vmatpush.bf16.xpose.msra.mxu0 0
  %1585 = vmatpush.bf16.xpose.msra.mxu0 0
  %1586 = vmatpush.bf16.xpose.msra.mxu0 0
  %1587 = vmatpush.bf16.xpose.msra.mxu0 0
  %1588 = vmatpush.bf16.xpose.msra.mxu0 %v1579
  %1589 = vmatmul.bf16.gmra.mxu0 %v1576
  %v1590 = vpop.f32.mrf.mxu0
  %v1591 = vadd.f32 0.0, %v1590
  %v1592 = vpop.f32.mrf.mxu0
  %1593 = vdwg.mxu0
  %1594 = vst [vmem:[#allocation1] ss:$9 sm:$0xff] %v10
  %v1595 = vld [vmem:[#allocation1] sm:$0xff]
  %1597 = vrot.lane.b32.xlu0 %v1595, 104
  %v1598 = vpop.permute.xlu0 %1597
  %1599 = vst [vmem:[#allocation1] ss:$9 sm:$0xff] %v10
  %v1600 = vld [vmem:[#allocation1] sm:$0xff]
  %1602 = vrot.lane.b32.xlu0 %v1600, 72
  %v1603 = vpop.permute.xlu0 %1602
  %v1605 = vsel %vm23, %v1598, 0
  %v1608 = vsel %vm23, %v1603, 0
  %1610 = vmatpush.bf16.xpose.msra.mxu0 0
  %1611 = vmatpush.bf16.xpose.msra.mxu0 0
  %1612 = vmatpush.bf16.xpose.msra.mxu0 0
  %1613 = vmatpush.bf16.xpose.msra.mxu0 0
  %1614 = vmatpush.bf16.xpose.msra.mxu0 0
  %1615 = vmatpush.bf16.xpose.msra.mxu0 0
  %1616 = vmatpush.bf16.xpose.msra.mxu0 0
  %1617 = vmatpush.bf16.xpose.msra.mxu0 %v1608
  %1618 = vmatmul.bf16.gmra.mxu0 %v1605
  %v1619 = vpop.f32.mrf.mxu0
  %v1620 = vadd.f32 0.0, %v1619
  %v1621 = vpop.f32.mrf.mxu0
  %1622 = vdwg.mxu0
  %1623 = vst [vmem:[#allocation1] ss:$9 sm:$0xff] %v11
  %v1624 = vld [vmem:[#allocation1] sm:$0xff]
  %1626 = vrot.lane.b32.xlu0 %v1624, 104
  %v1627 = vpop.permute.xlu0 %1626
  %1628 = vst [vmem:[#allocation1] ss:$9 sm:$0xff] %v11
  %v1629 = vld [vmem:[#allocation1] sm:$0xff]
  %1631 = vrot.lane.b32.xlu0 %v1629, 72
  %v1632 = vpop.permute.xlu0 %1631
  %v1634 = vsel %vm23, %v1627, 0
  %v1637 = vsel %vm23, %v1632, 0
  %1639 = vmatpush.bf16.xpose.msra.mxu0 0
  %1640 = vmatpush.bf16.xpose.msra.mxu0 0
  %1641 = vmatpush.bf16.xpose.msra.mxu0 0
  %1642 = vmatpush.bf16.xpose.msra.mxu0 0
  %1643 = vmatpush.bf16.xpose.msra.mxu0 0
  %1644 = vmatpush.bf16.xpose.msra.mxu0 0
  %1645 = vmatpush.bf16.xpose.msra.mxu0 0
  %1646 = vmatpush.bf16.xpose.msra.mxu0 %v1637
  %1647 = vmatmul.bf16.gmra.mxu0 %v1634
  %v1648 = vpop.f32.mrf.mxu0
  %v1649 = vadd.f32 0.0, %v1648
  %v1650 = vpop.f32.mrf.mxu0
  %1651 = vdwg.mxu0
  %1652 = vst [vmem:[#allocation1] ss:$9 sm:$0xff] %v12
  %v1653 = vld [vmem:[#allocation1] sm:$0xff]
  %1655 = vrot.lane.b32.xlu0 %v1653, 104
  %v1656 = vpop.permute.xlu0 %1655
  %1657 = vst [vmem:[#allocation1] ss:$9 sm:$0xff] %v12
  %v1658 = vld [vmem:[#allocation1] sm:$0xff]
  %1660 = vrot.lane.b32.xlu0 %v1658, 72
  %v1661 = vpop.permute.xlu0 %1660
  %v1663 = vsel %vm23, %v1656, 0
  %v1666 = vsel %vm23, %v1661, 0
  %1668 = vmatpush.bf16.xpose.msra.mxu0 0
  %1669 = vmatpush.bf16.xpose.msra.mxu0 0
  %1670 = vmatpush.bf16.xpose.msra.mxu0 0
  %1671 = vmatpush.bf16.xpose.msra.mxu0 0
  %1672 = vmatpush.bf16.xpose.msra.mxu0 0
  %1673 = vmatpush.bf16.xpose.msra.mxu0 0
  %1674 = vmatpush.bf16.xpose.msra.mxu0 0
  %1675 = vmatpush.bf16.xpose.msra.mxu0 %v1666
  %1676 = vmatmul.bf16.gmra.mxu0 %v1663
  %v1677 = vpop.f32.mrf.mxu0
  %v1678 = vadd.f32 0.0, %v1677
  %v1679 = vpop.f32.mrf.mxu0
  %1680 = vdwg.mxu0
  %1681 = vst [vmem:[#allocation1] ss:$9 sm:$0xff] %v13
  %v1682 = vld [vmem:[#allocation1] sm:$0xff]
  %1684 = vrot.lane.b32.xlu0 %v1682, 104
  %v1685 = vpop.permute.xlu0 %1684
  %1686 = vst [vmem:[#allocation1] ss:$9 sm:$0xff] %v13
  %v1687 = vld [vmem:[#allocation1] sm:$0xff]
  %1689 = vrot.lane.b32.xlu0 %v1687, 72
  %v1690 = vpop.permute.xlu0 %1689
  %v1692 = vsel %vm23, %v1685, 0
  %v1695 = vsel %vm23, %v1690, 0
  %1697 = vmatpush.bf16.xpose.msra.mxu0 0
  %1698 = vmatpush.bf16.xpose.msra.mxu0 0
  %1699 = vmatpush.bf16.xpose.msra.mxu0 0
  %1700 = vmatpush.bf16.xpose.msra.mxu0 0
  %1701 = vmatpush.bf16.xpose.msra.mxu0 0
  %1702 = vmatpush.bf16.xpose.msra.mxu0 0
  %1703 = vmatpush.bf16.xpose.msra.mxu0 0
  %1704 = vmatpush.bf16.xpose.msra.mxu0 %v1695
  %1705 = vmatmul.bf16.gmra.mxu0 %v1692
  %v1706 = vpop.f32.mrf.mxu0
  %v1707 = vadd.f32 0.0, %v1706
  %v1708 = vpop.f32.mrf.mxu0
  %1709 = vdwg.mxu0
  %1710 = vst [vmem:[#allocation1] ss:$9 sm:$0xff] %v14
  %v1711 = vld [vmem:[#allocation1] sm:$0xff]
  %1713 = vrot.lane.b32.xlu0 %v1711, 104
  %v1714 = vpop.permute.xlu0 %1713
  %1715 = vst [vmem:[#allocation1] ss:$9 sm:$0xff] %v14
  %v1716 = vld [vmem:[#allocation1] sm:$0xff]
  %1718 = vrot.lane.b32.xlu0 %v1716, 72
  %v1719 = vpop.permute.xlu0 %1718
  %v1721 = vsel %vm23, %v1714, 0
  %v1724 = vsel %vm23, %v1719, 0
  %1726 = vmatpush.bf16.xpose.msra.mxu0 0
  %1727 = vmatpush.bf16.xpose.msra.mxu0 0
  %1728 = vmatpush.bf16.xpose.msra.mxu0 0
  %1729 = vmatpush.bf16.xpose.msra.mxu0 0
  %1730 = vmatpush.bf16.xpose.msra.mxu0 0
  %1731 = vmatpush.bf16.xpose.msra.mxu0 0
  %1732 = vmatpush.bf16.xpose.msra.mxu0 0
  %1733 = vmatpush.bf16.xpose.msra.mxu0 %v1724
  %1734 = vmatmul.bf16.gmra.mxu0 %v1721
  %v1735 = vpop.f32.mrf.mxu0
  %v1736 = vadd.f32 0.0, %v1735
  %v1737 = vpop.f32.mrf.mxu0
  %1738 = vdwg.mxu0
  %1739 = vst [vmem:[#allocation1] ss:$9 sm:$0xff] %v15
  %v1740 = vld [vmem:[#allocation1] sm:$0xff]
  %1742 = vrot.lane.b32.xlu0 %v1740, 104
  %v1743 = vpop.permute.xlu0 %1742
  %1744 = vst [vmem:[#allocation1] ss:$9 sm:$0xff] %v15
  %v1745 = vld [vmem:[#allocation1] sm:$0xff]
  %1747 = vrot.lane.b32.xlu0 %v1745, 72
  %v1748 = vpop.permute.xlu0 %1747
  %v1750 = vsel %vm23, %v1743, 0
  %v1753 = vsel %vm23, %v1748, 0
  %1755 = vmatpush.bf16.xpose.msra.mxu0 0
  %1756 = vmatpush.bf16.xpose.msra.mxu0 0
  %1757 = vmatpush.bf16.xpose.msra.mxu0 0
  %1758 = vmatpush.bf16.xpose.msra.mxu0 0
  %1759 = vmatpush.bf16.xpose.msra.mxu0 0
  %1760 = vmatpush.bf16.xpose.msra.mxu0 0
  %1761 = vmatpush.bf16.xpose.msra.mxu0 0
  %1762 = vmatpush.bf16.xpose.msra.mxu0 %v1753
  %1763 = vmatmul.bf16.gmra.mxu0 %v1750
  %v1764 = vpop.f32.mrf.mxu0
  %v1765 = vadd.f32 0.0, %v1764
  %v1766 = vpop.f32.mrf.mxu0
  %1767 = vdwg.mxu0
  %1768 = vst [vmem:[#allocation1] ss:$9 sm:$0xff] %v16
  %v1769 = vld [vmem:[#allocation1] sm:$0xff]
  %1771 = vrot.lane.b32.xlu0 %v1769, 104
  %v1772 = vpop.permute.xlu0 %1771
  %1773 = vst [vmem:[#allocation1] ss:$9 sm:$0xff] %v16
  %v1774 = vld [vmem:[#allocation1] sm:$0xff]
  %1776 = vrot.lane.b32.xlu0 %v1774, 72
  %v1777 = vpop.permute.xlu0 %1776
  %v1779 = vsel %vm23, %v1772, 0
  %v1782 = vsel %vm23, %v1777, 0
  %1784 = vmatpush.bf16.xpose.msra.mxu0 0
  %1785 = vmatpush.bf16.xpose.msra.mxu0 0
  %1786 = vmatpush.bf16.xpose.msra.mxu0 0
  %1787 = vmatpush.bf16.xpose.msra.mxu0 0
  %1788 = vmatpush.bf16.xpose.msra.mxu0 0
  %1789 = vmatpush.bf16.xpose.msra.mxu0 0
  %1790 = vmatpush.bf16.xpose.msra.mxu0 0
  %1791 = vmatpush.bf16.xpose.msra.mxu0 %v1782
  %1792 = vmatmul.bf16.gmra.mxu0 %v1779
  %v1793 = vpop.f32.mrf.mxu0
  %v1794 = vadd.f32 0.0, %v1793
  %v1795 = vpop.f32.mrf.mxu0
  %1796 = vdwg.mxu0
  %v1797 = vsel %vm210, %v1591, -inf
  %1798 = vmax.xlane.f32.xlu0 %v1797
  %v1799 = vpop.xlane.xlu0 %1798
  %v1800 = vsel %vm210, %v1620, -inf
  %1801 = vmax.xlane.f32.xlu0 %v1800
  %v1802 = vpop.xlane.xlu0 %1801
  %v1803 = vsel %vm210, %v1649, -inf
  %1804 = vmax.xlane.f32.xlu0 %v1803
  %v1805 = vpop.xlane.xlu0 %1804
  %v1806 = vsel %vm210, %v1678, -inf
  %1807 = vmax.xlane.f32.xlu0 %v1806
  %v1808 = vpop.xlane.xlu0 %1807
  %v1809 = vsel %vm210, %v1707, -inf
  %1810 = vmax.xlane.f32.xlu0 %v1809
  %v1811 = vpop.xlane.xlu0 %1810
  %v1812 = vsel %vm210, %v1736, -inf
  %1813 = vmax.xlane.f32.xlu0 %v1812
  %v1814 = vpop.xlane.xlu0 %1813
  %v1815 = vsel %vm210, %v1765, -inf
  %1816 = vmax.xlane.f32.xlu0 %v1815
  %v1817 = vpop.xlane.xlu0 %1816
  %v1818 = vsel %vm210, %v1794, -inf
  %1819 = vmax.xlane.f32.xlu0 %v1818
  %v1820 = vpop.xlane.xlu0 %1819
  %v1821 = vsub.f32 %v1591, %v1799
  %v1822 = vsub.f32 %v1620, %v1802
  %v1823 = vsub.f32 %v1649, %v1805
  %v1824 = vsub.f32 %v1678, %v1808
  %v1825 = vsub.f32 %v1707, %v1811
  %v1826 = vsub.f32 %v1736, %v1814
  %v1827 = vsub.f32 %v1765, %v1817
  %v1828 = vsub.f32 %v1794, %v1820
  %v1829 = vmul.f32 %v1821, 1.442695
  %v1830 = vpow.pop %v1829
  %v1831 = vmul.f32 %v1822, 1.442695
  %v1832 = vpow.pop %v1831
  %v1833 = vmul.f32 %v1823, 1.442695
  %v1834 = vpow.pop %v1833
  %v1835 = vmul.f32 %v1824, 1.442695
  %v1836 = vpow.pop %v1835
  %v1837 = vmul.f32 %v1825, 1.442695
  %v1838 = vpow.pop %v1837
  %v1839 = vmul.f32 %v1826, 1.442695
  %v1840 = vpow.pop %v1839
  %v1841 = vmul.f32 %v1827, 1.442695
  %v1842 = vpow.pop %v1841
  %v1843 = vmul.f32 %v1828, 1.442695
  %v1844 = vpow.pop %v1843
  %v1845 = vsel %vm210, %v1830, 0.0
  %1846 = vadd.xlane.f32.xlu0 %v1845
  %v1847 = vpop.xlane.xlu0 %1846
  %v1848 = vsel %vm210, %v1832, 0.0
  %1849 = vadd.xlane.f32.xlu0 %v1848
  %v1850 = vpop.xlane.xlu0 %1849
  %v1851 = vsel %vm210, %v1834, 0.0
  %1852 = vadd.xlane.f32.xlu0 %v1851
  %v1853 = vpop.xlane.xlu0 %1852
  %v1854 = vsel %vm210, %v1836, 0.0
  %1855 = vadd.xlane.f32.xlu0 %v1854
  %v1856 = vpop.xlane.xlu0 %1855
  %v1857 = vsel %vm210, %v1838, 0.0
  %1858 = vadd.xlane.f32.xlu0 %v1857
  %v1859 = vpop.xlane.xlu0 %1858
  %v1860 = vsel %vm210, %v1840, 0.0
  %1861 = vadd.xlane.f32.xlu0 %v1860
  %v1862 = vpop.xlane.xlu0 %1861
  %v1863 = vsel %vm210, %v1842, 0.0
  %1864 = vadd.xlane.f32.xlu0 %v1863
  %v1865 = vpop.xlane.xlu0 %1864
  %v1866 = vsel %vm210, %v1844, 0.0
  %1867 = vadd.xlane.f32.xlu0 %v1866
  %v1868 = vpop.xlane.xlu0 %1867
  %v1869 = vrcp.pop %v1847
  %v1870 = vrcp.pop %v1850
  %v1871 = vrcp.pop %v1853
  %v1872 = vrcp.pop %v1856
  %v1873 = vrcp.pop %v1859
  %v1874 = vrcp.pop %v1862
  %v1875 = vrcp.pop %v1865
  %v1876 = vrcp.pop %v1868
  %v1877 = vmul.f32 %v1830, %v1869
  %v1878 = vmul.f32 %v1832, %v1870
  %v1879 = vmul.f32 %v1834, %v1871
  %v1880 = vmul.f32 %v1836, %v1872
  %v1881 = vmul.f32 %v1838, %v1873
  %v1882 = vmul.f32 %v1840, %v1874
  %v1883 = vmul.f32 %v1842, %v1875
  %v1884 = vmul.f32 %v1844, %v1876
  %v1885 = vpack.c.bf16 %v1877, %v1877
  %v1886 = vpack.c.bf16 %v1878, %v1878
  %v1887 = vpack.c.bf16 %v1879, %v1879
  %v1888 = vpack.c.bf16 %v1880, %v1880
  %v1889 = vpack.c.bf16 %v1881, %v1881
  %v1890 = vpack.c.bf16 %v1882, %v1882
  %v1891 = vpack.c.bf16 %v1883, %v1883
  %v1892 = vpack.c.bf16 %v1884, %v1884
  %1893 = vst [vmem:[#allocation1] ss:$9 sm:$0xff] %v9
  %v1894 = vld [vmem:[#allocation1] sm:$0xff]
  %1896 = vrot.lane.b32.xlu0 %v1894, 40
  %v1897 = vpop.permute.xlu0 %1896
  %v1899 = vsel %vm312, %v1885, 0
  %v1902 = vsel %vm316, %v1897, 0
  %1904 = vmatpush.bf16.msra.mxu0 0
  %1905 = vmatpush.bf16.msra.mxu0 0
  %1906 = vmatpush.bf16.msra.mxu0 0
  %1907 = vmatpush.bf16.msra.mxu0 0
  %1908 = vmatpush.bf16.msra.mxu0 0
  %1909 = vmatpush.bf16.msra.mxu0 0
  %1910 = vmatpush.bf16.msra.mxu0 0
  %1911 = vmatpush.bf16.msra.mxu0 %v1902
  %1912 = vmatmul.bf16.gmra.mxu0 %v1899
  %v1913 = vpop.f32.mrf.mxu0
  %v1914 = vadd.f32 0.0, %v1913
  %v1915 = vpop.f32.mrf.mxu0
  %1916 = vdwg.mxu0
  %1917 = vst [vmem:[#allocation1] ss:$9 sm:$0xff] %v10
  %v1918 = vld [vmem:[#allocation1] sm:$0xff]
  %1920 = vrot.lane.b32.xlu0 %v1918, 40
  %v1921 = vpop.permute.xlu0 %1920
  %v1923 = vsel %vm312, %v1886, 0
  %v1926 = vsel %vm316, %v1921, 0
  %1928 = vmatpush.bf16.msra.mxu0 0
  %1929 = vmatpush.bf16.msra.mxu0 0
  %1930 = vmatpush.bf16.msra.mxu0 0
  %1931 = vmatpush.bf16.msra.mxu0 0
  %1932 = vmatpush.bf16.msra.mxu0 0
  %1933 = vmatpush.bf16.msra.mxu0 0
  %1934 = vmatpush.bf16.msra.mxu0 0
  %1935 = vmatpush.bf16.msra.mxu0 %v1926
  %1936 = vmatmul.bf16.gmra.mxu0 %v1923
  %v1937 = vpop.f32.mrf.mxu0
  %v1938 = vadd.f32 0.0, %v1937
  %v1939 = vpop.f32.mrf.mxu0
  %1940 = vdwg.mxu0
  %1941 = vst [vmem:[#allocation1] ss:$9 sm:$0xff] %v11
  %v1942 = vld [vmem:[#allocation1] sm:$0xff]
  %1944 = vrot.lane.b32.xlu0 %v1942, 40
  %v1945 = vpop.permute.xlu0 %1944
  %v1947 = vsel %vm312, %v1887, 0
  %v1950 = vsel %vm316, %v1945, 0
  %1952 = vmatpush.bf16.msra.mxu0 0
  %1953 = vmatpush.bf16.msra.mxu0 0
  %1954 = vmatpush.bf16.msra.mxu0 0
  %1955 = vmatpush.bf16.msra.mxu0 0
  %1956 = vmatpush.bf16.msra.mxu0 0
  %1957 = vmatpush.bf16.msra.mxu0 0
  %1958 = vmatpush.bf16.msra.mxu0 0
  %1959 = vmatpush.bf16.msra.mxu0 %v1950
  %1960 = vmatmul.bf16.gmra.mxu0 %v1947
  %v1961 = vpop.f32.mrf.mxu0
  %v1962 = vadd.f32 0.0, %v1961
  %v1963 = vpop.f32.mrf.mxu0
  %1964 = vdwg.mxu0
  %1965 = vst [vmem:[#allocation1] ss:$9 sm:$0xff] %v12
  %v1966 = vld [vmem:[#allocation1] sm:$0xff]
  %1968 = vrot.lane.b32.xlu0 %v1966, 40
  %v1969 = vpop.permute.xlu0 %1968
  %v1971 = vsel %vm312, %v1888, 0
  %v1974 = vsel %vm316, %v1969, 0
  %1976 = vmatpush.bf16.msra.mxu0 0
  %1977 = vmatpush.bf16.msra.mxu0 0
  %1978 = vmatpush.bf16.msra.mxu0 0
  %1979 = vmatpush.bf16.msra.mxu0 0
  %1980 = vmatpush.bf16.msra.mxu0 0
  %1981 = vmatpush.bf16.msra.mxu0 0
  %1982 = vmatpush.bf16.msra.mxu0 0
  %1983 = vmatpush.bf16.msra.mxu0 %v1974
  %1984 = vmatmul.bf16.gmra.mxu0 %v1971
  %v1985 = vpop.f32.mrf.mxu0
  %v1986 = vadd.f32 0.0, %v1985
  %v1987 = vpop.f32.mrf.mxu0
  %1988 = vdwg.mxu0
  %1989 = vst [vmem:[#allocation1] ss:$9 sm:$0xff] %v13
  %v1990 = vld [vmem:[#allocation1] sm:$0xff]
  %1992 = vrot.lane.b32.xlu0 %v1990, 40
  %v1993 = vpop.permute.xlu0 %1992
  %v1995 = vsel %vm312, %v1889, 0
  %v1998 = vsel %vm316, %v1993, 0
  %2000 = vmatpush.bf16.msra.mxu0 0
  %2001 = vmatpush.bf16.msra.mxu0 0
  %2002 = vmatpush.bf16.msra.mxu0 0
  %2003 = vmatpush.bf16.msra.mxu0 0
  %2004 = vmatpush.bf16.msra.mxu0 0
  %2005 = vmatpush.bf16.msra.mxu0 0
  %2006 = vmatpush.bf16.msra.mxu0 0
  %2007 = vmatpush.bf16.msra.mxu0 %v1998
  %2008 = vmatmul.bf16.gmra.mxu0 %v1995
  %v2009 = vpop.f32.mrf.mxu0
  %v2010 = vadd.f32 0.0, %v2009
  %v2011 = vpop.f32.mrf.mxu0
  %2012 = vdwg.mxu0
  %2013 = vst [vmem:[#allocation1] ss:$9 sm:$0xff] %v14
  %v2014 = vld [vmem:[#allocation1] sm:$0xff]
  %2016 = vrot.lane.b32.xlu0 %v2014, 40
  %v2017 = vpop.permute.xlu0 %2016
  %v2019 = vsel %vm312, %v1890, 0
  %v2022 = vsel %vm316, %v2017, 0
  %2024 = vmatpush.bf16.msra.mxu0 0
  %2025 = vmatpush.bf16.msra.mxu0 0
  %2026 = vmatpush.bf16.msra.mxu0 0
  %2027 = vmatpush.bf16.msra.mxu0 0
  %2028 = vmatpush.bf16.msra.mxu0 0
  %2029 = vmatpush.bf16.msra.mxu0 0
  %2030 = vmatpush.bf16.msra.mxu0 0
  %2031 = vmatpush.bf16.msra.mxu0 %v2022
  %2032 = vmatmul.bf16.gmra.mxu0 %v2019
  %v2033 = vpop.f32.mrf.mxu0
  %v2034 = vadd.f32 0.0, %v2033
  %v2035 = vpop.f32.mrf.mxu0
  %2036 = vdwg.mxu0
  %2037 = vst [vmem:[#allocation1] ss:$9 sm:$0xff] %v15
  %v2038 = vld [vmem:[#allocation1] sm:$0xff]
  %2040 = vrot.lane.b32.xlu0 %v2038, 40
  %v2041 = vpop.permute.xlu0 %2040
  %v2043 = vsel %vm312, %v1891, 0
  %v2046 = vsel %vm316, %v2041, 0
  %2048 = vmatpush.bf16.msra.mxu0 0
  %2049 = vmatpush.bf16.msra.mxu0 0
  %2050 = vmatpush.bf16.msra.mxu0 0
  %2051 = vmatpush.bf16.msra.mxu0 0
  %2052 = vmatpush.bf16.msra.mxu0 0
  %2053 = vmatpush.bf16.msra.mxu0 0
  %2054 = vmatpush.bf16.msra.mxu0 0
  %2055 = vmatpush.bf16.msra.mxu0 %v2046
  %2056 = vmatmul.bf16.gmra.mxu0 %v2043
  %v2057 = vpop.f32.mrf.mxu0
  %v2058 = vadd.f32 0.0, %v2057
  %v2059 = vpop.f32.mrf.mxu0
  %2060 = vdwg.mxu0
  %2061 = vst [vmem:[#allocation1] ss:$9 sm:$0xff] %v16
  %v2062 = vld [vmem:[#allocation1] sm:$0xff]
  %2064 = vrot.lane.b32.xlu0 %v2062, 40
  %v2065 = vpop.permute.xlu0 %2064
  %v2067 = vsel %vm312, %v1892, 0
  %v2070 = vsel %vm316, %v2065, 0
  %2072 = vmatpush.bf16.msra.mxu0 0
  %2073 = vmatpush.bf16.msra.mxu0 0
  %2074 = vmatpush.bf16.msra.mxu0 0
  %2075 = vmatpush.bf16.msra.mxu0 0
  %2076 = vmatpush.bf16.msra.mxu0 0
  %2077 = vmatpush.bf16.msra.mxu0 0
  %2078 = vmatpush.bf16.msra.mxu0 0
  %2079 = vmatpush.bf16.msra.mxu0 %v2070
  %2080 = vmatmul.bf16.gmra.mxu0 %v2067
  %v2081 = vpop.f32.mrf.mxu0
  %v2082 = vadd.f32 0.0, %v2081
  %v2083 = vpop.f32.mrf.mxu0
  %2084 = vdwg.mxu0
  %v2085 = vpack.c.bf16 %v1914, %v1914
  %v2086 = vpack.c.bf16 %v1938, %v1938
  %v2087 = vpack.c.bf16 %v1962, %v1962
  %v2088 = vpack.c.bf16 %v1986, %v1986
  %v2089 = vpack.c.bf16 %v2010, %v2010
  %v2090 = vpack.c.bf16 %v2034, %v2034
  %v2091 = vpack.c.bf16 %v2058, %v2058
  %v2092 = vpack.c.bf16 %v2082, %v2082
  %v2101 = vunpack.c.l.b16 %v1029
  %v2102 = vunpack.c.l.b16 %v1030
  %v2103 = vunpack.c.l.b16 %v1031
  %v2104 = vunpack.c.l.b16 %v1032
  %v2105 = vunpack.c.l.b16 %v1033
  %v2106 = vunpack.c.l.b16 %v1034
  %v2107 = vunpack.c.l.b16 %v1035
  %v2108 = vunpack.c.l.b16 %v1036
  %v2109 = vpack.c.b16 %v2101, %v2101
  %v2110 = vpack.c.b16 %v2102, %v2102
  %v2111 = vpack.c.b16 %v2103, %v2103
  %v2112 = vpack.c.b16 %v2104, %v2104
  %v2113 = vpack.c.b16 %v2105, %v2105
  %v2114 = vpack.c.b16 %v2106, %v2106
  %v2115 = vpack.c.b16 %v2107, %v2107
  %v2116 = vpack.c.b16 %v2108, %v2108
  %2117 = vrot.lane.b32.xlu0 %v2109, 8
  %v2118 = vpop.permute.xlu0 %2117
  %2119 = vrot.lane.b32.xlu0 %v2110, 8
  %v2120 = vpop.permute.xlu0 %2119
  %2121 = vrot.lane.b32.xlu0 %v2111, 8
  %v2122 = vpop.permute.xlu0 %2121
  %2123 = vrot.lane.b32.xlu0 %v2112, 8
  %v2124 = vpop.permute.xlu0 %2123
  %2125 = vrot.lane.b32.xlu0 %v2113, 8
  %v2126 = vpop.permute.xlu0 %2125
  %2127 = vrot.lane.b32.xlu0 %v2114, 8
  %v2128 = vpop.permute.xlu0 %2127
  %2129 = vrot.lane.b32.xlu0 %v2115, 8
  %v2130 = vpop.permute.xlu0 %2129
  %2131 = vrot.lane.b32.xlu0 %v2116, 8
  %v2132 = vpop.permute.xlu0 %2131
  %v2141 = vunpack.c.l.b16 %v1557
  %v2142 = vunpack.c.l.b16 %v1558
  %v2143 = vunpack.c.l.b16 %v1559
  %v2144 = vunpack.c.l.b16 %v1560
  %v2145 = vunpack.c.l.b16 %v1561
  %v2146 = vunpack.c.l.b16 %v1562
  %v2147 = vunpack.c.l.b16 %v1563
  %v2148 = vunpack.c.l.b16 %v1564
  %v2149 = vpack.c.b16 %v2141, %v2141
  %v2150 = vpack.c.b16 %v2142, %v2142
  %v2151 = vpack.c.b16 %v2143, %v2143
  %v2152 = vpack.c.b16 %v2144, %v2144
  %v2153 = vpack.c.b16 %v2145, %v2145
  %v2154 = vpack.c.b16 %v2146, %v2146
  %v2155 = vpack.c.b16 %v2147, %v2147
  %v2156 = vpack.c.b16 %v2148, %v2148
  %2157 = vrot.lane.b32.xlu0 %v2149, 16
  %v2158 = vpop.permute.xlu0 %2157
  %2159 = vrot.lane.b32.xlu0 %v2150, 16
  %v2160 = vpop.permute.xlu0 %2159
  %2161 = vrot.lane.b32.xlu0 %v2151, 16
  %v2162 = vpop.permute.xlu0 %2161
  %2163 = vrot.lane.b32.xlu0 %v2152, 16
  %v2164 = vpop.permute.xlu0 %2163
  %2165 = vrot.lane.b32.xlu0 %v2153, 16
  %v2166 = vpop.permute.xlu0 %2165
  %2167 = vrot.lane.b32.xlu0 %v2154, 16
  %v2168 = vpop.permute.xlu0 %2167
  %2169 = vrot.lane.b32.xlu0 %v2155, 16
  %v2170 = vpop.permute.xlu0 %2169
  %2171 = vrot.lane.b32.xlu0 %v2156, 16
  %v2172 = vpop.permute.xlu0 %2171
  %v2181 = vunpack.c.l.b16 %v2085
  %v2182 = vunpack.c.l.b16 %v2086
  %v2183 = vunpack.c.l.b16 %v2087
  %v2184 = vunpack.c.l.b16 %v2088
  %v2185 = vunpack.c.l.b16 %v2089
  %v2186 = vunpack.c.l.b16 %v2090
  %v2187 = vunpack.c.l.b16 %v2091
  %v2188 = vunpack.c.l.b16 %v2092
  %v2189 = vpack.c.b16 %v2181, %v2181
  %v2190 = vpack.c.b16 %v2182, %v2182
  %v2191 = vpack.c.b16 %v2183, %v2183
  %v2192 = vpack.c.b16 %v2184, %v2184
  %v2193 = vpack.c.b16 %v2185, %v2185
  %v2194 = vpack.c.b16 %v2186, %v2186
  %v2195 = vpack.c.b16 %v2187, %v2187
  %v2196 = vpack.c.b16 %v2188, %v2188
  %2197 = vrot.lane.b32.xlu0 %v2189, 24
  %v2198 = vpop.permute.xlu0 %2197
  %2199 = vrot.lane.b32.xlu0 %v2190, 24
  %v2200 = vpop.permute.xlu0 %2199
  %2201 = vrot.lane.b32.xlu0 %v2191, 24
  %v2202 = vpop.permute.xlu0 %2201
  %2203 = vrot.lane.b32.xlu0 %v2192, 24
  %v2204 = vpop.permute.xlu0 %2203
  %2205 = vrot.lane.b32.xlu0 %v2193, 24
  %v2206 = vpop.permute.xlu0 %2205
  %2207 = vrot.lane.b32.xlu0 %v2194, 24
  %v2208 = vpop.permute.xlu0 %2207
  %2209 = vrot.lane.b32.xlu0 %v2195, 24
  %v2210 = vpop.permute.xlu0 %2209
  %2211 = vrot.lane.b32.xlu0 %v2196, 24
  %v2212 = vpop.permute.xlu0 %2211
  %v2215 = vsel %vm23, %v501, %v2118
  %v2218 = vsel %vm23, %v502, %v2120
  %v2221 = vsel %vm23, %v503, %v2122
  %v2224 = vsel %vm23, %v504, %v2124
  %v2227 = vsel %vm23, %v505, %v2126
  %v2230 = vsel %vm23, %v506, %v2128
  %v2233 = vsel %vm23, %v507, %v2130
  %v2236 = vsel %vm23, %v508, %v2132
  %vm2237 = vcmask 130048
  %v2239 = vsel %vm2237, %v2215, %v2158
  %v2241 = vsel %vm2237, %v2218, %v2160
  %v2243 = vsel %vm2237, %v2221, %v2162
  %v2245 = vsel %vm2237, %v2224, %v2164
  %v2247 = vsel %vm2237, %v2227, %v2166
  %v2249 = vsel %vm2237, %v2230, %v2168
  %v2251 = vsel %vm2237, %v2233, %v2170
  %v2253 = vsel %vm2237, %v2236, %v2172
  %vm2254 = vcmask 195584
  %v2256 = vsel %vm2254, %v2239, %v2198
  %v2259 = vsel %vm2254, %v2241, %v2200
  %v2262 = vsel %vm2254, %v2243, %v2202
  %v2265 = vsel %vm2254, %v2245, %v2204
  %v2268 = vsel %vm2254, %v2247, %v2206
  %v2271 = vsel %vm2254, %v2249, %v2208
  %v2274 = vsel %vm2254, %v2251, %v2210
  %v2277 = vsel %vm2254, %v2253, %v2212
  %vm2279 = vcmask 253952
  %2280 = vst.msk [vmem:[%s1] sm:$0x1] %vm2279, %v2256
  %2281 = vst.msk [vmem:[%s1 + $0x1] sm:$0x1] %vm2279, %v2259
  %2282 = vst.msk [vmem:[%s1 + $0x2] sm:$0x1] %vm2279, %v2262
  %2283 = vst.msk [vmem:[%s1 + $0x3] sm:$0x1] %vm2279, %v2265
  %2284 = vst.msk [vmem:[%s1 + $0x4] sm:$0x1] %vm2279, %v2268
  %2285 = vst.msk [vmem:[%s1 + $0x5] sm:$0x1] %vm2279, %v2271
  %2286 = vst.msk [vmem:[%s1 + $0x6] sm:$0x1] %vm2279, %v2274
  %2287 = vst.msk [vmem:[%s1 + $0x7] sm:$0x1] %vm2279, %v2277
  // Predicated region
  $region6: #{vit_forward.12} parent=0 // pred_check
    _
  $region7: #{vit_forward.12} parent=0 // pred_check_branch
    %2289 = sbr.rel (0) target = $region9
  $region8: #{vit_forward.12} parent=0 // pred_region
    _
  $region9: #{vit_forward.12} parent=0 // pred_fallthru
    _
  // Predicated region
  $region10: #{vit_forward.12} parent=0 // pred_check
    _
  $region11: #{vit_forward.12} parent=0 // pred_check_branch
    %2291 = sbr.rel (0) target = $region13
  $region12: #{vit_forward.12} parent=0 // pred_region
    _
  $region13: #{vit_forward.12} parent=0 // pred_fallthru
    _

</llo_original>
